<compile_context>
chip_gen: v6e
topology: v6e:2x2x1
jax: 0.10.0
libtpu: 0.0.40
codegen_flags: <defaults>
</compile_context>

<pallas_src>
import jax
import jax.numpy as jnp
from jax.experimental import pallas as pl
from jax.experimental.pallas import tpu as pltpu


# ---------------------------------------------------------------------------
# Fused kernel: MaxPool2d(2) -> Conv3x3+bias+ReLU -> Conv3x3+bias+ReLU
# ---------------------------------------------------------------------------
def _down_conv_kernel(x_ref, w1_ref, b1_ref, w2_ref, b2_ref,
                      o_ref, pad1_ref, pad2_ref):
    # x_ref : (N, H, W, Cin)      NHWC input
    # w1_ref: (9*Cin,  Cout)      conv1 weights, im2col-flattened HWIO
    # b1_ref: (1, Cout)
    # w2_ref: (9*Cout, Cout)      conv2 weights, im2col-flattened HWIO
    # b2_ref: (1, Cout)
    # o_ref : (N, Hp, Wp, Cout)   NHWC output (Hp = H//2, Wp = W//2)
    # pad1_ref / pad2_ref: VMEM scratch holding the zero-padded activations
    n, h, w, cin = x_ref.shape
    hp, wp = h // 2, w // 2
    cout = o_ref.shape[-1]
    rows = n * hp * wp

    # ---- MaxPool2d(kernel_size=2, stride=2), fully in VMEM -----------------
    x = x_ref[...]
    # split H (outer dim -> layout-free reshape) and max over the H-pairs
    x = x.reshape(n, hp, 2, w, cin)
    x = jnp.maximum(x[:, :, 0], x[:, :, 1])                    # (N, Hp, W, Cin)
    # split W (sublane dim) and max over the W-pairs
    x = x.reshape(n, hp, wp, 2, cin)
    pooled = jnp.maximum(x[:, :, :, 0, :], x[:, :, :, 1, :])   # (N, Hp, Wp, Cin)

    # ---- Conv3x3 (stride 1, pad 1) + bias + ReLU as ONE im2col matmul ------
    def conv3x3_relu(pad_ref, img, wflat_ref, b_ref, c_in):
        # zero-pad the activation into VMEM scratch (1-pixel halo of zeros)
        pad_ref[...] = jnp.zeros_like(pad_ref)
        pad_ref[:, 1:hp + 1, 1:wp + 1, :] = img
        # im2col: the 9 shifted taps concatenated along the channel (lane) axis
        taps = [pad_ref[:, dy:dy + hp, dx:dx + wp, :]
                for dy in range(3) for dx in range(3)]
        patches = jnp.concatenate(taps, axis=-1)               # (N, Hp, Wp, 9*c_in)
        patches = patches.reshape(rows, 9 * c_in)              # outer-dim merge
        y = jnp.dot(patches, wflat_ref[...],
                    preferred_element_type=jnp.float32)        # (rows, Cout) on MXU
        y = jnp.maximum(y + b_ref[...], 0.0)                   # bias + ReLU (VPU)
        return y.reshape(n, hp, wp, cout)

    h1 = conv3x3_relu(pad1_ref, pooled, w1_ref, b1_ref, cin)   # conv1 + ReLU
    h2 = conv3x3_relu(pad2_ref, h1, w2_ref, b2_ref, cout)      # conv2 + ReLU
    o_ref[...] = h2.astype(o_ref.dtype)


# ---------------------------------------------------------------------------
# DownConv forward (public wrapper, NCHW in / NCHW out)
# ---------------------------------------------------------------------------
def down_conv_forward(x_nchw, params):
    n, cin, h, w = x_nchw.shape
    assert h % 2 == 0 and w % 2 == 0, "MaxPool2d(2) expects even H and W"
    cout = params["w1"].shape[-1]
    hp, wp = h // 2, w // 2

    x_nhwc = jnp.transpose(x_nchw, (0, 2, 3, 1))        # NCHW -> NHWC (tiny glue)
    w1f = params["w1"].reshape(9 * cin, cout)           # HWIO -> (9*Cin, Cout)
    w2f = params["w2"].reshape(9 * cout, cout)          # HWIO -> (9*Cout, Cout)

    out_nhwc = pl.pallas_call(
        _down_conv_kernel,
        out_shape=jax.ShapeDtypeStruct((n, hp, wp, cout), x_nhwc.dtype),
        # the whole problem fits easily in VMEM; batch is folded into the matmul
        # M dimension inside the kernel, so a single grid step is optimal here.
        grid=(1,),
        in_specs=[
            pl.BlockSpec((n, h, w, cin), lambda i: (0, 0, 0, 0)),
            pl.BlockSpec((9 * cin, cout), lambda i: (0, 0)),
            pl.BlockSpec((1, cout), lambda i: (0, 0)),
            pl.BlockSpec((9 * cout, cout), lambda i: (0, 0)),
            pl.BlockSpec((1, cout), lambda i: (0, 0)),
        ],
        out_specs=pl.BlockSpec((n, hp, wp, cout), lambda i: (0, 0, 0, 0)),
        scratch_shapes=[
            pltpu.VMEM((n, hp + 2, wp + 2, cin), jnp.float32),   # padded pooled act
            pltpu.VMEM((n, hp + 2, wp + 2, cout), jnp.float32),  # padded conv1 act
        ],
        compiler_params=pltpu.CompilerParams(
            dimension_semantics=("arbitrary",)),
    )(x_nhwc, w1f, params["b1"], w2f, params["b2"])

    return jnp.transpose(out_nhwc, (0, 3, 1, 2))        # NHWC -> NCHW


# ---------------------------------------------------------------------------
# Pure-JAX reference (sanity check only)
# ---------------------------------------------------------------------------
def ref_forward(x_nchw, params):
    x = jnp.transpose(x_nchw, (0, 2, 3, 1))
    x = jax.lax.reduce_window(x, -jnp.inf, jax.lax.max,
                              (1, 2, 2, 1), (1, 2, 2, 1), "VALID")

    def conv(x, w, b):
        y = jax.lax.conv_general_dilated(
            x, w, window_strides=(1, 1), padding="SAME",
            dimension_numbers=("NHWC", "HWIO", "NHWC"),
            precision=jax.lax.Precision.HIGHEST)
        return jnp.maximum(y + b, 0.0)

    x = conv(x, params["w1"], params["b1"])
    x = conv(x, params["w2"], params["b2"])
    return jnp.transpose(x, (0, 3, 1, 2))


if __name__ == "__main__":
    # DownConv(in_channels=4, out_channels=8, kernel_size=3, padding=1, stride=1)
    N, Cin, H, W = 2, 4, 16, 16
    Cout = 8

    key = jax.random.PRNGKey(0)
    k0, k1, k2, k3, k4 = jax.random.split(key, 5)
    x = jax.random.normal(k0, (N, Cin, H, W), jnp.float32)
    params = {
        "w1": jax.random.normal(k1, (3, 3, Cin, Cout), jnp.float32) * 0.1,
        "b1": jax.random.normal(k2, (1, Cout), jnp.float32) * 0.1,
        "w2": jax.random.normal(k3, (3, 3, Cout, Cout), jnp.float32) * 0.1,
        "b2": jax.random.normal(k4, (1, Cout), jnp.float32) * 0.1,
    }

    out = jax.jit(down_conv_forward)(x, params)
    out = jax.block_until_ready(out)

    assert out.shape == (N, Cout, H // 2, W // 2), out.shape
    ref = ref_forward(x, params)
    max_err = float(jnp.max(jnp.abs(out - ref)))
    if max_err > 1e-4:
        raise AssertionError(f"mismatch vs reference: max abs err = {max_err}")

    print("KERNEL_OK")
</pallas_src>

<mosaic_0001>
module attributes {stable_mosaic.version = 11 : i64} {
  func.func @_down_conv_kernel(%arg0: i32, %arg1: memref<2x16x16x4xf32, #tpu.memory_space<vmem>>, %arg2: memref<36x8xf32, #tpu.memory_space<vmem>>, %arg3: memref<1x8xf32, #tpu.memory_space<vmem>>, %arg4: memref<72x8xf32, #tpu.memory_space<vmem>>, %arg5: memref<1x8xf32, #tpu.memory_space<vmem>>, %arg6: memref<2x8x8x8xf32, #tpu.memory_space<vmem>>, %arg7: memref<2x10x10x4xf32, #tpu.memory_space<vmem>>, %arg8: memref<2x10x10x8xf32, #tpu.memory_space<vmem>>) attributes {dimension_semantics = [#tpu.dimension_semantics<arbitrary>], iteration_bounds = array<i64: 1>, scalar_prefetch = 0 : i64, scratch_operands = 2 : i64, tpu.core_type = #tpu.core_type<tc>, window_params = [{pipeline_mode = #tpu.pipeline_mode<synchronous>, transform_indices = @transform_0, window_bounds = array<i64: 2, 16, 16, 4>}, {pipeline_mode = #tpu.pipeline_mode<synchronous>, transform_indices = @transform_1, window_bounds = array<i64: 36, 8>}, {pipeline_mode = #tpu.pipeline_mode<synchronous>, transform_indices = @transform_2, window_bounds = array<i64: 1, 8>}, {pipeline_mode = #tpu.pipeline_mode<synchronous>, transform_indices = @transform_3, window_bounds = array<i64: 72, 8>}, {pipeline_mode = #tpu.pipeline_mode<synchronous>, transform_indices = @transform_4, window_bounds = array<i64: 1, 8>}, {pipeline_mode = #tpu.pipeline_mode<synchronous>, transform_indices = @transform_5, window_bounds = array<i64: 2, 8, 8, 8>}]} {
    %c0 = arith.constant 0 : index
    %c0_0 = arith.constant 0 : index
    %c0_1 = arith.constant 0 : index
    %c0_2 = arith.constant 0 : index
    %0 = vector.load %arg1[%c0, %c0_0, %c0_1, %c0_2] : memref<2x16x16x4xf32, #tpu.memory_space<vmem>>, vector<2x16x16x4xf32>
    %1 = vector.shape_cast %0 : vector<2x16x16x4xf32> to vector<2x8x2x16x4xf32>
    %2 = vector.extract_strided_slice %1 {offsets = [0, 0, 0, 0, 0], sizes = [2, 8, 1, 16, 4], strides = [1, 1, 1, 1, 1]} : vector<2x8x2x16x4xf32> to vector<2x8x1x16x4xf32>
    %3 = vector.shape_cast %2 : vector<2x8x1x16x4xf32> to vector<2x8x16x4xf32>
    %4 = vector.extract_strided_slice %1 {offsets = [0, 0, 1, 0, 0], sizes = [2, 8, 1, 16, 4], strides = [1, 1, 1, 1, 1]} : vector<2x8x2x16x4xf32> to vector<2x8x1x16x4xf32>
    %5 = vector.shape_cast %4 : vector<2x8x1x16x4xf32> to vector<2x8x16x4xf32>
    %6 = arith.maximumf %3, %5 : vector<2x8x16x4xf32>
    %7 = vector.shape_cast %6 : vector<2x8x16x4xf32> to vector<2x8x8x2x4xf32>
    %8 = vector.extract_strided_slice %7 {offsets = [0, 0, 0, 0, 0], sizes = [2, 8, 8, 1, 4], strides = [1, 1, 1, 1, 1]} : vector<2x8x8x2x4xf32> to vector<2x8x8x1x4xf32>
    %9 = vector.shape_cast %8 : vector<2x8x8x1x4xf32> to vector<2x8x8x4xf32>
    %10 = vector.extract_strided_slice %7 {offsets = [0, 0, 0, 1, 0], sizes = [2, 8, 8, 1, 4], strides = [1, 1, 1, 1, 1]} : vector<2x8x8x2x4xf32> to vector<2x8x8x1x4xf32>
    %11 = vector.shape_cast %10 : vector<2x8x8x1x4xf32> to vector<2x8x8x4xf32>
    %12 = arith.maximumf %9, %11 : vector<2x8x8x4xf32>
    %cst = arith.constant 0.000000e+00 : f32
    %13 = vector.broadcast %cst : f32 to vector<2x10x10x4xf32>
    %c0_3 = arith.constant 0 : index
    %c0_4 = arith.constant 0 : index
    %c0_5 = arith.constant 0 : index
    %c0_6 = arith.constant 0 : index
    %14 = vector.load %arg7[%c0_3, %c0_4, %c0_5, %c0_6] : memref<2x10x10x4xf32, #tpu.memory_space<vmem>>, vector<2x10x10x4xf32>
    tpu.vector_store %arg7[%c0_3, %c0_4, %c0_5, %c0_6], %13 {strides = array<i32>} : memref<2x10x10x4xf32, #tpu.memory_space<vmem>>, vector<2x10x10x4xf32>,
    %c0_7 = arith.constant 0 : index
    %c1 = arith.constant 1 : index
    %c1_8 = arith.constant 1 : index
    %c0_9 = arith.constant 0 : index
    %15 = vector.load %arg7[%c0_7, %c1, %c1_8, %c0_9] : memref<2x10x10x4xf32, #tpu.memory_space<vmem>>, vector<2x8x8x4xf32>
    tpu.vector_store %arg7[%c0_7, %c1, %c1_8, %c0_9], %12 {strides = array<i32>} : memref<2x10x10x4xf32, #tpu.memory_space<vmem>>, vector<2x8x8x4xf32>,
    %c0_10 = arith.constant 0 : index
    %c0_11 = arith.constant 0 : index
    %c0_12 = arith.constant 0 : index
    %c0_13 = arith.constant 0 : index
    %16 = vector.load %arg7[%c0_10, %c0_11, %c0_12, %c0_13] : memref<2x10x10x4xf32, #tpu.memory_space<vmem>>, vector<2x8x8x4xf32>
    %c0_14 = arith.constant 0 : index
    %c0_15 = arith.constant 0 : index
    %c1_16 = arith.constant 1 : index
    %c0_17 = arith.constant 0 : index
    %17 = vector.load %arg7[%c0_14, %c0_15, %c1_16, %c0_17] : memref<2x10x10x4xf32, #tpu.memory_space<vmem>>, vector<2x8x8x4xf32>
    %c0_18 = arith.constant 0 : index
    %c0_19 = arith.constant 0 : index
    %c2 = arith.constant 2 : index
    %c0_20 = arith.constant 0 : index
    %18 = vector.load %arg7[%c0_18, %c0_19, %c2, %c0_20] : memref<2x10x10x4xf32, #tpu.memory_space<vmem>>, vector<2x8x8x4xf32>
    %c0_21 = arith.constant 0 : index
    %c1_22 = arith.constant 1 : index
    %c0_23 = arith.constant 0 : index
    %c0_24 = arith.constant 0 : index
    %19 = vector.load %arg7[%c0_21, %c1_22, %c0_23, %c0_24] : memref<2x10x10x4xf32, #tpu.memory_space<vmem>>, vector<2x8x8x4xf32>
    %c0_25 = arith.constant 0 : index
    %c1_26 = arith.constant 1 : index
    %c1_27 = arith.constant 1 : index
    %c0_28 = arith.constant 0 : index
    %20 = vector.load %arg7[%c0_25, %c1_26, %c1_27, %c0_28] : memref<2x10x10x4xf32, #tpu.memory_space<vmem>>, vector<2x8x8x4xf32>
    %c0_29 = arith.constant 0 : index
    %c1_30 = arith.constant 1 : index
    %c2_31 = arith.constant 2 : index
    %c0_32 = arith.constant 0 : index
    %21 = vector.load %arg7[%c0_29, %c1_30, %c2_31, %c0_32] : memref<2x10x10x4xf32, #tpu.memory_space<vmem>>, vector<2x8x8x4xf32>
    %c0_33 = arith.constant 0 : index
    %c2_34 = arith.constant 2 : index
    %c0_35 = arith.constant 0 : index
    %c0_36 = arith.constant 0 : index
    %22 = vector.load %arg7[%c0_33, %c2_34, %c0_35, %c0_36] : memref<2x10x10x4xf32, #tpu.memory_space<vmem>>, vector<2x8x8x4xf32>
    %c0_37 = arith.constant 0 : index
    %c2_38 = arith.constant 2 : index
    %c1_39 = arith.constant 1 : index
    %c0_40 = arith.constant 0 : index
    %23 = vector.load %arg7[%c0_37, %c2_38, %c1_39, %c0_40] : memref<2x10x10x4xf32, #tpu.memory_space<vmem>>, vector<2x8x8x4xf32>
    %c0_41 = arith.constant 0 : index
    %c2_42 = arith.constant 2 : index
    %c2_43 = arith.constant 2 : index
    %c0_44 = arith.constant 0 : index
    %24 = vector.load %arg7[%c0_41, %c2_42, %c2_43, %c0_44] : memref<2x10x10x4xf32, #tpu.memory_space<vmem>>, vector<2x8x8x4xf32>
    %25 = tpu.concatenate %16, %17, %18, %19, %20, %21, %22, %23, %24 in 3 : vector<2x8x8x4xf32>, vector<2x8x8x4xf32>, vector<2x8x8x4xf32>, vector<2x8x8x4xf32>, vector<2x8x8x4xf32>, vector<2x8x8x4xf32>, vector<2x8x8x4xf32>, vector<2x8x8x4xf32>, vector<2x8x8x4xf32> -> vector<2x8x8x36xf32>
    %26 = vector.shape_cast %25 : vector<2x8x8x36xf32> to vector<128x36xf32>
    %c0_45 = arith.constant 0 : index
    %c0_46 = arith.constant 0 : index
    %27 = vector.load %arg2[%c0_45, %c0_46] : memref<36x8xf32, #tpu.memory_space<vmem>>, vector<36x8xf32>
    %cst_47 = arith.constant dense<0.000000e+00> : vector<128x8xf32>
    %28 = tpu.matmul %26, %27, %cst_47 {dimension_numbers = #tpu.dot_dimension_numbers<[1], [0], [0], [1], [0, 0, 1, 1], [], []>} : vector<128x36xf32>, vector<36x8xf32>, vector<128x8xf32> -> vector<128x8xf32>
    %c0_48 = arith.constant 0 : index
    %c0_49 = arith.constant 0 : index
    %29 = vector.load %arg3[%c0_48, %c0_49] : memref<1x8xf32, #tpu.memory_space<vmem>>, vector<1x8xf32>
    %30 = vector.broadcast %29 : vector<1x8xf32> to vector<128x8xf32>
    %31 = arith.addf %28, %30 : vector<128x8xf32>
    %cst_50 = arith.constant 0.000000e+00 : f32
    %32 = vector.broadcast %cst_50 : f32 to vector<128x8xf32>
    %33 = arith.maximumf %31, %32 : vector<128x8xf32>
    %34 = vector.shape_cast %33 : vector<128x8xf32> to vector<2x8x8x8xf32>
    %cst_51 = arith.constant 0.000000e+00 : f32
    %35 = vector.broadcast %cst_51 : f32 to vector<2x10x10x8xf32>
    %c0_52 = arith.constant 0 : index
    %c0_53 = arith.constant 0 : index
    %c0_54 = arith.constant 0 : index
    %c0_55 = arith.constant 0 : index
    %36 = vector.load %arg8[%c0_52, %c0_53, %c0_54, %c0_55] : memref<2x10x10x8xf32, #tpu.memory_space<vmem>>, vector<2x10x10x8xf32>
    tpu.vector_store %arg8[%c0_52, %c0_53, %c0_54, %c0_55], %35 {strides = array<i32>} : memref<2x10x10x8xf32, #tpu.memory_space<vmem>>, vector<2x10x10x8xf32>,
    %c0_56 = arith.constant 0 : index
    %c1_57 = arith.constant 1 : index
    %c1_58 = arith.constant 1 : index
    %c0_59 = arith.constant 0 : index
    %37 = vector.load %arg8[%c0_56, %c1_57, %c1_58, %c0_59] : memref<2x10x10x8xf32, #tpu.memory_space<vmem>>, vector<2x8x8x8xf32>
    tpu.vector_store %arg8[%c0_56, %c1_57, %c1_58, %c0_59], %34 {strides = array<i32>} : memref<2x10x10x8xf32, #tpu.memory_space<vmem>>, vector<2x8x8x8xf32>,
    %c0_60 = arith.constant 0 : index
    %c0_61 = arith.constant 0 : index
    %c0_62 = arith.constant 0 : index
    %c0_63 = arith.constant 0 : index
    %38 = vector.load %arg8[%c0_60, %c0_61, %c0_62, %c0_63] : memref<2x10x10x8xf32, #tpu.memory_space<vmem>>, vector<2x8x8x8xf32>
    %c0_64 = arith.constant 0 : index
    %c0_65 = arith.constant 0 : index
    %c1_66 = arith.constant 1 : index
    %c0_67 = arith.constant 0 : index
    %39 = vector.load %arg8[%c0_64, %c0_65, %c1_66, %c0_67] : memref<2x10x10x8xf32, #tpu.memory_space<vmem>>, vector<2x8x8x8xf32>
    %c0_68 = arith.constant 0 : index
    %c0_69 = arith.constant 0 : index
    %c2_70 = arith.constant 2 : index
    %c0_71 = arith.constant 0 : index
    %40 = vector.load %arg8[%c0_68, %c0_69, %c2_70, %c0_71] : memref<2x10x10x8xf32, #tpu.memory_space<vmem>>, vector<2x8x8x8xf32>
    %c0_72 = arith.constant 0 : index
    %c1_73 = arith.constant 1 : index
    %c0_74 = arith.constant 0 : index
    %c0_75 = arith.constant 0 : index
    %41 = vector.load %arg8[%c0_72, %c1_73, %c0_74, %c0_75] : memref<2x10x10x8xf32, #tpu.memory_space<vmem>>, vector<2x8x8x8xf32>
    %c0_76 = arith.constant 0 : index
    %c1_77 = arith.constant 1 : index
    %c1_78 = arith.constant 1 : index
    %c0_79 = arith.constant 0 : index
    %42 = vector.load %arg8[%c0_76, %c1_77, %c1_78, %c0_79] : memref<2x10x10x8xf32, #tpu.memory_space<vmem>>, vector<2x8x8x8xf32>
    %c0_80 = arith.constant 0 : index
    %c1_81 = arith.constant 1 : index
    %c2_82 = arith.constant 2 : index
    %c0_83 = arith.constant 0 : index
    %43 = vector.load %arg8[%c0_80, %c1_81, %c2_82, %c0_83] : memref<2x10x10x8xf32, #tpu.memory_space<vmem>>, vector<2x8x8x8xf32>
    %c0_84 = arith.constant 0 : index
    %c2_85 = arith.constant 2 : index
    %c0_86 = arith.constant 0 : index
    %c0_87 = arith.constant 0 : index
    %44 = vector.load %arg8[%c0_84, %c2_85, %c0_86, %c0_87] : memref<2x10x10x8xf32, #tpu.memory_space<vmem>>, vector<2x8x8x8xf32>
    %c0_88 = arith.constant 0 : index
    %c2_89 = arith.constant 2 : index
    %c1_90 = arith.constant 1 : index
    %c0_91 = arith.constant 0 : index
    %45 = vector.load %arg8[%c0_88, %c2_89, %c1_90, %c0_91] : memref<2x10x10x8xf32, #tpu.memory_space<vmem>>, vector<2x8x8x8xf32>
    %c0_92 = arith.constant 0 : index
    %c2_93 = arith.constant 2 : index
    %c2_94 = arith.constant 2 : index
    %c0_95 = arith.constant 0 : index
    %46 = vector.load %arg8[%c0_92, %c2_93, %c2_94, %c0_95] : memref<2x10x10x8xf32, #tpu.memory_space<vmem>>, vector<2x8x8x8xf32>
    %47 = tpu.concatenate %38, %39, %40, %41, %42, %43, %44, %45, %46 in 3 : vector<2x8x8x8xf32>, vector<2x8x8x8xf32>, vector<2x8x8x8xf32>, vector<2x8x8x8xf32>, vector<2x8x8x8xf32>, vector<2x8x8x8xf32>, vector<2x8x8x8xf32>, vector<2x8x8x8xf32>, vector<2x8x8x8xf32> -> vector<2x8x8x72xf32>
    %48 = vector.shape_cast %47 : vector<2x8x8x72xf32> to vector<128x72xf32>
    %c0_96 = arith.constant 0 : index
    %c0_97 = arith.constant 0 : index
    %49 = vector.load %arg4[%c0_96, %c0_97] : memref<72x8xf32, #tpu.memory_space<vmem>>, vector<72x8xf32>
    %cst_98 = arith.constant dense<0.000000e+00> : vector<128x8xf32>
    %50 = tpu.matmul %48, %49, %cst_98 {dimension_numbers = #tpu.dot_dimension_numbers<[1], [0], [0], [1], [0, 0, 1, 1], [], []>} : vector<128x72xf32>, vector<72x8xf32>, vector<128x8xf32> -> vector<128x8xf32>
    %c0_99 = arith.constant 0 : index
    %c0_100 = arith.constant 0 : index
    %51 = vector.load %arg5[%c0_99, %c0_100] : memref<1x8xf32, #tpu.memory_space<vmem>>, vector<1x8xf32>
    %52 = vector.broadcast %51 : vector<1x8xf32> to vector<128x8xf32>
    %53 = arith.addf %50, %52 : vector<128x8xf32>
    %cst_101 = arith.constant 0.000000e+00 : f32
    %54 = vector.broadcast %cst_101 : f32 to vector<128x8xf32>
    %55 = arith.maximumf %53, %54 : vector<128x8xf32>
    %56 = vector.shape_cast %55 : vector<128x8xf32> to vector<2x8x8x8xf32>
    %c0_102 = arith.constant 0 : index
    %c0_103 = arith.constant 0 : index
    %c0_104 = arith.constant 0 : index
    %c0_105 = arith.constant 0 : index
    %57 = vector.load %arg6[%c0_102, %c0_103, %c0_104, %c0_105] : memref<2x8x8x8xf32, #tpu.memory_space<vmem>>, vector<2x8x8x8xf32>
    tpu.vector_store %arg6[%c0_102, %c0_103, %c0_104, %c0_105], %56 {strides = array<i32>} : memref<2x8x8x8xf32, #tpu.memory_space<vmem>>, vector<2x8x8x8xf32>,
    return
  }
  func.func @transform_0(%arg0: i32) -> (i32, i32, i32, i32) {
    %c0_i32 = arith.constant 0 : i32
    %c0_i32_0 = arith.constant 0 : i32
    %c0_i32_1 = arith.constant 0 : i32
    %c0_i32_2 = arith.constant 0 : i32
    %c0_i32_3 = arith.constant 0 : i32
    return %c0_i32, %c0_i32_0, %c0_i32_1, %c0_i32_2 : i32, i32, i32, i32
  }
  func.func @transform_1(%arg0: i32) -> (i32, i32) {
    %c0_i32 = arith.constant 0 : i32
    %c0_i32_0 = arith.constant 0 : i32
    %c0_i32_1 = arith.constant 0 : i32
    return %c0_i32, %c0_i32_0 : i32, i32
  }
  func.func @transform_2(%arg0: i32) -> (i32, i32) {
    %c0_i32 = arith.constant 0 : i32
    %c0_i32_0 = arith.constant 0 : i32
    %c0_i32_1 = arith.constant 0 : i32
    return %c0_i32, %c0_i32_0 : i32, i32
  }
  func.func @transform_3(%arg0: i32) -> (i32, i32) {
    %c0_i32 = arith.constant 0 : i32
    %c0_i32_0 = arith.constant 0 : i32
    %c0_i32_1 = arith.constant 0 : i32
    return %c0_i32, %c0_i32_0 : i32, i32
  }
  func.func @transform_4(%arg0: i32) -> (i32, i32) {
    %c0_i32 = arith.constant 0 : i32
    %c0_i32_0 = arith.constant 0 : i32
    %c0_i32_1 = arith.constant 0 : i32
    return %c0_i32, %c0_i32_0 : i32, i32
  }
  func.func @transform_5(%arg0: i32) -> (i32, i32, i32, i32) {
    %c0_i32 = arith.constant 0 : i32
    %c0_i32_0 = arith.constant 0 : i32
    %c0_i32_1 = arith.constant 0 : i32
    %c0_i32_2 = arith.constant 0 : i32
    %c0_i32_3 = arith.constant 0 : i32
    return %c0_i32, %c0_i32_0, %c0_i32_1, %c0_i32_2 : i32, i32, i32, i32
  }
}

</mosaic_0001>

<llo_original>
// kernel: down_conv_forward.1
$region0: #{down_conv_forward.1}
  #allocation0 [shape = 'u32[]', space=smem, size = 0x4, offset = 0x4, fixed_abs, tag = 'smem constant byte address 0x4 - core index']
  #allocation1 [shape = 'u32[144,128]{1,0:T(1,128)}', space=vmem, size = 0x12000, scoped, tag = 'internal scratch']
  #allocation2 [shape = 'f32[2,10,10,4]{3,2,1,0:T(8,128)}', space=vmem, size = 0x28000, scoped, tag = 'scratch operand']
  #allocation3 [shape = 'f32[2,10,10,8]{3,2,1,0:T(8,128)}', space=vmem, size = 0x28000, scoped, tag = 'scratch operand']
  %s0 = inlined_call_operand.vmem [shape: f32[2,16,16,4], index: 0, kind: input, shape index: {}]
  %s1 = inlined_call_operand.vmem [shape: f32[36,8], index: 1, kind: input, shape index: {}]
  %s2 = inlined_call_operand.vmem [shape: f32[1,8], index: 2, kind: input, shape index: {}]
  %s3 = inlined_call_operand.vmem [shape: f32[72,8], index: 3, kind: input, shape index: {}]
  %s4 = inlined_call_operand.vmem [shape: f32[1,8], index: 4, kind: input, shape index: {}]
  %s5 = inlined_call_operand.vmem [shape: f32[2,8,8,8], index: 5, kind: output, shape index: {}]
  %s6 = sld [smem:[#allocation0]]
  $region30: #{down_conv_forward.1} parent=0
    _
  %s8 = ssub.s32 1, %s6
  %s9 = scalar_select 0, %s8, %s6
  // Predicated region
  $region2: #{down_conv_forward.1} parent=0 // pred_check
    _
  $region3: #{down_conv_forward.1} parent=0 // pred_check_branch
    %11 = sbr.rel (0) target = $region5
  $region4: #{down_conv_forward.1} parent=0 // pred_region
    _
  $region5: #{down_conv_forward.1} parent=0 // pred_fallthru
    _
  // Predicated region
  $region6: #{down_conv_forward.1} parent=0 // pred_check
    _
  $region7: #{down_conv_forward.1} parent=0 // pred_check_branch
    %13 = sbr.rel (0) target = $region9
  $region8: #{down_conv_forward.1} parent=0 // pred_region
    _
  $region9: #{down_conv_forward.1} parent=0 // pred_fallthru
    _
  // Predicated region
  $region10: #{down_conv_forward.1} parent=0 // pred_check
    _
  $region11: #{down_conv_forward.1} parent=0 // pred_check_branch
    %15 = sbr.rel (0) target = $region13
  $region12: #{down_conv_forward.1} parent=0 // pred_region
    _
  $region13: #{down_conv_forward.1} parent=0 // pred_fallthru
    _
  // Predicated region
  $region14: #{down_conv_forward.1} parent=0 // pred_check
    _
  $region15: #{down_conv_forward.1} parent=0 // pred_check_branch
    %17 = sbr.rel (0) target = $region17
  $region16: #{down_conv_forward.1} parent=0 // pred_region
    _
  $region17: #{down_conv_forward.1} parent=0 // pred_fallthru
    _
  // Predicated region
  $region18: #{down_conv_forward.1} parent=0 // pred_check
    _
  $region19: #{down_conv_forward.1} parent=0 // pred_check_branch
    %19 = sbr.rel (0) target = $region21
  $region20: #{down_conv_forward.1} parent=0 // pred_region
    _
  $region21: #{down_conv_forward.1} parent=0 // pred_fallthru
    _
  %v20 = vld [vmem:[%s0] sm:$0xff]
  %v21 = vld [vmem:[%s0 + $0x8] sm:$0xff]
  %v22 = vld [vmem:[%s0 + $0x10] sm:$0xff]
  %v23 = vld [vmem:[%s0 + $0x18] sm:$0xff]
  %v24 = vld [vmem:[%s0 + $0x20] sm:$0xff]
  %v25 = vld [vmem:[%s0 + $0x28] sm:$0xff]
  %v26 = vld [vmem:[%s0 + $0x30] sm:$0xff]
  %v27 = vld [vmem:[%s0 + $0x38] sm:$0xff]
  %v28 = vld [vmem:[%s0 + $0x40] sm:$0xff]
  %v29 = vld [vmem:[%s0 + $0x48] sm:$0xff]
  %v30 = vld [vmem:[%s0 + $0x50] sm:$0xff]
  %v31 = vld [vmem:[%s0 + $0x58] sm:$0xff]
  %v32 = vld [vmem:[%s0 + $0x60] sm:$0xff]
  %v33 = vld [vmem:[%s0 + $0x68] sm:$0xff]
  %v34 = vld [vmem:[%s0 + $0x70] sm:$0xff]
  %v35 = vld [vmem:[%s0 + $0x78] sm:$0xff]
  %v36 = vld [vmem:[%s0 + $0x80] sm:$0xff]
  %v37 = vld [vmem:[%s0 + $0x88] sm:$0xff]
  %v38 = vld [vmem:[%s0 + $0x90] sm:$0xff]
  %v39 = vld [vmem:[%s0 + $0x98] sm:$0xff]
  %v40 = vld [vmem:[%s0 + $0xa0] sm:$0xff]
  %v41 = vld [vmem:[%s0 + $0xa8] sm:$0xff]
  %v42 = vld [vmem:[%s0 + $0xb0] sm:$0xff]
  %v43 = vld [vmem:[%s0 + $0xb8] sm:$0xff]
  %v44 = vld [vmem:[%s0 + $0xc0] sm:$0xff]
  %v45 = vld [vmem:[%s0 + $0xc8] sm:$0xff]
  %v46 = vld [vmem:[%s0 + $0xd0] sm:$0xff]
  %v47 = vld [vmem:[%s0 + $0xd8] sm:$0xff]
  %v48 = vld [vmem:[%s0 + $0xe0] sm:$0xff]
  %v49 = vld [vmem:[%s0 + $0xe8] sm:$0xff]
  %v50 = vld [vmem:[%s0 + $0xf0] sm:$0xff]
  %v51 = vld [vmem:[%s0 + $0xf8] sm:$0xff]
  %v52 = vld [vmem:[%s0 + $0x100] sm:$0xff]
  %v53 = vld [vmem:[%s0 + $0x108] sm:$0xff]
  %v54 = vld [vmem:[%s0 + $0x110] sm:$0xff]
  %v55 = vld [vmem:[%s0 + $0x118] sm:$0xff]
  %v56 = vld [vmem:[%s0 + $0x120] sm:$0xff]
  %v57 = vld [vmem:[%s0 + $0x128] sm:$0xff]
  %v58 = vld [vmem:[%s0 + $0x130] sm:$0xff]
  %v59 = vld [vmem:[%s0 + $0x138] sm:$0xff]
  %v60 = vld [vmem:[%s0 + $0x140] sm:$0xff]
  %v61 = vld [vmem:[%s0 + $0x148] sm:$0xff]
  %v62 = vld [vmem:[%s0 + $0x150] sm:$0xff]
  %v63 = vld [vmem:[%s0 + $0x158] sm:$0xff]
  %v64 = vld [vmem:[%s0 + $0x160] sm:$0xff]
  %v65 = vld [vmem:[%s0 + $0x168] sm:$0xff]
  %v66 = vld [vmem:[%s0 + $0x170] sm:$0xff]
  %v67 = vld [vmem:[%s0 + $0x178] sm:$0xff]
  %v68 = vld [vmem:[%s0 + $0x180] sm:$0xff]
  %v69 = vld [vmem:[%s0 + $0x188] sm:$0xff]
  %v70 = vld [vmem:[%s0 + $0x190] sm:$0xff]
  %v71 = vld [vmem:[%s0 + $0x198] sm:$0xff]
  %v72 = vld [vmem:[%s0 + $0x1a0] sm:$0xff]
  %v73 = vld [vmem:[%s0 + $0x1a8] sm:$0xff]
  %v74 = vld [vmem:[%s0 + $0x1b0] sm:$0xff]
  %v75 = vld [vmem:[%s0 + $0x1b8] sm:$0xff]
  %v76 = vld [vmem:[%s0 + $0x1c0] sm:$0xff]
  %v77 = vld [vmem:[%s0 + $0x1c8] sm:$0xff]
  %v78 = vld [vmem:[%s0 + $0x1d0] sm:$0xff]
  %v79 = vld [vmem:[%s0 + $0x1d8] sm:$0xff]
  %v80 = vld [vmem:[%s0 + $0x1e0] sm:$0xff]
  %v81 = vld [vmem:[%s0 + $0x1e8] sm:$0xff]
  %v82 = vld [vmem:[%s0 + $0x1f0] sm:$0xff]
  %v83 = vld [vmem:[%s0 + $0x1f8] sm:$0xff]
  %v84 = vmax.f32 %v20, %v22
  %v85 = vmax.f32 %v21, %v23
  %v86 = vmax.f32 %v24, %v26
  %v87 = vmax.f32 %v25, %v27
  %v88 = vmax.f32 %v28, %v30
  %v89 = vmax.f32 %v29, %v31
  %v90 = vmax.f32 %v32, %v34
  %v91 = vmax.f32 %v33, %v35
  %v92 = vmax.f32 %v36, %v38
  %v93 = vmax.f32 %v37, %v39
  %v94 = vmax.f32 %v40, %v42
  %v95 = vmax.f32 %v41, %v43
  %v96 = vmax.f32 %v44, %v46
  %v97 = vmax.f32 %v45, %v47
  %v98 = vmax.f32 %v48, %v50
  %v99 = vmax.f32 %v49, %v51
  %v100 = vmax.f32 %v52, %v54
  %v101 = vmax.f32 %v53, %v55
  %v102 = vmax.f32 %v56, %v58
  %v103 = vmax.f32 %v57, %v59
  %v104 = vmax.f32 %v60, %v62
  %v105 = vmax.f32 %v61, %v63
  %v106 = vmax.f32 %v64, %v66
  %v107 = vmax.f32 %v65, %v67
  %v108 = vmax.f32 %v68, %v70
  %v109 = vmax.f32 %v69, %v71
  %v110 = vmax.f32 %v72, %v74
  %v111 = vmax.f32 %v73, %v75
  %v112 = vmax.f32 %v76, %v78
  %v113 = vmax.f32 %v77, %v79
  %v114 = vmax.f32 %v80, %v82
  %v115 = vmax.f32 %v81, %v83
  %v148 = vcombine.high %v84, %v84
  %v150 = vunpack.c.l.s4 1983009808
  %v151 = vunpack.c.0.s8 %v150
  %v152 = vlaneseq
  %v153 = vshrl.u32 %v152, 7
  %v154 = vsub.s32 %v151, %v153
  %v155 = vrot.slane %v84, %v154
  %v157 = vunpack.c.l.s4 1983009808
  %v158 = vunpack.c.0.s8 %v157
  %v159 = vlaneseq
  %v160 = vshrl.u32 %v159, 7
  %v161 = vsub.s32 %v158, %v160
  %v162 = vrot.slane %v148, %v161
  %v163 = vcombine.high %v155, %v155
  %v164 = vcombine.high %v162, %v162
  %v165 = vcombine.high %v85, %v85
  %v167 = vunpack.c.l.s4 1983009808
  %v168 = vunpack.c.0.s8 %v167
  %v169 = vlaneseq
  %v170 = vshrl.u32 %v169, 7
  %v171 = vsub.s32 %v168, %v170
  %v172 = vrot.slane %v85, %v171
  %v174 = vunpack.c.l.s4 1983009808
  %v175 = vunpack.c.0.s8 %v174
  %v176 = vlaneseq
  %v177 = vshrl.u32 %v176, 7
  %v178 = vsub.s32 %v175, %v177
  %v179 = vrot.slane %v165, %v178
  %v180 = vcombine.high %v172, %v172
  %v181 = vcombine.high %v179, %v179
  %v182 = vcombine.high %v86, %v86
  %v184 = vunpack.c.l.s4 1983009808
  %v185 = vunpack.c.0.s8 %v184
  %v186 = vlaneseq
  %v187 = vshrl.u32 %v186, 7
  %v188 = vsub.s32 %v185, %v187
  %v189 = vrot.slane %v86, %v188
  %v191 = vunpack.c.l.s4 1983009808
  %v192 = vunpack.c.0.s8 %v191
  %v193 = vlaneseq
  %v194 = vshrl.u32 %v193, 7
  %v195 = vsub.s32 %v192, %v194
  %v196 = vrot.slane %v182, %v195
  %v197 = vcombine.high %v189, %v189
  %v198 = vcombine.high %v196, %v196
  %v199 = vcombine.high %v87, %v87
  %v201 = vunpack.c.l.s4 1983009808
  %v202 = vunpack.c.0.s8 %v201
  %v203 = vlaneseq
  %v204 = vshrl.u32 %v203, 7
  %v205 = vsub.s32 %v202, %v204
  %v206 = vrot.slane %v87, %v205
  %v208 = vunpack.c.l.s4 1983009808
  %v209 = vunpack.c.0.s8 %v208
  %v210 = vlaneseq
  %v211 = vshrl.u32 %v210, 7
  %v212 = vsub.s32 %v209, %v211
  %v213 = vrot.slane %v199, %v212
  %v214 = vcombine.high %v206, %v206
  %v215 = vcombine.high %v213, %v213
  %v216 = vcombine.high %v88, %v88
  %v218 = vunpack.c.l.s4 1983009808
  %v219 = vunpack.c.0.s8 %v218
  %v220 = vlaneseq
  %v221 = vshrl.u32 %v220, 7
  %v222 = vsub.s32 %v219, %v221
  %v223 = vrot.slane %v88, %v222
  %v225 = vunpack.c.l.s4 1983009808
  %v226 = vunpack.c.0.s8 %v225
  %v227 = vlaneseq
  %v228 = vshrl.u32 %v227, 7
  %v229 = vsub.s32 %v226, %v228
  %v230 = vrot.slane %v216, %v229
  %v231 = vcombine.high %v223, %v223
  %v232 = vcombine.high %v230, %v230
  %v233 = vcombine.high %v89, %v89
  %v235 = vunpack.c.l.s4 1983009808
  %v236 = vunpack.c.0.s8 %v235
  %v237 = vlaneseq
  %v238 = vshrl.u32 %v237, 7
  %v239 = vsub.s32 %v236, %v238
  %v240 = vrot.slane %v89, %v239
  %v242 = vunpack.c.l.s4 1983009808
  %v243 = vunpack.c.0.s8 %v242
  %v244 = vlaneseq
  %v245 = vshrl.u32 %v244, 7
  %v246 = vsub.s32 %v243, %v245
  %v247 = vrot.slane %v233, %v246
  %v248 = vcombine.high %v240, %v240
  %v249 = vcombine.high %v247, %v247
  %v250 = vcombine.high %v90, %v90
  %v252 = vunpack.c.l.s4 1983009808
  %v253 = vunpack.c.0.s8 %v252
  %v254 = vlaneseq
  %v255 = vshrl.u32 %v254, 7
  %v256 = vsub.s32 %v253, %v255
  %v257 = vrot.slane %v90, %v256
  %v259 = vunpack.c.l.s4 1983009808
  %v260 = vunpack.c.0.s8 %v259
  %v261 = vlaneseq
  %v262 = vshrl.u32 %v261, 7
  %v263 = vsub.s32 %v260, %v262
  %v264 = vrot.slane %v250, %v263
  %v265 = vcombine.high %v257, %v257
  %v266 = vcombine.high %v264, %v264
  %v267 = vcombine.high %v91, %v91
  %v269 = vunpack.c.l.s4 1983009808
  %v270 = vunpack.c.0.s8 %v269
  %v271 = vlaneseq
  %v272 = vshrl.u32 %v271, 7
  %v273 = vsub.s32 %v270, %v272
  %v274 = vrot.slane %v91, %v273
  %v276 = vunpack.c.l.s4 1983009808
  %v277 = vunpack.c.0.s8 %v276
  %v278 = vlaneseq
  %v279 = vshrl.u32 %v278, 7
  %v280 = vsub.s32 %v277, %v279
  %v281 = vrot.slane %v267, %v280
  %v282 = vcombine.high %v274, %v274
  %v283 = vcombine.high %v281, %v281
  %v284 = vcombine.high %v92, %v92
  %v286 = vunpack.c.l.s4 1983009808
  %v287 = vunpack.c.0.s8 %v286
  %v288 = vlaneseq
  %v289 = vshrl.u32 %v288, 7
  %v290 = vsub.s32 %v287, %v289
  %v291 = vrot.slane %v92, %v290
  %v293 = vunpack.c.l.s4 1983009808
  %v294 = vunpack.c.0.s8 %v293
  %v295 = vlaneseq
  %v296 = vshrl.u32 %v295, 7
  %v297 = vsub.s32 %v294, %v296
  %v298 = vrot.slane %v284, %v297
  %v299 = vcombine.high %v291, %v291
  %v300 = vcombine.high %v298, %v298
  %v301 = vcombine.high %v93, %v93
  %v303 = vunpack.c.l.s4 1983009808
  %v304 = vunpack.c.0.s8 %v303
  %v305 = vlaneseq
  %v306 = vshrl.u32 %v305, 7
  %v307 = vsub.s32 %v304, %v306
  %v308 = vrot.slane %v93, %v307
  %v310 = vunpack.c.l.s4 1983009808
  %v311 = vunpack.c.0.s8 %v310
  %v312 = vlaneseq
  %v313 = vshrl.u32 %v312, 7
  %v314 = vsub.s32 %v311, %v313
  %v315 = vrot.slane %v301, %v314
  %v316 = vcombine.high %v308, %v308
  %v317 = vcombine.high %v315, %v315
  %v318 = vcombine.high %v94, %v94
  %v320 = vunpack.c.l.s4 1983009808
  %v321 = vunpack.c.0.s8 %v320
  %v322 = vlaneseq
  %v323 = vshrl.u32 %v322, 7
  %v324 = vsub.s32 %v321, %v323
  %v325 = vrot.slane %v94, %v324
  %v327 = vunpack.c.l.s4 1983009808
  %v328 = vunpack.c.0.s8 %v327
  %v329 = vlaneseq
  %v330 = vshrl.u32 %v329, 7
  %v331 = vsub.s32 %v328, %v330
  %v332 = vrot.slane %v318, %v331
  %v333 = vcombine.high %v325, %v325
  %v334 = vcombine.high %v332, %v332
  %v335 = vcombine.high %v95, %v95
  %v337 = vunpack.c.l.s4 1983009808
  %v338 = vunpack.c.0.s8 %v337
  %v339 = vlaneseq
  %v340 = vshrl.u32 %v339, 7
  %v341 = vsub.s32 %v338, %v340
  %v342 = vrot.slane %v95, %v341
  %v344 = vunpack.c.l.s4 1983009808
  %v345 = vunpack.c.0.s8 %v344
  %v346 = vlaneseq
  %v347 = vshrl.u32 %v346, 7
  %v348 = vsub.s32 %v345, %v347
  %v349 = vrot.slane %v335, %v348
  %v350 = vcombine.high %v342, %v342
  %v351 = vcombine.high %v349, %v349
  %v352 = vcombine.high %v96, %v96
  %v354 = vunpack.c.l.s4 1983009808
  %v355 = vunpack.c.0.s8 %v354
  %v356 = vlaneseq
  %v357 = vshrl.u32 %v356, 7
  %v358 = vsub.s32 %v355, %v357
  %v359 = vrot.slane %v96, %v358
  %v361 = vunpack.c.l.s4 1983009808
  %v362 = vunpack.c.0.s8 %v361
  %v363 = vlaneseq
  %v364 = vshrl.u32 %v363, 7
  %v365 = vsub.s32 %v362, %v364
  %v366 = vrot.slane %v352, %v365
  %v367 = vcombine.high %v359, %v359
  %v368 = vcombine.high %v366, %v366
  %v369 = vcombine.high %v97, %v97
  %v371 = vunpack.c.l.s4 1983009808
  %v372 = vunpack.c.0.s8 %v371
  %v373 = vlaneseq
  %v374 = vshrl.u32 %v373, 7
  %v375 = vsub.s32 %v372, %v374
  %v376 = vrot.slane %v97, %v375
  %v378 = vunpack.c.l.s4 1983009808
  %v379 = vunpack.c.0.s8 %v378
  %v380 = vlaneseq
  %v381 = vshrl.u32 %v380, 7
  %v382 = vsub.s32 %v379, %v381
  %v383 = vrot.slane %v369, %v382
  %v384 = vcombine.high %v376, %v376
  %v385 = vcombine.high %v383, %v383
  %v386 = vcombine.high %v98, %v98
  %v388 = vunpack.c.l.s4 1983009808
  %v389 = vunpack.c.0.s8 %v388
  %v390 = vlaneseq
  %v391 = vshrl.u32 %v390, 7
  %v392 = vsub.s32 %v389, %v391
  %v393 = vrot.slane %v98, %v392
  %v395 = vunpack.c.l.s4 1983009808
  %v396 = vunpack.c.0.s8 %v395
  %v397 = vlaneseq
  %v398 = vshrl.u32 %v397, 7
  %v399 = vsub.s32 %v396, %v398
  %v400 = vrot.slane %v386, %v399
  %v401 = vcombine.high %v393, %v393
  %v402 = vcombine.high %v400, %v400
  %v403 = vcombine.high %v99, %v99
  %v405 = vunpack.c.l.s4 1983009808
  %v406 = vunpack.c.0.s8 %v405
  %v407 = vlaneseq
  %v408 = vshrl.u32 %v407, 7
  %v409 = vsub.s32 %v406, %v408
  %v410 = vrot.slane %v99, %v409
  %v412 = vunpack.c.l.s4 1983009808
  %v413 = vunpack.c.0.s8 %v412
  %v414 = vlaneseq
  %v415 = vshrl.u32 %v414, 7
  %v416 = vsub.s32 %v413, %v415
  %v417 = vrot.slane %v403, %v416
  %v418 = vcombine.high %v410, %v410
  %v419 = vcombine.high %v417, %v417
  %v420 = vcombine.high %v100, %v100
  %v422 = vunpack.c.l.s4 1983009808
  %v423 = vunpack.c.0.s8 %v422
  %v424 = vlaneseq
  %v425 = vshrl.u32 %v424, 7
  %v426 = vsub.s32 %v423, %v425
  %v427 = vrot.slane %v100, %v426
  %v429 = vunpack.c.l.s4 1983009808
  %v430 = vunpack.c.0.s8 %v429
  %v431 = vlaneseq
  %v432 = vshrl.u32 %v431, 7
  %v433 = vsub.s32 %v430, %v432
  %v434 = vrot.slane %v420, %v433
  %v435 = vcombine.high %v427, %v427
  %v436 = vcombine.high %v434, %v434
  %v437 = vcombine.high %v101, %v101
  %v439 = vunpack.c.l.s4 1983009808
  %v440 = vunpack.c.0.s8 %v439
  %v441 = vlaneseq
  %v442 = vshrl.u32 %v441, 7
  %v443 = vsub.s32 %v440, %v442
  %v444 = vrot.slane %v101, %v443
  %v446 = vunpack.c.l.s4 1983009808
  %v447 = vunpack.c.0.s8 %v446
  %v448 = vlaneseq
  %v449 = vshrl.u32 %v448, 7
  %v450 = vsub.s32 %v447, %v449
  %v451 = vrot.slane %v437, %v450
  %v452 = vcombine.high %v444, %v444
  %v453 = vcombine.high %v451, %v451
  %v454 = vcombine.high %v102, %v102
  %v456 = vunpack.c.l.s4 1983009808
  %v457 = vunpack.c.0.s8 %v456
  %v458 = vlaneseq
  %v459 = vshrl.u32 %v458, 7
  %v460 = vsub.s32 %v457, %v459
  %v461 = vrot.slane %v102, %v460
  %v463 = vunpack.c.l.s4 1983009808
  %v464 = vunpack.c.0.s8 %v463
  %v465 = vlaneseq
  %v466 = vshrl.u32 %v465, 7
  %v467 = vsub.s32 %v464, %v466
  %v468 = vrot.slane %v454, %v467
  %v469 = vcombine.high %v461, %v461
  %v470 = vcombine.high %v468, %v468
  %v471 = vcombine.high %v103, %v103
  %v473 = vunpack.c.l.s4 1983009808
  %v474 = vunpack.c.0.s8 %v473
  %v475 = vlaneseq
  %v476 = vshrl.u32 %v475, 7
  %v477 = vsub.s32 %v474, %v476
  %v478 = vrot.slane %v103, %v477
  %v480 = vunpack.c.l.s4 1983009808
  %v481 = vunpack.c.0.s8 %v480
  %v482 = vlaneseq
  %v483 = vshrl.u32 %v482, 7
  %v484 = vsub.s32 %v481, %v483
  %v485 = vrot.slane %v471, %v484
  %v486 = vcombine.high %v478, %v478
  %v487 = vcombine.high %v485, %v485
  %v488 = vcombine.high %v104, %v104
  %v490 = vunpack.c.l.s4 1983009808
  %v491 = vunpack.c.0.s8 %v490
  %v492 = vlaneseq
  %v493 = vshrl.u32 %v492, 7
  %v494 = vsub.s32 %v491, %v493
  %v495 = vrot.slane %v104, %v494
  %v497 = vunpack.c.l.s4 1983009808
  %v498 = vunpack.c.0.s8 %v497
  %v499 = vlaneseq
  %v500 = vshrl.u32 %v499, 7
  %v501 = vsub.s32 %v498, %v500
  %v502 = vrot.slane %v488, %v501
  %v503 = vcombine.high %v495, %v495
  %v504 = vcombine.high %v502, %v502
  %v505 = vcombine.high %v105, %v105
  %v507 = vunpack.c.l.s4 1983009808
  %v508 = vunpack.c.0.s8 %v507
  %v509 = vlaneseq
  %v510 = vshrl.u32 %v509, 7
  %v511 = vsub.s32 %v508, %v510
  %v512 = vrot.slane %v105, %v511
  %v514 = vunpack.c.l.s4 1983009808
  %v515 = vunpack.c.0.s8 %v514
  %v516 = vlaneseq
  %v517 = vshrl.u32 %v516, 7
  %v518 = vsub.s32 %v515, %v517
  %v519 = vrot.slane %v505, %v518
  %v520 = vcombine.high %v512, %v512
  %v521 = vcombine.high %v519, %v519
  %v522 = vcombine.high %v106, %v106
  %v524 = vunpack.c.l.s4 1983009808
  %v525 = vunpack.c.0.s8 %v524
  %v526 = vlaneseq
  %v527 = vshrl.u32 %v526, 7
  %v528 = vsub.s32 %v525, %v527
  %v529 = vrot.slane %v106, %v528
  %v531 = vunpack.c.l.s4 1983009808
  %v532 = vunpack.c.0.s8 %v531
  %v533 = vlaneseq
  %v534 = vshrl.u32 %v533, 7
  %v535 = vsub.s32 %v532, %v534
  %v536 = vrot.slane %v522, %v535
  %v537 = vcombine.high %v529, %v529
  %v538 = vcombine.high %v536, %v536
  %v539 = vcombine.high %v107, %v107
  %v541 = vunpack.c.l.s4 1983009808
  %v542 = vunpack.c.0.s8 %v541
  %v543 = vlaneseq
  %v544 = vshrl.u32 %v543, 7
  %v545 = vsub.s32 %v542, %v544
  %v546 = vrot.slane %v107, %v545
  %v548 = vunpack.c.l.s4 1983009808
  %v549 = vunpack.c.0.s8 %v548
  %v550 = vlaneseq
  %v551 = vshrl.u32 %v550, 7
  %v552 = vsub.s32 %v549, %v551
  %v553 = vrot.slane %v539, %v552
  %v554 = vcombine.high %v546, %v546
  %v555 = vcombine.high %v553, %v553
  %v556 = vcombine.high %v108, %v108
  %v558 = vunpack.c.l.s4 1983009808
  %v559 = vunpack.c.0.s8 %v558
  %v560 = vlaneseq
  %v561 = vshrl.u32 %v560, 7
  %v562 = vsub.s32 %v559, %v561
  %v563 = vrot.slane %v108, %v562
  %v565 = vunpack.c.l.s4 1983009808
  %v566 = vunpack.c.0.s8 %v565
  %v567 = vlaneseq
  %v568 = vshrl.u32 %v567, 7
  %v569 = vsub.s32 %v566, %v568
  %v570 = vrot.slane %v556, %v569
  %v571 = vcombine.high %v563, %v563
  %v572 = vcombine.high %v570, %v570
  %v573 = vcombine.high %v109, %v109
  %v575 = vunpack.c.l.s4 1983009808
  %v576 = vunpack.c.0.s8 %v575
  %v577 = vlaneseq
  %v578 = vshrl.u32 %v577, 7
  %v579 = vsub.s32 %v576, %v578
  %v580 = vrot.slane %v109, %v579
  %v582 = vunpack.c.l.s4 1983009808
  %v583 = vunpack.c.0.s8 %v582
  %v584 = vlaneseq
  %v585 = vshrl.u32 %v584, 7
  %v586 = vsub.s32 %v583, %v585
  %v587 = vrot.slane %v573, %v586
  %v588 = vcombine.high %v580, %v580
  %v589 = vcombine.high %v587, %v587
  %v590 = vcombine.high %v110, %v110
  %v592 = vunpack.c.l.s4 1983009808
  %v593 = vunpack.c.0.s8 %v592
  %v594 = vlaneseq
  %v595 = vshrl.u32 %v594, 7
  %v596 = vsub.s32 %v593, %v595
  %v597 = vrot.slane %v110, %v596
  %v599 = vunpack.c.l.s4 1983009808
  %v600 = vunpack.c.0.s8 %v599
  %v601 = vlaneseq
  %v602 = vshrl.u32 %v601, 7
  %v603 = vsub.s32 %v600, %v602
  %v604 = vrot.slane %v590, %v603
  %v605 = vcombine.high %v597, %v597
  %v606 = vcombine.high %v604, %v604
  %v607 = vcombine.high %v111, %v111
  %v609 = vunpack.c.l.s4 1983009808
  %v610 = vunpack.c.0.s8 %v609
  %v611 = vlaneseq
  %v612 = vshrl.u32 %v611, 7
  %v613 = vsub.s32 %v610, %v612
  %v614 = vrot.slane %v111, %v613
  %v616 = vunpack.c.l.s4 1983009808
  %v617 = vunpack.c.0.s8 %v616
  %v618 = vlaneseq
  %v619 = vshrl.u32 %v618, 7
  %v620 = vsub.s32 %v617, %v619
  %v621 = vrot.slane %v607, %v620
  %v622 = vcombine.high %v614, %v614
  %v623 = vcombine.high %v621, %v621
  %v624 = vcombine.high %v112, %v112
  %v626 = vunpack.c.l.s4 1983009808
  %v627 = vunpack.c.0.s8 %v626
  %v628 = vlaneseq
  %v629 = vshrl.u32 %v628, 7
  %v630 = vsub.s32 %v627, %v629
  %v631 = vrot.slane %v112, %v630
  %v633 = vunpack.c.l.s4 1983009808
  %v634 = vunpack.c.0.s8 %v633
  %v635 = vlaneseq
  %v636 = vshrl.u32 %v635, 7
  %v637 = vsub.s32 %v634, %v636
  %v638 = vrot.slane %v624, %v637
  %v639 = vcombine.high %v631, %v631
  %v640 = vcombine.high %v638, %v638
  %v641 = vcombine.high %v113, %v113
  %v643 = vunpack.c.l.s4 1983009808
  %v644 = vunpack.c.0.s8 %v643
  %v645 = vlaneseq
  %v646 = vshrl.u32 %v645, 7
  %v647 = vsub.s32 %v644, %v646
  %v648 = vrot.slane %v113, %v647
  %v650 = vunpack.c.l.s4 1983009808
  %v651 = vunpack.c.0.s8 %v650
  %v652 = vlaneseq
  %v653 = vshrl.u32 %v652, 7
  %v654 = vsub.s32 %v651, %v653
  %v655 = vrot.slane %v641, %v654
  %v656 = vcombine.high %v648, %v648
  %v657 = vcombine.high %v655, %v655
  %v658 = vcombine.high %v114, %v114
  %v660 = vunpack.c.l.s4 1983009808
  %v661 = vunpack.c.0.s8 %v660
  %v662 = vlaneseq
  %v663 = vshrl.u32 %v662, 7
  %v664 = vsub.s32 %v661, %v663
  %v665 = vrot.slane %v114, %v664
  %v667 = vunpack.c.l.s4 1983009808
  %v668 = vunpack.c.0.s8 %v667
  %v669 = vlaneseq
  %v670 = vshrl.u32 %v669, 7
  %v671 = vsub.s32 %v668, %v670
  %v672 = vrot.slane %v658, %v671
  %v673 = vcombine.high %v665, %v665
  %v674 = vcombine.high %v672, %v672
  %v675 = vcombine.high %v115, %v115
  %v677 = vunpack.c.l.s4 1983009808
  %v678 = vunpack.c.0.s8 %v677
  %v679 = vlaneseq
  %v680 = vshrl.u32 %v679, 7
  %v681 = vsub.s32 %v678, %v680
  %v682 = vrot.slane %v115, %v681
  %v684 = vunpack.c.l.s4 1983009808
  %v685 = vunpack.c.0.s8 %v684
  %v686 = vlaneseq
  %v687 = vshrl.u32 %v686, 7
  %v688 = vsub.s32 %v685, %v687
  %v689 = vrot.slane %v675, %v688
  %v690 = vcombine.high %v682, %v682
  %v691 = vcombine.high %v689, %v689
  %v820 = vrot.slane %v155, 7
  %v821 = vrot.slane %v820, 2
  %v822 = vrot.slane %v163, 7
  %v823 = vrot.slane %v822, 2
  %v824 = vrot.slane %v162, 7
  %v825 = vrot.slane %v824, 2
  %v826 = vrot.slane %v164, 7
  %v827 = vrot.slane %v826, 2
  %v828 = vrot.slane %v172, 7
  %v829 = vrot.slane %v828, 2
  %v830 = vrot.slane %v180, 7
  %v831 = vrot.slane %v830, 2
  %v832 = vrot.slane %v179, 7
  %v833 = vrot.slane %v832, 2
  %v834 = vrot.slane %v181, 7
  %v835 = vrot.slane %v834, 2
  %v836 = vrot.slane %v189, 7
  %v837 = vrot.slane %v836, 2
  %v838 = vrot.slane %v197, 7
  %v839 = vrot.slane %v838, 2
  %v840 = vrot.slane %v196, 7
  %v841 = vrot.slane %v840, 2
  %v842 = vrot.slane %v198, 7
  %v843 = vrot.slane %v842, 2
  %v844 = vrot.slane %v206, 7
  %v845 = vrot.slane %v844, 2
  %v846 = vrot.slane %v214, 7
  %v847 = vrot.slane %v846, 2
  %v848 = vrot.slane %v213, 7
  %v849 = vrot.slane %v848, 2
  %v850 = vrot.slane %v215, 7
  %v851 = vrot.slane %v850, 2
  %v852 = vrot.slane %v223, 7
  %v853 = vrot.slane %v852, 2
  %v854 = vrot.slane %v231, 7
  %v855 = vrot.slane %v854, 2
  %v856 = vrot.slane %v230, 7
  %v857 = vrot.slane %v856, 2
  %v858 = vrot.slane %v232, 7
  %v859 = vrot.slane %v858, 2
  %v860 = vrot.slane %v240, 7
  %v861 = vrot.slane %v860, 2
  %v862 = vrot.slane %v248, 7
  %v863 = vrot.slane %v862, 2
  %v864 = vrot.slane %v247, 7
  %v865 = vrot.slane %v864, 2
  %v866 = vrot.slane %v249, 7
  %v867 = vrot.slane %v866, 2
  %v868 = vrot.slane %v257, 7
  %v869 = vrot.slane %v868, 2
  %v870 = vrot.slane %v265, 7
  %v871 = vrot.slane %v870, 2
  %v872 = vrot.slane %v264, 7
  %v873 = vrot.slane %v872, 2
  %v874 = vrot.slane %v266, 7
  %v875 = vrot.slane %v874, 2
  %v876 = vrot.slane %v274, 7
  %v877 = vrot.slane %v876, 2
  %v878 = vrot.slane %v282, 7
  %v879 = vrot.slane %v878, 2
  %v880 = vrot.slane %v281, 7
  %v881 = vrot.slane %v880, 2
  %v882 = vrot.slane %v283, 7
  %v883 = vrot.slane %v882, 2
  %v884 = vrot.slane %v291, 7
  %v885 = vrot.slane %v884, 2
  %v886 = vrot.slane %v299, 7
  %v887 = vrot.slane %v886, 2
  %v888 = vrot.slane %v298, 7
  %v889 = vrot.slane %v888, 2
  %v890 = vrot.slane %v300, 7
  %v891 = vrot.slane %v890, 2
  %v892 = vrot.slane %v308, 7
  %v893 = vrot.slane %v892, 2
  %v894 = vrot.slane %v316, 7
  %v895 = vrot.slane %v894, 2
  %v896 = vrot.slane %v315, 7
  %v897 = vrot.slane %v896, 2
  %v898 = vrot.slane %v317, 7
  %v899 = vrot.slane %v898, 2
  %v900 = vrot.slane %v325, 7
  %v901 = vrot.slane %v900, 2
  %v902 = vrot.slane %v333, 7
  %v903 = vrot.slane %v902, 2
  %v904 = vrot.slane %v332, 7
  %v905 = vrot.slane %v904, 2
  %v906 = vrot.slane %v334, 7
  %v907 = vrot.slane %v906, 2
  %v908 = vrot.slane %v342, 7
  %v909 = vrot.slane %v908, 2
  %v910 = vrot.slane %v350, 7
  %v911 = vrot.slane %v910, 2
  %v912 = vrot.slane %v349, 7
  %v913 = vrot.slane %v912, 2
  %v914 = vrot.slane %v351, 7
  %v915 = vrot.slane %v914, 2
  %v916 = vrot.slane %v359, 7
  %v917 = vrot.slane %v916, 2
  %v918 = vrot.slane %v367, 7
  %v919 = vrot.slane %v918, 2
  %v920 = vrot.slane %v366, 7
  %v921 = vrot.slane %v920, 2
  %v922 = vrot.slane %v368, 7
  %v923 = vrot.slane %v922, 2
  %v924 = vrot.slane %v376, 7
  %v925 = vrot.slane %v924, 2
  %v926 = vrot.slane %v384, 7
  %v927 = vrot.slane %v926, 2
  %v928 = vrot.slane %v383, 7
  %v929 = vrot.slane %v928, 2
  %v930 = vrot.slane %v385, 7
  %v931 = vrot.slane %v930, 2
  %v932 = vrot.slane %v393, 7
  %v933 = vrot.slane %v932, 2
  %v934 = vrot.slane %v401, 7
  %v935 = vrot.slane %v934, 2
  %v936 = vrot.slane %v400, 7
  %v937 = vrot.slane %v936, 2
  %v938 = vrot.slane %v402, 7
  %v939 = vrot.slane %v938, 2
  %v940 = vrot.slane %v410, 7
  %v941 = vrot.slane %v940, 2
  %v942 = vrot.slane %v418, 7
  %v943 = vrot.slane %v942, 2
  %v944 = vrot.slane %v417, 7
  %v945 = vrot.slane %v944, 2
  %v946 = vrot.slane %v419, 7
  %v947 = vrot.slane %v946, 2
  %v948 = vrot.slane %v427, 7
  %v949 = vrot.slane %v948, 2
  %v950 = vrot.slane %v435, 7
  %v951 = vrot.slane %v950, 2
  %v952 = vrot.slane %v434, 7
  %v953 = vrot.slane %v952, 2
  %v954 = vrot.slane %v436, 7
  %v955 = vrot.slane %v954, 2
  %v956 = vrot.slane %v444, 7
  %v957 = vrot.slane %v956, 2
  %v958 = vrot.slane %v452, 7
  %v959 = vrot.slane %v958, 2
  %v960 = vrot.slane %v451, 7
  %v961 = vrot.slane %v960, 2
  %v962 = vrot.slane %v453, 7
  %v963 = vrot.slane %v962, 2
  %v964 = vrot.slane %v461, 7
  %v965 = vrot.slane %v964, 2
  %v966 = vrot.slane %v469, 7
  %v967 = vrot.slane %v966, 2
  %v968 = vrot.slane %v468, 7
  %v969 = vrot.slane %v968, 2
  %v970 = vrot.slane %v470, 7
  %v971 = vrot.slane %v970, 2
  %v972 = vrot.slane %v478, 7
  %v973 = vrot.slane %v972, 2
  %v974 = vrot.slane %v486, 7
  %v975 = vrot.slane %v974, 2
  %v976 = vrot.slane %v485, 7
  %v977 = vrot.slane %v976, 2
  %v978 = vrot.slane %v487, 7
  %v979 = vrot.slane %v978, 2
  %v980 = vrot.slane %v495, 7
  %v981 = vrot.slane %v980, 2
  %v982 = vrot.slane %v503, 7
  %v983 = vrot.slane %v982, 2
  %v984 = vrot.slane %v502, 7
  %v985 = vrot.slane %v984, 2
  %v986 = vrot.slane %v504, 7
  %v987 = vrot.slane %v986, 2
  %v988 = vrot.slane %v512, 7
  %v989 = vrot.slane %v988, 2
  %v990 = vrot.slane %v520, 7
  %v991 = vrot.slane %v990, 2
  %v992 = vrot.slane %v519, 7
  %v993 = vrot.slane %v992, 2
  %v994 = vrot.slane %v521, 7
  %v995 = vrot.slane %v994, 2
  %v996 = vrot.slane %v529, 7
  %v997 = vrot.slane %v996, 2
  %v998 = vrot.slane %v537, 7
  %v999 = vrot.slane %v998, 2
  %v1000 = vrot.slane %v536, 7
  %v1001 = vrot.slane %v1000, 2
  %v1002 = vrot.slane %v538, 7
  %v1003 = vrot.slane %v1002, 2
  %v1004 = vrot.slane %v546, 7
  %v1005 = vrot.slane %v1004, 2
  %v1006 = vrot.slane %v554, 7
  %v1007 = vrot.slane %v1006, 2
  %v1008 = vrot.slane %v553, 7
  %v1009 = vrot.slane %v1008, 2
  %v1010 = vrot.slane %v555, 7
  %v1011 = vrot.slane %v1010, 2
  %v1012 = vrot.slane %v563, 7
  %v1013 = vrot.slane %v1012, 2
  %v1014 = vrot.slane %v571, 7
  %v1015 = vrot.slane %v1014, 2
  %v1016 = vrot.slane %v570, 7
  %v1017 = vrot.slane %v1016, 2
  %v1018 = vrot.slane %v572, 7
  %v1019 = vrot.slane %v1018, 2
  %v1020 = vrot.slane %v580, 7
  %v1021 = vrot.slane %v1020, 2
  %v1022 = vrot.slane %v588, 7
  %v1023 = vrot.slane %v1022, 2
  %v1024 = vrot.slane %v587, 7
  %v1025 = vrot.slane %v1024, 2
  %v1026 = vrot.slane %v589, 7
  %v1027 = vrot.slane %v1026, 2
  %v1028 = vrot.slane %v597, 7
  %v1029 = vrot.slane %v1028, 2
  %v1030 = vrot.slane %v605, 7
  %v1031 = vrot.slane %v1030, 2
  %v1032 = vrot.slane %v604, 7
  %v1033 = vrot.slane %v1032, 2
  %v1034 = vrot.slane %v606, 7
  %v1035 = vrot.slane %v1034, 2
  %v1036 = vrot.slane %v614, 7
  %v1037 = vrot.slane %v1036, 2
  %v1038 = vrot.slane %v622, 7
  %v1039 = vrot.slane %v1038, 2
  %v1040 = vrot.slane %v621, 7
  %v1041 = vrot.slane %v1040, 2
  %v1042 = vrot.slane %v623, 7
  %v1043 = vrot.slane %v1042, 2
  %v1044 = vrot.slane %v631, 7
  %v1045 = vrot.slane %v1044, 2
  %v1046 = vrot.slane %v639, 7
  %v1047 = vrot.slane %v1046, 2
  %v1048 = vrot.slane %v638, 7
  %v1049 = vrot.slane %v1048, 2
  %v1050 = vrot.slane %v640, 7
  %v1051 = vrot.slane %v1050, 2
  %v1052 = vrot.slane %v648, 7
  %v1053 = vrot.slane %v1052, 2
  %v1054 = vrot.slane %v656, 7
  %v1055 = vrot.slane %v1054, 2
  %v1056 = vrot.slane %v655, 7
  %v1057 = vrot.slane %v1056, 2
  %v1058 = vrot.slane %v657, 7
  %v1059 = vrot.slane %v1058, 2
  %v1060 = vrot.slane %v665, 7
  %v1061 = vrot.slane %v1060, 2
  %v1062 = vrot.slane %v673, 7
  %v1063 = vrot.slane %v1062, 2
  %v1064 = vrot.slane %v672, 7
  %v1065 = vrot.slane %v1064, 2
  %v1066 = vrot.slane %v674, 7
  %v1067 = vrot.slane %v1066, 2
  %v1068 = vrot.slane %v682, 7
  %v1069 = vrot.slane %v1068, 2
  %v1070 = vrot.slane %v690, 7
  %v1071 = vrot.slane %v1070, 2
  %v1072 = vrot.slane %v689, 7
  %v1073 = vrot.slane %v1072, 2
  %v1074 = vrot.slane %v691, 7
  %v1075 = vrot.slane %v1074, 2
  %v1204 = vmax.f32 %v155, %v821
  %v1205 = vmax.f32 %v163, %v823
  %v1206 = vmax.f32 %v162, %v825
  %v1207 = vmax.f32 %v164, %v827
  %v1208 = vmax.f32 %v172, %v829
  %v1209 = vmax.f32 %v180, %v831
  %v1210 = vmax.f32 %v179, %v833
  %v1211 = vmax.f32 %v181, %v835
  %v1212 = vmax.f32 %v189, %v837
  %v1213 = vmax.f32 %v197, %v839
  %v1214 = vmax.f32 %v196, %v841
  %v1215 = vmax.f32 %v198, %v843
  %v1216 = vmax.f32 %v206, %v845
  %v1217 = vmax.f32 %v214, %v847
  %v1218 = vmax.f32 %v213, %v849
  %v1219 = vmax.f32 %v215, %v851
  %v1220 = vmax.f32 %v223, %v853
  %v1221 = vmax.f32 %v231, %v855
  %v1222 = vmax.f32 %v230, %v857
  %v1223 = vmax.f32 %v232, %v859
  %v1224 = vmax.f32 %v240, %v861
  %v1225 = vmax.f32 %v248, %v863
  %v1226 = vmax.f32 %v247, %v865
  %v1227 = vmax.f32 %v249, %v867
  %v1228 = vmax.f32 %v257, %v869
  %v1229 = vmax.f32 %v265, %v871
  %v1230 = vmax.f32 %v264, %v873
  %v1231 = vmax.f32 %v266, %v875
  %v1232 = vmax.f32 %v274, %v877
  %v1233 = vmax.f32 %v282, %v879
  %v1234 = vmax.f32 %v281, %v881
  %v1235 = vmax.f32 %v283, %v883
  %v1236 = vmax.f32 %v291, %v885
  %v1237 = vmax.f32 %v299, %v887
  %v1238 = vmax.f32 %v298, %v889
  %v1239 = vmax.f32 %v300, %v891
  %v1240 = vmax.f32 %v308, %v893
  %v1241 = vmax.f32 %v316, %v895
  %v1242 = vmax.f32 %v315, %v897
  %v1243 = vmax.f32 %v317, %v899
  %v1244 = vmax.f32 %v325, %v901
  %v1245 = vmax.f32 %v333, %v903
  %v1246 = vmax.f32 %v332, %v905
  %v1247 = vmax.f32 %v334, %v907
  %v1248 = vmax.f32 %v342, %v909
  %v1249 = vmax.f32 %v350, %v911
  %v1250 = vmax.f32 %v349, %v913
  %v1251 = vmax.f32 %v351, %v915
  %v1252 = vmax.f32 %v359, %v917
  %v1253 = vmax.f32 %v367, %v919
  %v1254 = vmax.f32 %v366, %v921
  %v1255 = vmax.f32 %v368, %v923
  %v1256 = vmax.f32 %v376, %v925
  %v1257 = vmax.f32 %v384, %v927
  %v1258 = vmax.f32 %v383, %v929
  %v1259 = vmax.f32 %v385, %v931
  %v1260 = vmax.f32 %v393, %v933
  %v1261 = vmax.f32 %v401, %v935
  %v1262 = vmax.f32 %v400, %v937
  %v1263 = vmax.f32 %v402, %v939
  %v1264 = vmax.f32 %v410, %v941
  %v1265 = vmax.f32 %v418, %v943
  %v1266 = vmax.f32 %v417, %v945
  %v1267 = vmax.f32 %v419, %v947
  %v1268 = vmax.f32 %v427, %v949
  %v1269 = vmax.f32 %v435, %v951
  %v1270 = vmax.f32 %v434, %v953
  %v1271 = vmax.f32 %v436, %v955
  %v1272 = vmax.f32 %v444, %v957
  %v1273 = vmax.f32 %v452, %v959
  %v1274 = vmax.f32 %v451, %v961
  %v1275 = vmax.f32 %v453, %v963
  %v1276 = vmax.f32 %v461, %v965
  %v1277 = vmax.f32 %v469, %v967
  %v1278 = vmax.f32 %v468, %v969
  %v1279 = vmax.f32 %v470, %v971
  %v1280 = vmax.f32 %v478, %v973
  %v1281 = vmax.f32 %v486, %v975
  %v1282 = vmax.f32 %v485, %v977
  %v1283 = vmax.f32 %v487, %v979
  %v1284 = vmax.f32 %v495, %v981
  %v1285 = vmax.f32 %v503, %v983
  %v1286 = vmax.f32 %v502, %v985
  %v1287 = vmax.f32 %v504, %v987
  %v1288 = vmax.f32 %v512, %v989
  %v1289 = vmax.f32 %v520, %v991
  %v1290 = vmax.f32 %v519, %v993
  %v1291 = vmax.f32 %v521, %v995
  %v1292 = vmax.f32 %v529, %v997
  %v1293 = vmax.f32 %v537, %v999
  %v1294 = vmax.f32 %v536, %v1001
  %v1295 = vmax.f32 %v538, %v1003
  %v1296 = vmax.f32 %v546, %v1005
  %v1297 = vmax.f32 %v554, %v1007
  %v1298 = vmax.f32 %v553, %v1009
  %v1299 = vmax.f32 %v555, %v1011
  %v1300 = vmax.f32 %v563, %v1013
  %v1301 = vmax.f32 %v571, %v1015
  %v1302 = vmax.f32 %v570, %v1017
  %v1303 = vmax.f32 %v572, %v1019
  %v1304 = vmax.f32 %v580, %v1021
  %v1305 = vmax.f32 %v588, %v1023
  %v1306 = vmax.f32 %v587, %v1025
  %v1307 = vmax.f32 %v589, %v1027
  %v1308 = vmax.f32 %v597, %v1029
  %v1309 = vmax.f32 %v605, %v1031
  %v1310 = vmax.f32 %v604, %v1033
  %v1311 = vmax.f32 %v606, %v1035
  %v1312 = vmax.f32 %v614, %v1037
  %v1313 = vmax.f32 %v622, %v1039
  %v1314 = vmax.f32 %v621, %v1041
  %v1315 = vmax.f32 %v623, %v1043
  %v1316 = vmax.f32 %v631, %v1045
  %v1317 = vmax.f32 %v639, %v1047
  %v1318 = vmax.f32 %v638, %v1049
  %v1319 = vmax.f32 %v640, %v1051
  %v1320 = vmax.f32 %v648, %v1053
  %v1321 = vmax.f32 %v656, %v1055
  %v1322 = vmax.f32 %v655, %v1057
  %v1323 = vmax.f32 %v657, %v1059
  %v1324 = vmax.f32 %v665, %v1061
  %v1325 = vmax.f32 %v673, %v1063
  %v1326 = vmax.f32 %v672, %v1065
  %v1327 = vmax.f32 %v674, %v1067
  %v1328 = vmax.f32 %v682, %v1069
  %v1329 = vmax.f32 %v690, %v1071
  %v1330 = vmax.f32 %v689, %v1073
  %v1331 = vmax.f32 %v691, %v1075
  %vm1332 = vcmask 31744
  %1333 = vst.msk [vmem:[#allocation2] sm:$0xff] %vm1332, 0.0
  %vm1334 = vcmask 25600
  %1335 = vst.msk [vmem:[#allocation2 + $0x8] sm:$0x3] %vm1334, 0.0
  %1336 = vst.msk [vmem:[#allocation2 + $0x10] sm:$0xff] %vm1332, 0.0
  %1337 = vst.msk [vmem:[#allocation2 + $0x18] sm:$0x3] %vm1334, 0.0
  %1338 = vst.msk [vmem:[#allocation2 + $0x20] sm:$0xff] %vm1332, 0.0
  %1339 = vst.msk [vmem:[#allocation2 + $0x28] sm:$0x3] %vm1334, 0.0
  %1340 = vst.msk [vmem:[#allocation2 + $0x30] sm:$0xff] %vm1332, 0.0
  %1341 = vst.msk [vmem:[#allocation2 + $0x38] sm:$0x3] %vm1334, 0.0
  %1342 = vst.msk [vmem:[#allocation2 + $0x40] sm:$0xff] %vm1332, 0.0
  %1343 = vst.msk [vmem:[#allocation2 + $0x48] sm:$0x3] %vm1334, 0.0
  %1344 = vst.msk [vmem:[#allocation2 + $0x50] sm:$0xff] %vm1332, 0.0
  %1345 = vst.msk [vmem:[#allocation2 + $0x58] sm:$0x3] %vm1334, 0.0
  %1346 = vst.msk [vmem:[#allocation2 + $0x60] sm:$0xff] %vm1332, 0.0
  %1347 = vst.msk [vmem:[#allocation2 + $0x68] sm:$0x3] %vm1334, 0.0
  %1348 = vst.msk [vmem:[#allocation2 + $0x70] sm:$0xff] %vm1332, 0.0
  %1349 = vst.msk [vmem:[#allocation2 + $0x78] sm:$0x3] %vm1334, 0.0
  %1350 = vst.msk [vmem:[#allocation2 + $0x80] sm:$0xff] %vm1332, 0.0
  %1351 = vst.msk [vmem:[#allocation2 + $0x88] sm:$0x3] %vm1334, 0.0
  %1352 = vst.msk [vmem:[#allocation2 + $0x90] sm:$0xff] %vm1332, 0.0
  %1353 = vst.msk [vmem:[#allocation2 + $0x98] sm:$0x3] %vm1334, 0.0
  %1354 = vst.msk [vmem:[#allocation2 + $0xa0] sm:$0xff] %vm1332, 0.0
  %1355 = vst.msk [vmem:[#allocation2 + $0xa8] sm:$0x3] %vm1334, 0.0
  %1356 = vst.msk [vmem:[#allocation2 + $0xb0] sm:$0xff] %vm1332, 0.0
  %1357 = vst.msk [vmem:[#allocation2 + $0xb8] sm:$0x3] %vm1334, 0.0
  %1358 = vst.msk [vmem:[#allocation2 + $0xc0] sm:$0xff] %vm1332, 0.0
  %1359 = vst.msk [vmem:[#allocation2 + $0xc8] sm:$0x3] %vm1334, 0.0
  %1360 = vst.msk [vmem:[#allocation2 + $0xd0] sm:$0xff] %vm1332, 0.0
  %1361 = vst.msk [vmem:[#allocation2 + $0xd8] sm:$0x3] %vm1334, 0.0
  %1362 = vst.msk [vmem:[#allocation2 + $0xe0] sm:$0xff] %vm1332, 0.0
  %1363 = vst.msk [vmem:[#allocation2 + $0xe8] sm:$0x3] %vm1334, 0.0
  %1364 = vst.msk [vmem:[#allocation2 + $0xf0] sm:$0xff] %vm1332, 0.0
  %1365 = vst.msk [vmem:[#allocation2 + $0xf8] sm:$0x3] %vm1334, 0.0
  %1366 = vst.msk [vmem:[#allocation2 + $0x100] sm:$0xff] %vm1332, 0.0
  %1367 = vst.msk [vmem:[#allocation2 + $0x108] sm:$0x3] %vm1334, 0.0
  %1368 = vst.msk [vmem:[#allocation2 + $0x110] sm:$0xff] %vm1332, 0.0
  %1369 = vst.msk [vmem:[#allocation2 + $0x118] sm:$0x3] %vm1334, 0.0
  %1370 = vst.msk [vmem:[#allocation2 + $0x120] sm:$0xff] %vm1332, 0.0
  %1371 = vst.msk [vmem:[#allocation2 + $0x128] sm:$0x3] %vm1334, 0.0
  %1372 = vst.msk [vmem:[#allocation2 + $0x130] sm:$0xff] %vm1332, 0.0
  %1373 = vst.msk [vmem:[#allocation2 + $0x138] sm:$0x3] %vm1334, 0.0
  %v1502 = vlaneseq
  %v1503 = vshrl.u32 %v1502, 7
  %v1504 = vsub.s32 0, %v1503
  %v1505 = vrot.slane %v1204, %v1504
  %v1506 = vlaneseq
  %v1507 = vshrl.u32 %v1506, 7
  %v1508 = vsub.s32 0, %v1507
  %v1509 = vrot.slane %v1205, %v1508
  %v1510 = vlaneseq
  %v1511 = vshrl.u32 %v1510, 7
  %v1512 = vsub.s32 0, %v1511
  %v1513 = vrot.slane %v1206, %v1512
  %v1514 = vlaneseq
  %v1515 = vshrl.u32 %v1514, 7
  %v1516 = vsub.s32 0, %v1515
  %v1517 = vrot.slane %v1207, %v1516
  %v1518 = vlaneseq
  %v1519 = vshrl.u32 %v1518, 7
  %v1520 = vsub.s32 0, %v1519
  %v1521 = vrot.slane %v1208, %v1520
  %v1522 = vlaneseq
  %v1523 = vshrl.u32 %v1522, 7
  %v1524 = vsub.s32 0, %v1523
  %v1525 = vrot.slane %v1209, %v1524
  %v1526 = vlaneseq
  %v1527 = vshrl.u32 %v1526, 7
  %v1528 = vsub.s32 0, %v1527
  %v1529 = vrot.slane %v1210, %v1528
  %v1530 = vlaneseq
  %v1531 = vshrl.u32 %v1530, 7
  %v1532 = vsub.s32 0, %v1531
  %v1533 = vrot.slane %v1211, %v1532
  %v1534 = vlaneseq
  %v1535 = vshrl.u32 %v1534, 7
  %v1536 = vsub.s32 0, %v1535
  %v1537 = vrot.slane %v1212, %v1536
  %v1538 = vlaneseq
  %v1539 = vshrl.u32 %v1538, 7
  %v1540 = vsub.s32 0, %v1539
  %v1541 = vrot.slane %v1213, %v1540
  %v1542 = vlaneseq
  %v1543 = vshrl.u32 %v1542, 7
  %v1544 = vsub.s32 0, %v1543
  %v1545 = vrot.slane %v1214, %v1544
  %v1546 = vlaneseq
  %v1547 = vshrl.u32 %v1546, 7
  %v1548 = vsub.s32 0, %v1547
  %v1549 = vrot.slane %v1215, %v1548
  %v1550 = vlaneseq
  %v1551 = vshrl.u32 %v1550, 7
  %v1552 = vsub.s32 0, %v1551
  %v1553 = vrot.slane %v1216, %v1552
  %v1554 = vlaneseq
  %v1555 = vshrl.u32 %v1554, 7
  %v1556 = vsub.s32 0, %v1555
  %v1557 = vrot.slane %v1217, %v1556
  %v1558 = vlaneseq
  %v1559 = vshrl.u32 %v1558, 7
  %v1560 = vsub.s32 0, %v1559
  %v1561 = vrot.slane %v1218, %v1560
  %v1562 = vlaneseq
  %v1563 = vshrl.u32 %v1562, 7
  %v1564 = vsub.s32 0, %v1563
  %v1565 = vrot.slane %v1219, %v1564
  %v1566 = vlaneseq
  %v1567 = vshrl.u32 %v1566, 7
  %v1568 = vsub.s32 0, %v1567
  %v1569 = vrot.slane %v1220, %v1568
  %v1570 = vlaneseq
  %v1571 = vshrl.u32 %v1570, 7
  %v1572 = vsub.s32 0, %v1571
  %v1573 = vrot.slane %v1221, %v1572
  %v1574 = vlaneseq
  %v1575 = vshrl.u32 %v1574, 7
  %v1576 = vsub.s32 0, %v1575
  %v1577 = vrot.slane %v1222, %v1576
  %v1578 = vlaneseq
  %v1579 = vshrl.u32 %v1578, 7
  %v1580 = vsub.s32 0, %v1579
  %v1581 = vrot.slane %v1223, %v1580
  %v1582 = vlaneseq
  %v1583 = vshrl.u32 %v1582, 7
  %v1584 = vsub.s32 0, %v1583
  %v1585 = vrot.slane %v1224, %v1584
  %v1586 = vlaneseq
  %v1587 = vshrl.u32 %v1586, 7
  %v1588 = vsub.s32 0, %v1587
  %v1589 = vrot.slane %v1225, %v1588
  %v1590 = vlaneseq
  %v1591 = vshrl.u32 %v1590, 7
  %v1592 = vsub.s32 0, %v1591
  %v1593 = vrot.slane %v1226, %v1592
  %v1594 = vlaneseq
  %v1595 = vshrl.u32 %v1594, 7
  %v1596 = vsub.s32 0, %v1595
  %v1597 = vrot.slane %v1227, %v1596
  %v1598 = vlaneseq
  %v1599 = vshrl.u32 %v1598, 7
  %v1600 = vsub.s32 0, %v1599
  %v1601 = vrot.slane %v1228, %v1600
  %v1602 = vlaneseq
  %v1603 = vshrl.u32 %v1602, 7
  %v1604 = vsub.s32 0, %v1603
  %v1605 = vrot.slane %v1229, %v1604
  %v1606 = vlaneseq
  %v1607 = vshrl.u32 %v1606, 7
  %v1608 = vsub.s32 0, %v1607
  %v1609 = vrot.slane %v1230, %v1608
  %v1610 = vlaneseq
  %v1611 = vshrl.u32 %v1610, 7
  %v1612 = vsub.s32 0, %v1611
  %v1613 = vrot.slane %v1231, %v1612
  %v1614 = vlaneseq
  %v1615 = vshrl.u32 %v1614, 7
  %v1616 = vsub.s32 0, %v1615
  %v1617 = vrot.slane %v1232, %v1616
  %v1618 = vlaneseq
  %v1619 = vshrl.u32 %v1618, 7
  %v1620 = vsub.s32 0, %v1619
  %v1621 = vrot.slane %v1233, %v1620
  %v1622 = vlaneseq
  %v1623 = vshrl.u32 %v1622, 7
  %v1624 = vsub.s32 0, %v1623
  %v1625 = vrot.slane %v1234, %v1624
  %v1626 = vlaneseq
  %v1627 = vshrl.u32 %v1626, 7
  %v1628 = vsub.s32 0, %v1627
  %v1629 = vrot.slane %v1235, %v1628
  %v1630 = vlaneseq
  %v1631 = vshrl.u32 %v1630, 7
  %v1632 = vsub.s32 0, %v1631
  %v1633 = vrot.slane %v1236, %v1632
  %v1634 = vlaneseq
  %v1635 = vshrl.u32 %v1634, 7
  %v1636 = vsub.s32 0, %v1635
  %v1637 = vrot.slane %v1237, %v1636
  %v1638 = vlaneseq
  %v1639 = vshrl.u32 %v1638, 7
  %v1640 = vsub.s32 0, %v1639
  %v1641 = vrot.slane %v1238, %v1640
  %v1642 = vlaneseq
  %v1643 = vshrl.u32 %v1642, 7
  %v1644 = vsub.s32 0, %v1643
  %v1645 = vrot.slane %v1239, %v1644
  %v1646 = vlaneseq
  %v1647 = vshrl.u32 %v1646, 7
  %v1648 = vsub.s32 0, %v1647
  %v1649 = vrot.slane %v1240, %v1648
  %v1650 = vlaneseq
  %v1651 = vshrl.u32 %v1650, 7
  %v1652 = vsub.s32 0, %v1651
  %v1653 = vrot.slane %v1241, %v1652
  %v1654 = vlaneseq
  %v1655 = vshrl.u32 %v1654, 7
  %v1656 = vsub.s32 0, %v1655
  %v1657 = vrot.slane %v1242, %v1656
  %v1658 = vlaneseq
  %v1659 = vshrl.u32 %v1658, 7
  %v1660 = vsub.s32 0, %v1659
  %v1661 = vrot.slane %v1243, %v1660
  %v1662 = vlaneseq
  %v1663 = vshrl.u32 %v1662, 7
  %v1664 = vsub.s32 0, %v1663
  %v1665 = vrot.slane %v1244, %v1664
  %v1666 = vlaneseq
  %v1667 = vshrl.u32 %v1666, 7
  %v1668 = vsub.s32 0, %v1667
  %v1669 = vrot.slane %v1245, %v1668
  %v1670 = vlaneseq
  %v1671 = vshrl.u32 %v1670, 7
  %v1672 = vsub.s32 0, %v1671
  %v1673 = vrot.slane %v1246, %v1672
  %v1674 = vlaneseq
  %v1675 = vshrl.u32 %v1674, 7
  %v1676 = vsub.s32 0, %v1675
  %v1677 = vrot.slane %v1247, %v1676
  %v1678 = vlaneseq
  %v1679 = vshrl.u32 %v1678, 7
  %v1680 = vsub.s32 0, %v1679
  %v1681 = vrot.slane %v1248, %v1680
  %v1682 = vlaneseq
  %v1683 = vshrl.u32 %v1682, 7
  %v1684 = vsub.s32 0, %v1683
  %v1685 = vrot.slane %v1249, %v1684
  %v1686 = vlaneseq
  %v1687 = vshrl.u32 %v1686, 7
  %v1688 = vsub.s32 0, %v1687
  %v1689 = vrot.slane %v1250, %v1688
  %v1690 = vlaneseq
  %v1691 = vshrl.u32 %v1690, 7
  %v1692 = vsub.s32 0, %v1691
  %v1693 = vrot.slane %v1251, %v1692
  %v1694 = vlaneseq
  %v1695 = vshrl.u32 %v1694, 7
  %v1696 = vsub.s32 0, %v1695
  %v1697 = vrot.slane %v1252, %v1696
  %v1698 = vlaneseq
  %v1699 = vshrl.u32 %v1698, 7
  %v1700 = vsub.s32 0, %v1699
  %v1701 = vrot.slane %v1253, %v1700
  %v1702 = vlaneseq
  %v1703 = vshrl.u32 %v1702, 7
  %v1704 = vsub.s32 0, %v1703
  %v1705 = vrot.slane %v1254, %v1704
  %v1706 = vlaneseq
  %v1707 = vshrl.u32 %v1706, 7
  %v1708 = vsub.s32 0, %v1707
  %v1709 = vrot.slane %v1255, %v1708
  %v1710 = vlaneseq
  %v1711 = vshrl.u32 %v1710, 7
  %v1712 = vsub.s32 0, %v1711
  %v1713 = vrot.slane %v1256, %v1712
  %v1714 = vlaneseq
  %v1715 = vshrl.u32 %v1714, 7
  %v1716 = vsub.s32 0, %v1715
  %v1717 = vrot.slane %v1257, %v1716
  %v1718 = vlaneseq
  %v1719 = vshrl.u32 %v1718, 7
  %v1720 = vsub.s32 0, %v1719
  %v1721 = vrot.slane %v1258, %v1720
  %v1722 = vlaneseq
  %v1723 = vshrl.u32 %v1722, 7
  %v1724 = vsub.s32 0, %v1723
  %v1725 = vrot.slane %v1259, %v1724
  %v1726 = vlaneseq
  %v1727 = vshrl.u32 %v1726, 7
  %v1728 = vsub.s32 0, %v1727
  %v1729 = vrot.slane %v1260, %v1728
  %v1730 = vlaneseq
  %v1731 = vshrl.u32 %v1730, 7
  %v1732 = vsub.s32 0, %v1731
  %v1733 = vrot.slane %v1261, %v1732
  %v1734 = vlaneseq
  %v1735 = vshrl.u32 %v1734, 7
  %v1736 = vsub.s32 0, %v1735
  %v1737 = vrot.slane %v1262, %v1736
  %v1738 = vlaneseq
  %v1739 = vshrl.u32 %v1738, 7
  %v1740 = vsub.s32 0, %v1739
  %v1741 = vrot.slane %v1263, %v1740
  %v1742 = vlaneseq
  %v1743 = vshrl.u32 %v1742, 7
  %v1744 = vsub.s32 0, %v1743
  %v1745 = vrot.slane %v1264, %v1744
  %v1746 = vlaneseq
  %v1747 = vshrl.u32 %v1746, 7
  %v1748 = vsub.s32 0, %v1747
  %v1749 = vrot.slane %v1265, %v1748
  %v1750 = vlaneseq
  %v1751 = vshrl.u32 %v1750, 7
  %v1752 = vsub.s32 0, %v1751
  %v1753 = vrot.slane %v1266, %v1752
  %v1754 = vlaneseq
  %v1755 = vshrl.u32 %v1754, 7
  %v1756 = vsub.s32 0, %v1755
  %v1757 = vrot.slane %v1267, %v1756
  %v1758 = vlaneseq
  %v1759 = vshrl.u32 %v1758, 7
  %v1760 = vsub.s32 0, %v1759
  %v1761 = vrot.slane %v1268, %v1760
  %v1762 = vlaneseq
  %v1763 = vshrl.u32 %v1762, 7
  %v1764 = vsub.s32 0, %v1763
  %v1765 = vrot.slane %v1269, %v1764
  %v1766 = vlaneseq
  %v1767 = vshrl.u32 %v1766, 7
  %v1768 = vsub.s32 0, %v1767
  %v1769 = vrot.slane %v1270, %v1768
  %v1770 = vlaneseq
  %v1771 = vshrl.u32 %v1770, 7
  %v1772 = vsub.s32 0, %v1771
  %v1773 = vrot.slane %v1271, %v1772
  %v1774 = vlaneseq
  %v1775 = vshrl.u32 %v1774, 7
  %v1776 = vsub.s32 0, %v1775
  %v1777 = vrot.slane %v1272, %v1776
  %v1778 = vlaneseq
  %v1779 = vshrl.u32 %v1778, 7
  %v1780 = vsub.s32 0, %v1779
  %v1781 = vrot.slane %v1273, %v1780
  %v1782 = vlaneseq
  %v1783 = vshrl.u32 %v1782, 7
  %v1784 = vsub.s32 0, %v1783
  %v1785 = vrot.slane %v1274, %v1784
  %v1786 = vlaneseq
  %v1787 = vshrl.u32 %v1786, 7
  %v1788 = vsub.s32 0, %v1787
  %v1789 = vrot.slane %v1275, %v1788
  %v1790 = vlaneseq
  %v1791 = vshrl.u32 %v1790, 7
  %v1792 = vsub.s32 0, %v1791
  %v1793 = vrot.slane %v1276, %v1792
  %v1794 = vlaneseq
  %v1795 = vshrl.u32 %v1794, 7
  %v1796 = vsub.s32 0, %v1795
  %v1797 = vrot.slane %v1277, %v1796
  %v1798 = vlaneseq
  %v1799 = vshrl.u32 %v1798, 7
  %v1800 = vsub.s32 0, %v1799
  %v1801 = vrot.slane %v1278, %v1800
  %v1802 = vlaneseq
  %v1803 = vshrl.u32 %v1802, 7
  %v1804 = vsub.s32 0, %v1803
  %v1805 = vrot.slane %v1279, %v1804
  %v1806 = vlaneseq
  %v1807 = vshrl.u32 %v1806, 7
  %v1808 = vsub.s32 0, %v1807
  %v1809 = vrot.slane %v1280, %v1808
  %v1810 = vlaneseq
  %v1811 = vshrl.u32 %v1810, 7
  %v1812 = vsub.s32 0, %v1811
  %v1813 = vrot.slane %v1281, %v1812
  %v1814 = vlaneseq
  %v1815 = vshrl.u32 %v1814, 7
  %v1816 = vsub.s32 0, %v1815
  %v1817 = vrot.slane %v1282, %v1816
  %v1818 = vlaneseq
  %v1819 = vshrl.u32 %v1818, 7
  %v1820 = vsub.s32 0, %v1819
  %v1821 = vrot.slane %v1283, %v1820
  %v1822 = vlaneseq
  %v1823 = vshrl.u32 %v1822, 7
  %v1824 = vsub.s32 0, %v1823
  %v1825 = vrot.slane %v1284, %v1824
  %v1826 = vlaneseq
  %v1827 = vshrl.u32 %v1826, 7
  %v1828 = vsub.s32 0, %v1827
  %v1829 = vrot.slane %v1285, %v1828
  %v1830 = vlaneseq
  %v1831 = vshrl.u32 %v1830, 7
  %v1832 = vsub.s32 0, %v1831
  %v1833 = vrot.slane %v1286, %v1832
  %v1834 = vlaneseq
  %v1835 = vshrl.u32 %v1834, 7
  %v1836 = vsub.s32 0, %v1835
  %v1837 = vrot.slane %v1287, %v1836
  %v1838 = vlaneseq
  %v1839 = vshrl.u32 %v1838, 7
  %v1840 = vsub.s32 0, %v1839
  %v1841 = vrot.slane %v1288, %v1840
  %v1842 = vlaneseq
  %v1843 = vshrl.u32 %v1842, 7
  %v1844 = vsub.s32 0, %v1843
  %v1845 = vrot.slane %v1289, %v1844
  %v1846 = vlaneseq
  %v1847 = vshrl.u32 %v1846, 7
  %v1848 = vsub.s32 0, %v1847
  %v1849 = vrot.slane %v1290, %v1848
  %v1850 = vlaneseq
  %v1851 = vshrl.u32 %v1850, 7
  %v1852 = vsub.s32 0, %v1851
  %v1853 = vrot.slane %v1291, %v1852
  %v1854 = vlaneseq
  %v1855 = vshrl.u32 %v1854, 7
  %v1856 = vsub.s32 0, %v1855
  %v1857 = vrot.slane %v1292, %v1856
  %v1858 = vlaneseq
  %v1859 = vshrl.u32 %v1858, 7
  %v1860 = vsub.s32 0, %v1859
  %v1861 = vrot.slane %v1293, %v1860
  %v1862 = vlaneseq
  %v1863 = vshrl.u32 %v1862, 7
  %v1864 = vsub.s32 0, %v1863
  %v1865 = vrot.slane %v1294, %v1864
  %v1866 = vlaneseq
  %v1867 = vshrl.u32 %v1866, 7
  %v1868 = vsub.s32 0, %v1867
  %v1869 = vrot.slane %v1295, %v1868
  %v1870 = vlaneseq
  %v1871 = vshrl.u32 %v1870, 7
  %v1872 = vsub.s32 0, %v1871
  %v1873 = vrot.slane %v1296, %v1872
  %v1874 = vlaneseq
  %v1875 = vshrl.u32 %v1874, 7
  %v1876 = vsub.s32 0, %v1875
  %v1877 = vrot.slane %v1297, %v1876
  %v1878 = vlaneseq
  %v1879 = vshrl.u32 %v1878, 7
  %v1880 = vsub.s32 0, %v1879
  %v1881 = vrot.slane %v1298, %v1880
  %v1882 = vlaneseq
  %v1883 = vshrl.u32 %v1882, 7
  %v1884 = vsub.s32 0, %v1883
  %v1885 = vrot.slane %v1299, %v1884
  %v1886 = vlaneseq
  %v1887 = vshrl.u32 %v1886, 7
  %v1888 = vsub.s32 0, %v1887
  %v1889 = vrot.slane %v1300, %v1888
  %v1890 = vlaneseq
  %v1891 = vshrl.u32 %v1890, 7
  %v1892 = vsub.s32 0, %v1891
  %v1893 = vrot.slane %v1301, %v1892
  %v1894 = vlaneseq
  %v1895 = vshrl.u32 %v1894, 7
  %v1896 = vsub.s32 0, %v1895
  %v1897 = vrot.slane %v1302, %v1896
  %v1898 = vlaneseq
  %v1899 = vshrl.u32 %v1898, 7
  %v1900 = vsub.s32 0, %v1899
  %v1901 = vrot.slane %v1303, %v1900
  %v1902 = vlaneseq
  %v1903 = vshrl.u32 %v1902, 7
  %v1904 = vsub.s32 0, %v1903
  %v1905 = vrot.slane %v1304, %v1904
  %v1906 = vlaneseq
  %v1907 = vshrl.u32 %v1906, 7
  %v1908 = vsub.s32 0, %v1907
  %v1909 = vrot.slane %v1305, %v1908
  %v1910 = vlaneseq
  %v1911 = vshrl.u32 %v1910, 7
  %v1912 = vsub.s32 0, %v1911
  %v1913 = vrot.slane %v1306, %v1912
  %v1914 = vlaneseq
  %v1915 = vshrl.u32 %v1914, 7
  %v1916 = vsub.s32 0, %v1915
  %v1917 = vrot.slane %v1307, %v1916
  %v1918 = vlaneseq
  %v1919 = vshrl.u32 %v1918, 7
  %v1920 = vsub.s32 0, %v1919
  %v1921 = vrot.slane %v1308, %v1920
  %v1922 = vlaneseq
  %v1923 = vshrl.u32 %v1922, 7
  %v1924 = vsub.s32 0, %v1923
  %v1925 = vrot.slane %v1309, %v1924
  %v1926 = vlaneseq
  %v1927 = vshrl.u32 %v1926, 7
  %v1928 = vsub.s32 0, %v1927
  %v1929 = vrot.slane %v1310, %v1928
  %v1930 = vlaneseq
  %v1931 = vshrl.u32 %v1930, 7
  %v1932 = vsub.s32 0, %v1931
  %v1933 = vrot.slane %v1311, %v1932
  %v1934 = vlaneseq
  %v1935 = vshrl.u32 %v1934, 7
  %v1936 = vsub.s32 0, %v1935
  %v1937 = vrot.slane %v1312, %v1936
  %v1938 = vlaneseq
  %v1939 = vshrl.u32 %v1938, 7
  %v1940 = vsub.s32 0, %v1939
  %v1941 = vrot.slane %v1313, %v1940
  %v1942 = vlaneseq
  %v1943 = vshrl.u32 %v1942, 7
  %v1944 = vsub.s32 0, %v1943
  %v1945 = vrot.slane %v1314, %v1944
  %v1946 = vlaneseq
  %v1947 = vshrl.u32 %v1946, 7
  %v1948 = vsub.s32 0, %v1947
  %v1949 = vrot.slane %v1315, %v1948
  %v1950 = vlaneseq
  %v1951 = vshrl.u32 %v1950, 7
  %v1952 = vsub.s32 0, %v1951
  %v1953 = vrot.slane %v1316, %v1952
  %v1954 = vlaneseq
  %v1955 = vshrl.u32 %v1954, 7
  %v1956 = vsub.s32 0, %v1955
  %v1957 = vrot.slane %v1317, %v1956
  %v1958 = vlaneseq
  %v1959 = vshrl.u32 %v1958, 7
  %v1960 = vsub.s32 0, %v1959
  %v1961 = vrot.slane %v1318, %v1960
  %v1962 = vlaneseq
  %v1963 = vshrl.u32 %v1962, 7
  %v1964 = vsub.s32 0, %v1963
  %v1965 = vrot.slane %v1319, %v1964
  %v1966 = vlaneseq
  %v1967 = vshrl.u32 %v1966, 7
  %v1968 = vsub.s32 0, %v1967
  %v1969 = vrot.slane %v1320, %v1968
  %v1970 = vlaneseq
  %v1971 = vshrl.u32 %v1970, 7
  %v1972 = vsub.s32 0, %v1971
  %v1973 = vrot.slane %v1321, %v1972
  %v1974 = vlaneseq
  %v1975 = vshrl.u32 %v1974, 7
  %v1976 = vsub.s32 0, %v1975
  %v1977 = vrot.slane %v1322, %v1976
  %v1978 = vlaneseq
  %v1979 = vshrl.u32 %v1978, 7
  %v1980 = vsub.s32 0, %v1979
  %v1981 = vrot.slane %v1323, %v1980
  %v1982 = vlaneseq
  %v1983 = vshrl.u32 %v1982, 7
  %v1984 = vsub.s32 0, %v1983
  %v1985 = vrot.slane %v1324, %v1984
  %v1986 = vlaneseq
  %v1987 = vshrl.u32 %v1986, 7
  %v1988 = vsub.s32 0, %v1987
  %v1989 = vrot.slane %v1325, %v1988
  %v1990 = vlaneseq
  %v1991 = vshrl.u32 %v1990, 7
  %v1992 = vsub.s32 0, %v1991
  %v1993 = vrot.slane %v1326, %v1992
  %v1994 = vlaneseq
  %v1995 = vshrl.u32 %v1994, 7
  %v1996 = vsub.s32 0, %v1995
  %v1997 = vrot.slane %v1327, %v1996
  %v1998 = vlaneseq
  %v1999 = vshrl.u32 %v1998, 7
  %v2000 = vsub.s32 0, %v1999
  %v2001 = vrot.slane %v1328, %v2000
  %v2002 = vlaneseq
  %v2003 = vshrl.u32 %v2002, 7
  %v2004 = vsub.s32 0, %v2003
  %v2005 = vrot.slane %v1329, %v2004
  %v2006 = vlaneseq
  %v2007 = vshrl.u32 %v2006, 7
  %v2008 = vsub.s32 0, %v2007
  %v2009 = vrot.slane %v1330, %v2008
  %v2010 = vlaneseq
  %v2011 = vshrl.u32 %v2010, 7
  %v2012 = vsub.s32 0, %v2011
  %v2013 = vrot.slane %v1331, %v2012
  %vm2014 = vcmask 1041409
  %v2015 = vsel %vm2014, %v1509, %v1505
  %vm2016 = vcmask 1042434
  %v2017 = vsel %vm2016, %v1513, %v2015
  %vm2018 = vcmask 1043459
  %v2019 = vsel %vm2018, %v1517, %v2017
  %vm2020 = vcmask 1044484
  %v2021 = vsel %vm2020, %v1521, %v2019
  %vm2022 = vcmask 1045509
  %v2023 = vsel %vm2022, %v1525, %v2021
  %vm2024 = vcmask 1046534
  %v2025 = vsel %vm2024, %v1529, %v2023
  %vm2026 = vcmask 1047559
  %v2027 = vsel %vm2026, %v1533, %v2025
  %v2028 = vsel %vm2014, %v1541, %v1537
  %v2029 = vsel %vm2016, %v1545, %v2028
  %v2030 = vsel %vm2018, %v1549, %v2029
  %v2031 = vsel %vm2020, %v1553, %v2030
  %v2032 = vsel %vm2022, %v1557, %v2031
  %v2033 = vsel %vm2024, %v1561, %v2032
  %v2034 = vsel %vm2026, %v1565, %v2033
  %v2035 = vsel %vm2014, %v1573, %v1569
  %v2036 = vsel %vm2016, %v1577, %v2035
  %v2037 = vsel %vm2018, %v1581, %v2036
  %v2038 = vsel %vm2020, %v1585, %v2037
  %v2039 = vsel %vm2022, %v1589, %v2038
  %v2040 = vsel %vm2024, %v1593, %v2039
  %v2041 = vsel %vm2026, %v1597, %v2040
  %v2042 = vsel %vm2014, %v1605, %v1601
  %v2043 = vsel %vm2016, %v1609, %v2042
  %v2044 = vsel %vm2018, %v1613, %v2043
  %v2045 = vsel %vm2020, %v1617, %v2044
  %v2046 = vsel %vm2022, %v1621, %v2045
  %v2047 = vsel %vm2024, %v1625, %v2046
  %v2048 = vsel %vm2026, %v1629, %v2047
  %v2049 = vsel %vm2014, %v1637, %v1633
  %v2050 = vsel %vm2016, %v1641, %v2049
  %v2051 = vsel %vm2018, %v1645, %v2050
  %v2052 = vsel %vm2020, %v1649, %v2051
  %v2053 = vsel %vm2022, %v1653, %v2052
  %v2054 = vsel %vm2024, %v1657, %v2053
  %v2055 = vsel %vm2026, %v1661, %v2054
  %v2056 = vsel %vm2014, %v1669, %v1665
  %v2057 = vsel %vm2016, %v1673, %v2056
  %v2058 = vsel %vm2018, %v1677, %v2057
  %v2059 = vsel %vm2020, %v1681, %v2058
  %v2060 = vsel %vm2022, %v1685, %v2059
  %v2061 = vsel %vm2024, %v1689, %v2060
  %v2062 = vsel %vm2026, %v1693, %v2061
  %v2063 = vsel %vm2014, %v1701, %v1697
  %v2064 = vsel %vm2016, %v1705, %v2063
  %v2065 = vsel %vm2018, %v1709, %v2064
  %v2066 = vsel %vm2020, %v1713, %v2065
  %v2067 = vsel %vm2022, %v1717, %v2066
  %v2068 = vsel %vm2024, %v1721, %v2067
  %v2069 = vsel %vm2026, %v1725, %v2068
  %v2070 = vsel %vm2014, %v1733, %v1729
  %v2071 = vsel %vm2016, %v1737, %v2070
  %v2072 = vsel %vm2018, %v1741, %v2071
  %v2073 = vsel %vm2020, %v1745, %v2072
  %v2074 = vsel %vm2022, %v1749, %v2073
  %v2075 = vsel %vm2024, %v1753, %v2074
  %v2076 = vsel %vm2026, %v1757, %v2075
  %v2077 = vsel %vm2014, %v1765, %v1761
  %v2078 = vsel %vm2016, %v1769, %v2077
  %v2079 = vsel %vm2018, %v1773, %v2078
  %v2080 = vsel %vm2020, %v1777, %v2079
  %v2081 = vsel %vm2022, %v1781, %v2080
  %v2082 = vsel %vm2024, %v1785, %v2081
  %v2083 = vsel %vm2026, %v1789, %v2082
  %v2084 = vsel %vm2014, %v1797, %v1793
  %v2085 = vsel %vm2016, %v1801, %v2084
  %v2086 = vsel %vm2018, %v1805, %v2085
  %v2087 = vsel %vm2020, %v1809, %v2086
  %v2088 = vsel %vm2022, %v1813, %v2087
  %v2089 = vsel %vm2024, %v1817, %v2088
  %v2090 = vsel %vm2026, %v1821, %v2089
  %v2091 = vsel %vm2014, %v1829, %v1825
  %v2092 = vsel %vm2016, %v1833, %v2091
  %v2093 = vsel %vm2018, %v1837, %v2092
  %v2094 = vsel %vm2020, %v1841, %v2093
  %v2095 = vsel %vm2022, %v1845, %v2094
  %v2096 = vsel %vm2024, %v1849, %v2095
  %v2097 = vsel %vm2026, %v1853, %v2096
  %v2098 = vsel %vm2014, %v1861, %v1857
  %v2099 = vsel %vm2016, %v1865, %v2098
  %v2100 = vsel %vm2018, %v1869, %v2099
  %v2101 = vsel %vm2020, %v1873, %v2100
  %v2102 = vsel %vm2022, %v1877, %v2101
  %v2103 = vsel %vm2024, %v1881, %v2102
  %v2104 = vsel %vm2026, %v1885, %v2103
  %v2105 = vsel %vm2014, %v1893, %v1889
  %v2106 = vsel %vm2016, %v1897, %v2105
  %v2107 = vsel %vm2018, %v1901, %v2106
  %v2108 = vsel %vm2020, %v1905, %v2107
  %v2109 = vsel %vm2022, %v1909, %v2108
  %v2110 = vsel %vm2024, %v1913, %v2109
  %v2111 = vsel %vm2026, %v1917, %v2110
  %v2112 = vsel %vm2014, %v1925, %v1921
  %v2113 = vsel %vm2016, %v1929, %v2112
  %v2114 = vsel %vm2018, %v1933, %v2113
  %v2115 = vsel %vm2020, %v1937, %v2114
  %v2116 = vsel %vm2022, %v1941, %v2115
  %v2117 = vsel %vm2024, %v1945, %v2116
  %v2118 = vsel %vm2026, %v1949, %v2117
  %v2119 = vsel %vm2014, %v1957, %v1953
  %v2120 = vsel %vm2016, %v1961, %v2119
  %v2121 = vsel %vm2018, %v1965, %v2120
  %v2122 = vsel %vm2020, %v1969, %v2121
  %v2123 = vsel %vm2022, %v1973, %v2122
  %v2124 = vsel %vm2024, %v1977, %v2123
  %v2125 = vsel %vm2026, %v1981, %v2124
  %v2126 = vsel %vm2014, %v1989, %v1985
  %v2127 = vsel %vm2016, %v1993, %v2126
  %v2128 = vsel %vm2018, %v1997, %v2127
  %v2129 = vsel %vm2020, %v2001, %v2128
  %v2130 = vsel %vm2022, %v2005, %v2129
  %v2131 = vsel %vm2024, %v2009, %v2130
  %v2132 = vsel %vm2026, %v2013, %v2131
  %s2149 = scalar_lea.vmem [#allocation2], 16
  %2150 = vst.msk [vmem:[%s2149 + $0x1] sm:$0xff] %vm1332, %v2027
  %2151 = vst.msk [vmem:[%s2149 + $0x11] sm:$0xff] %vm1332, %v2034
  %2152 = vst.msk [vmem:[%s2149 + $0x21] sm:$0xff] %vm1332, %v2041
  %2153 = vst.msk [vmem:[%s2149 + $0x31] sm:$0xff] %vm1332, %v2048
  %2154 = vst.msk [vmem:[%s2149 + $0x41] sm:$0xff] %vm1332, %v2055
  %2155 = vst.msk [vmem:[%s2149 + $0x51] sm:$0xff] %vm1332, %v2062
  %2156 = vst.msk [vmem:[%s2149 + $0x61] sm:$0xff] %vm1332, %v2069
  %2157 = vst.msk [vmem:[%s2149 + $0x71] sm:$0xff] %vm1332, %v2076
  %2158 = vst.msk [vmem:[%s2149 + $0xa1] sm:$0xff] %vm1332, %v2083
  %2159 = vst.msk [vmem:[%s2149 + $0xb1] sm:$0xff] %vm1332, %v2090
  %2160 = vst.msk [vmem:[%s2149 + $0xc1] sm:$0xff] %vm1332, %v2097
  %2161 = vst.msk [vmem:[%s2149 + $0xd1] sm:$0xff] %vm1332, %v2104
  %2162 = vst.msk [vmem:[%s2149 + $0xe1] sm:$0xff] %vm1332, %v2111
  %2163 = vst.msk [vmem:[%s2149 + $0xf1] sm:$0xff] %vm1332, %v2118
  %2164 = vst.msk [vmem:[%s2149 + $0x101] sm:$0xff] %vm1332, %v2125
  %2165 = vst.msk [vmem:[%s2149 + $0x111] sm:$0xff] %vm1332, %v2132
  %v2166 = vld [vmem:[#allocation2] sm:$0xff]
  %v2167 = vld [vmem:[#allocation2 + $0x10] sm:$0xff]
  %v2168 = vld [vmem:[#allocation2 + $0x20] sm:$0xff]
  %v2169 = vld [vmem:[#allocation2 + $0x30] sm:$0xff]
  %v2170 = vld [vmem:[#allocation2 + $0x40] sm:$0xff]
  %v2171 = vld [vmem:[#allocation2 + $0x50] sm:$0xff]
  %v2172 = vld [vmem:[#allocation2 + $0x60] sm:$0xff]
  %v2173 = vld [vmem:[#allocation2 + $0x70] sm:$0xff]
  %v2174 = vld [vmem:[#allocation2 + $0xa0] sm:$0xff]
  %v2175 = vld [vmem:[#allocation2 + $0xb0] sm:$0xff]
  %v2176 = vld [vmem:[#allocation2 + $0xc0] sm:$0xff]
  %v2177 = vld [vmem:[#allocation2 + $0xd0] sm:$0xff]
  %v2178 = vld [vmem:[#allocation2 + $0xe0] sm:$0xff]
  %v2179 = vld [vmem:[#allocation2 + $0xf0] sm:$0xff]
  %v2180 = vld [vmem:[#allocation2 + $0x100] sm:$0xff]
  %v2181 = vld [vmem:[#allocation2 + $0x110] sm:$0xff]
  %v2182 = vld [vmem:[#allocation2 + $0x1] sm:$0xff]
  %v2183 = vld [vmem:[#allocation2 + $0x11] sm:$0xff]
  %v2184 = vld [vmem:[#allocation2 + $0x21] sm:$0xff]
  %v2185 = vld [vmem:[#allocation2 + $0x31] sm:$0xff]
  %v2186 = vld [vmem:[#allocation2 + $0x41] sm:$0xff]
  %v2187 = vld [vmem:[#allocation2 + $0x51] sm:$0xff]
  %v2188 = vld [vmem:[#allocation2 + $0x61] sm:$0xff]
  %v2189 = vld [vmem:[#allocation2 + $0x71] sm:$0xff]
  %v2190 = vld [vmem:[#allocation2 + $0xa1] sm:$0xff]
  %v2191 = vld [vmem:[#allocation2 + $0xb1] sm:$0xff]
  %v2192 = vld [vmem:[#allocation2 + $0xc1] sm:$0xff]
  %v2193 = vld [vmem:[#allocation2 + $0xd1] sm:$0xff]
  %v2194 = vld [vmem:[#allocation2 + $0xe1] sm:$0xff]
  %v2195 = vld [vmem:[#allocation2 + $0xf1] sm:$0xff]
  %v2196 = vld [vmem:[#allocation2 + $0x101] sm:$0xff]
  %v2197 = vld [vmem:[#allocation2 + $0x111] sm:$0xff]
  %v2198 = vld [vmem:[#allocation2 + $0x2] sm:$0xff]
  %v2199 = vld [vmem:[#allocation2 + $0x12] sm:$0xff]
  %v2200 = vld [vmem:[#allocation2 + $0x22] sm:$0xff]
  %v2201 = vld [vmem:[#allocation2 + $0x32] sm:$0xff]
  %v2202 = vld [vmem:[#allocation2 + $0x42] sm:$0xff]
  %v2203 = vld [vmem:[#allocation2 + $0x52] sm:$0xff]
  %v2204 = vld [vmem:[#allocation2 + $0x62] sm:$0xff]
  %v2205 = vld [vmem:[#allocation2 + $0x72] sm:$0xff]
  %v2206 = vld [vmem:[#allocation2 + $0xa2] sm:$0xff]
  %v2207 = vld [vmem:[#allocation2 + $0xb2] sm:$0xff]
  %v2208 = vld [vmem:[#allocation2 + $0xc2] sm:$0xff]
  %v2209 = vld [vmem:[#allocation2 + $0xd2] sm:$0xff]
  %v2210 = vld [vmem:[#allocation2 + $0xe2] sm:$0xff]
  %v2211 = vld [vmem:[#allocation2 + $0xf2] sm:$0xff]
  %v2212 = vld [vmem:[#allocation2 + $0x102] sm:$0xff]
  %v2213 = vld [vmem:[#allocation2 + $0x112] sm:$0xff]
  %v2214 = vld [vmem:[%s2149] sm:$0xff]
  %v2215 = vld [vmem:[%s2149 + $0x10] sm:$0xff]
  %v2216 = vld [vmem:[%s2149 + $0x20] sm:$0xff]
  %v2217 = vld [vmem:[%s2149 + $0x30] sm:$0xff]
  %v2218 = vld [vmem:[%s2149 + $0x40] sm:$0xff]
  %v2219 = vld [vmem:[%s2149 + $0x50] sm:$0xff]
  %v2220 = vld [vmem:[%s2149 + $0x60] sm:$0xff]
  %v2221 = vld [vmem:[%s2149 + $0x70] sm:$0xff]
  %v2222 = vld [vmem:[%s2149 + $0xa0] sm:$0xff]
  %v2223 = vld [vmem:[%s2149 + $0xb0] sm:$0xff]
  %v2224 = vld [vmem:[%s2149 + $0xc0] sm:$0xff]
  %v2225 = vld [vmem:[%s2149 + $0xd0] sm:$0xff]
  %v2226 = vld [vmem:[%s2149 + $0xe0] sm:$0xff]
  %v2227 = vld [vmem:[%s2149 + $0xf0] sm:$0xff]
  %v2228 = vld [vmem:[%s2149 + $0x100] sm:$0xff]
  %v2229 = vld [vmem:[%s2149 + $0x110] sm:$0xff]
  %v2230 = vld [vmem:[%s2149 + $0x1] sm:$0xff]
  %v2231 = vld [vmem:[%s2149 + $0x11] sm:$0xff]
  %v2232 = vld [vmem:[%s2149 + $0x21] sm:$0xff]
  %v2233 = vld [vmem:[%s2149 + $0x31] sm:$0xff]
  %v2234 = vld [vmem:[%s2149 + $0x41] sm:$0xff]
  %v2235 = vld [vmem:[%s2149 + $0x51] sm:$0xff]
  %v2236 = vld [vmem:[%s2149 + $0x61] sm:$0xff]
  %v2237 = vld [vmem:[%s2149 + $0x71] sm:$0xff]
  %v2238 = vld [vmem:[%s2149 + $0xa1] sm:$0xff]
  %v2239 = vld [vmem:[%s2149 + $0xb1] sm:$0xff]
  %v2240 = vld [vmem:[%s2149 + $0xc1] sm:$0xff]
  %v2241 = vld [vmem:[%s2149 + $0xd1] sm:$0xff]
  %v2242 = vld [vmem:[%s2149 + $0xe1] sm:$0xff]
  %v2243 = vld [vmem:[%s2149 + $0xf1] sm:$0xff]
  %v2244 = vld [vmem:[%s2149 + $0x101] sm:$0xff]
  %v2245 = vld [vmem:[%s2149 + $0x111] sm:$0xff]
  %v2246 = vld [vmem:[%s2149 + $0x2] sm:$0xff]
  %v2247 = vld [vmem:[%s2149 + $0x12] sm:$0xff]
  %v2248 = vld [vmem:[%s2149 + $0x22] sm:$0xff]
  %v2249 = vld [vmem:[%s2149 + $0x32] sm:$0xff]
  %v2250 = vld [vmem:[%s2149 + $0x42] sm:$0xff]
  %v2251 = vld [vmem:[%s2149 + $0x52] sm:$0xff]
  %v2252 = vld [vmem:[%s2149 + $0x62] sm:$0xff]
  %v2253 = vld [vmem:[%s2149 + $0x72] sm:$0xff]
  %v2254 = vld [vmem:[%s2149 + $0xa2] sm:$0xff]
  %v2255 = vld [vmem:[%s2149 + $0xb2] sm:$0xff]
  %v2256 = vld [vmem:[%s2149 + $0xc2] sm:$0xff]
  %v2257 = vld [vmem:[%s2149 + $0xd2] sm:$0xff]
  %v2258 = vld [vmem:[%s2149 + $0xe2] sm:$0xff]
  %v2259 = vld [vmem:[%s2149 + $0xf2] sm:$0xff]
  %v2260 = vld [vmem:[%s2149 + $0x102] sm:$0xff]
  %v2261 = vld [vmem:[%s2149 + $0x112] sm:$0xff]
  %s2262 = scalar_lea.vmem [#allocation2], 32
  %v2263 = vld [vmem:[%s2262] sm:$0xff]
  %v2264 = vld [vmem:[%s2262 + $0x10] sm:$0xff]
  %v2265 = vld [vmem:[%s2262 + $0x20] sm:$0xff]
  %v2266 = vld [vmem:[%s2262 + $0x30] sm:$0xff]
  %v2267 = vld [vmem:[%s2262 + $0x40] sm:$0xff]
  %v2268 = vld [vmem:[%s2262 + $0x50] sm:$0xff]
  %v2269 = vld [vmem:[%s2262 + $0x60] sm:$0xff]
  %v2270 = vld [vmem:[%s2262 + $0x70] sm:$0xff]
  %v2271 = vld [vmem:[%s2262 + $0xa0] sm:$0xff]
  %v2272 = vld [vmem:[%s2262 + $0xb0] sm:$0xff]
  %v2273 = vld [vmem:[%s2262 + $0xc0] sm:$0xff]
  %v2274 = vld [vmem:[%s2262 + $0xd0] sm:$0xff]
  %v2275 = vld [vmem:[%s2262 + $0xe0] sm:$0xff]
  %v2276 = vld [vmem:[%s2262 + $0xf0] sm:$0xff]
  %v2277 = vld [vmem:[%s2262 + $0x100] sm:$0xff]
  %v2278 = vld [vmem:[%s2262 + $0x110] sm:$0xff]
  %v2279 = vld [vmem:[%s2262 + $0x1] sm:$0xff]
  %v2280 = vld [vmem:[%s2262 + $0x11] sm:$0xff]
  %v2281 = vld [vmem:[%s2262 + $0x21] sm:$0xff]
  %v2282 = vld [vmem:[%s2262 + $0x31] sm:$0xff]
  %v2283 = vld [vmem:[%s2262 + $0x41] sm:$0xff]
  %v2284 = vld [vmem:[%s2262 + $0x51] sm:$0xff]
  %v2285 = vld [vmem:[%s2262 + $0x61] sm:$0xff]
  %v2286 = vld [vmem:[%s2262 + $0x71] sm:$0xff]
  %v2287 = vld [vmem:[%s2262 + $0xa1] sm:$0xff]
  %v2288 = vld [vmem:[%s2262 + $0xb1] sm:$0xff]
  %v2289 = vld [vmem:[%s2262 + $0xc1] sm:$0xff]
  %v2290 = vld [vmem:[%s2262 + $0xd1] sm:$0xff]
  %v2291 = vld [vmem:[%s2262 + $0xe1] sm:$0xff]
  %v2292 = vld [vmem:[%s2262 + $0xf1] sm:$0xff]
  %v2293 = vld [vmem:[%s2262 + $0x101] sm:$0xff]
  %v2294 = vld [vmem:[%s2262 + $0x111] sm:$0xff]
  %v2295 = vld [vmem:[%s2262 + $0x2] sm:$0xff]
  %v2296 = vld [vmem:[%s2262 + $0x12] sm:$0xff]
  %v2297 = vld [vmem:[%s2262 + $0x22] sm:$0xff]
  %v2298 = vld [vmem:[%s2262 + $0x32] sm:$0xff]
  %v2299 = vld [vmem:[%s2262 + $0x42] sm:$0xff]
  %v2300 = vld [vmem:[%s2262 + $0x52] sm:$0xff]
  %v2301 = vld [vmem:[%s2262 + $0x62] sm:$0xff]
  %v2302 = vld [vmem:[%s2262 + $0x72] sm:$0xff]
  %v2303 = vld [vmem:[%s2262 + $0xa2] sm:$0xff]
  %v2304 = vld [vmem:[%s2262 + $0xb2] sm:$0xff]
  %v2305 = vld [vmem:[%s2262 + $0xc2] sm:$0xff]
  %v2306 = vld [vmem:[%s2262 + $0xd2] sm:$0xff]
  %v2307 = vld [vmem:[%s2262 + $0xe2] sm:$0xff]
  %v2308 = vld [vmem:[%s2262 + $0xf2] sm:$0xff]
  %v2309 = vld [vmem:[%s2262 + $0x102] sm:$0xff]
  %v2310 = vld [vmem:[%s2262 + $0x112] sm:$0xff]
  %2327 = vrot.lane.b32.xlu0 %v2182, 4
  %v2328 = vpop.permute.xlu0 %2327
  %2329 = vrot.lane.b32.xlu0 %v2183, 4
  %v2330 = vpop.permute.xlu0 %2329
  %2331 = vrot.lane.b32.xlu0 %v2184, 4
  %v2332 = vpop.permute.xlu0 %2331
  %2333 = vrot.lane.b32.xlu0 %v2185, 4
  %v2334 = vpop.permute.xlu0 %2333
  %2335 = vrot.lane.b32.xlu0 %v2186, 4
  %v2336 = vpop.permute.xlu0 %2335
  %2337 = vrot.lane.b32.xlu0 %v2187, 4
  %v2338 = vpop.permute.xlu0 %2337
  %2339 = vrot.lane.b32.xlu0 %v2188, 4
  %v2340 = vpop.permute.xlu0 %2339
  %2341 = vrot.lane.b32.xlu0 %v2189, 4
  %v2342 = vpop.permute.xlu0 %2341
  %2343 = vrot.lane.b32.xlu0 %v2190, 4
  %v2344 = vpop.permute.xlu0 %2343
  %2345 = vrot.lane.b32.xlu0 %v2191, 4
  %v2346 = vpop.permute.xlu0 %2345
  %2347 = vrot.lane.b32.xlu0 %v2192, 4
  %v2348 = vpop.permute.xlu0 %2347
  %2349 = vrot.lane.b32.xlu0 %v2193, 4
  %v2350 = vpop.permute.xlu0 %2349
  %2351 = vrot.lane.b32.xlu0 %v2194, 4
  %v2352 = vpop.permute.xlu0 %2351
  %2353 = vrot.lane.b32.xlu0 %v2195, 4
  %v2354 = vpop.permute.xlu0 %2353
  %2355 = vrot.lane.b32.xlu0 %v2196, 4
  %v2356 = vpop.permute.xlu0 %2355
  %2357 = vrot.lane.b32.xlu0 %v2197, 4
  %v2358 = vpop.permute.xlu0 %2357
  %2391 = vrot.lane.b32.xlu0 %v2198, 8
  %v2392 = vpop.permute.xlu0 %2391
  %2393 = vrot.lane.b32.xlu0 %v2199, 8
  %v2394 = vpop.permute.xlu0 %2393
  %2395 = vrot.lane.b32.xlu0 %v2200, 8
  %v2396 = vpop.permute.xlu0 %2395
  %2397 = vrot.lane.b32.xlu0 %v2201, 8
  %v2398 = vpop.permute.xlu0 %2397
  %2399 = vrot.lane.b32.xlu0 %v2202, 8
  %v2400 = vpop.permute.xlu0 %2399
  %2401 = vrot.lane.b32.xlu0 %v2203, 8
  %v2402 = vpop.permute.xlu0 %2401
  %2403 = vrot.lane.b32.xlu0 %v2204, 8
  %v2404 = vpop.permute.xlu0 %2403
  %2405 = vrot.lane.b32.xlu0 %v2205, 8
  %v2406 = vpop.permute.xlu0 %2405
  %2407 = vrot.lane.b32.xlu0 %v2206, 8
  %v2408 = vpop.permute.xlu0 %2407
  %2409 = vrot.lane.b32.xlu0 %v2207, 8
  %v2410 = vpop.permute.xlu0 %2409
  %2411 = vrot.lane.b32.xlu0 %v2208, 8
  %v2412 = vpop.permute.xlu0 %2411
  %2413 = vrot.lane.b32.xlu0 %v2209, 8
  %v2414 = vpop.permute.xlu0 %2413
  %2415 = vrot.lane.b32.xlu0 %v2210, 8
  %v2416 = vpop.permute.xlu0 %2415
  %2417 = vrot.lane.b32.xlu0 %v2211, 8
  %v2418 = vpop.permute.xlu0 %2417
  %2419 = vrot.lane.b32.xlu0 %v2212, 8
  %v2420 = vpop.permute.xlu0 %2419
  %2421 = vrot.lane.b32.xlu0 %v2213, 8
  %v2422 = vpop.permute.xlu0 %2421
  %2455 = vrot.lane.b32.xlu0 %v2214, 12
  %v2456 = vpop.permute.xlu0 %2455
  %2457 = vrot.lane.b32.xlu0 %v2215, 12
  %v2458 = vpop.permute.xlu0 %2457
  %2459 = vrot.lane.b32.xlu0 %v2216, 12
  %v2460 = vpop.permute.xlu0 %2459
  %2461 = vrot.lane.b32.xlu0 %v2217, 12
  %v2462 = vpop.permute.xlu0 %2461
  %2463 = vrot.lane.b32.xlu0 %v2218, 12
  %v2464 = vpop.permute.xlu0 %2463
  %2465 = vrot.lane.b32.xlu0 %v2219, 12
  %v2466 = vpop.permute.xlu0 %2465
  %2467 = vrot.lane.b32.xlu0 %v2220, 12
  %v2468 = vpop.permute.xlu0 %2467
  %2469 = vrot.lane.b32.xlu0 %v2221, 12
  %v2470 = vpop.permute.xlu0 %2469
  %2471 = vrot.lane.b32.xlu0 %v2222, 12
  %v2472 = vpop.permute.xlu0 %2471
  %2473 = vrot.lane.b32.xlu0 %v2223, 12
  %v2474 = vpop.permute.xlu0 %2473
  %2475 = vrot.lane.b32.xlu0 %v2224, 12
  %v2476 = vpop.permute.xlu0 %2475
  %2477 = vrot.lane.b32.xlu0 %v2225, 12
  %v2478 = vpop.permute.xlu0 %2477
  %2479 = vrot.lane.b32.xlu0 %v2226, 12
  %v2480 = vpop.permute.xlu0 %2479
  %2481 = vrot.lane.b32.xlu0 %v2227, 12
  %v2482 = vpop.permute.xlu0 %2481
  %2483 = vrot.lane.b32.xlu0 %v2228, 12
  %v2484 = vpop.permute.xlu0 %2483
  %2485 = vrot.lane.b32.xlu0 %v2229, 12
  %v2486 = vpop.permute.xlu0 %2485
  %2519 = vrot.lane.b32.xlu0 %v2230, 16
  %v2520 = vpop.permute.xlu0 %2519
  %2521 = vrot.lane.b32.xlu0 %v2231, 16
  %v2522 = vpop.permute.xlu0 %2521
  %2523 = vrot.lane.b32.xlu0 %v2232, 16
  %v2524 = vpop.permute.xlu0 %2523
  %2525 = vrot.lane.b32.xlu0 %v2233, 16
  %v2526 = vpop.permute.xlu0 %2525
  %2527 = vrot.lane.b32.xlu0 %v2234, 16
  %v2528 = vpop.permute.xlu0 %2527
  %2529 = vrot.lane.b32.xlu0 %v2235, 16
  %v2530 = vpop.permute.xlu0 %2529
  %2531 = vrot.lane.b32.xlu0 %v2236, 16
  %v2532 = vpop.permute.xlu0 %2531
  %2533 = vrot.lane.b32.xlu0 %v2237, 16
  %v2534 = vpop.permute.xlu0 %2533
  %2535 = vrot.lane.b32.xlu0 %v2238, 16
  %v2536 = vpop.permute.xlu0 %2535
  %2537 = vrot.lane.b32.xlu0 %v2239, 16
  %v2538 = vpop.permute.xlu0 %2537
  %2539 = vrot.lane.b32.xlu0 %v2240, 16
  %v2540 = vpop.permute.xlu0 %2539
  %2541 = vrot.lane.b32.xlu0 %v2241, 16
  %v2542 = vpop.permute.xlu0 %2541
  %2543 = vrot.lane.b32.xlu0 %v2242, 16
  %v2544 = vpop.permute.xlu0 %2543
  %2545 = vrot.lane.b32.xlu0 %v2243, 16
  %v2546 = vpop.permute.xlu0 %2545
  %2547 = vrot.lane.b32.xlu0 %v2244, 16
  %v2548 = vpop.permute.xlu0 %2547
  %2549 = vrot.lane.b32.xlu0 %v2245, 16
  %v2550 = vpop.permute.xlu0 %2549
  %2583 = vrot.lane.b32.xlu0 %v2246, 20
  %v2584 = vpop.permute.xlu0 %2583
  %2585 = vrot.lane.b32.xlu0 %v2247, 20
  %v2586 = vpop.permute.xlu0 %2585
  %2587 = vrot.lane.b32.xlu0 %v2248, 20
  %v2588 = vpop.permute.xlu0 %2587
  %2589 = vrot.lane.b32.xlu0 %v2249, 20
  %v2590 = vpop.permute.xlu0 %2589
  %2591 = vrot.lane.b32.xlu0 %v2250, 20
  %v2592 = vpop.permute.xlu0 %2591
  %2593 = vrot.lane.b32.xlu0 %v2251, 20
  %v2594 = vpop.permute.xlu0 %2593
  %2595 = vrot.lane.b32.xlu0 %v2252, 20
  %v2596 = vpop.permute.xlu0 %2595
  %2597 = vrot.lane.b32.xlu0 %v2253, 20
  %v2598 = vpop.permute.xlu0 %2597
  %2599 = vrot.lane.b32.xlu0 %v2254, 20
  %v2600 = vpop.permute.xlu0 %2599
  %2601 = vrot.lane.b32.xlu0 %v2255, 20
  %v2602 = vpop.permute.xlu0 %2601
  %2603 = vrot.lane.b32.xlu0 %v2256, 20
  %v2604 = vpop.permute.xlu0 %2603
  %2605 = vrot.lane.b32.xlu0 %v2257, 20
  %v2606 = vpop.permute.xlu0 %2605
  %2607 = vrot.lane.b32.xlu0 %v2258, 20
  %v2608 = vpop.permute.xlu0 %2607
  %2609 = vrot.lane.b32.xlu0 %v2259, 20
  %v2610 = vpop.permute.xlu0 %2609
  %2611 = vrot.lane.b32.xlu0 %v2260, 20
  %v2612 = vpop.permute.xlu0 %2611
  %2613 = vrot.lane.b32.xlu0 %v2261, 20
  %v2614 = vpop.permute.xlu0 %2613
  %2647 = vrot.lane.b32.xlu0 %v2263, 24
  %v2648 = vpop.permute.xlu0 %2647
  %2649 = vrot.lane.b32.xlu0 %v2264, 24
  %v2650 = vpop.permute.xlu0 %2649
  %2651 = vrot.lane.b32.xlu0 %v2265, 24
  %v2652 = vpop.permute.xlu0 %2651
  %2653 = vrot.lane.b32.xlu0 %v2266, 24
  %v2654 = vpop.permute.xlu0 %2653
  %2655 = vrot.lane.b32.xlu0 %v2267, 24
  %v2656 = vpop.permute.xlu0 %2655
  %2657 = vrot.lane.b32.xlu0 %v2268, 24
  %v2658 = vpop.permute.xlu0 %2657
  %2659 = vrot.lane.b32.xlu0 %v2269, 24
  %v2660 = vpop.permute.xlu0 %2659
  %2661 = vrot.lane.b32.xlu0 %v2270, 24
  %v2662 = vpop.permute.xlu0 %2661
  %2663 = vrot.lane.b32.xlu0 %v2271, 24
  %v2664 = vpop.permute.xlu0 %2663
  %2665 = vrot.lane.b32.xlu0 %v2272, 24
  %v2666 = vpop.permute.xlu0 %2665
  %2667 = vrot.lane.b32.xlu0 %v2273, 24
  %v2668 = vpop.permute.xlu0 %2667
  %2669 = vrot.lane.b32.xlu0 %v2274, 24
  %v2670 = vpop.permute.xlu0 %2669
  %2671 = vrot.lane.b32.xlu0 %v2275, 24
  %v2672 = vpop.permute.xlu0 %2671
  %2673 = vrot.lane.b32.xlu0 %v2276, 24
  %v2674 = vpop.permute.xlu0 %2673
  %2675 = vrot.lane.b32.xlu0 %v2277, 24
  %v2676 = vpop.permute.xlu0 %2675
  %2677 = vrot.lane.b32.xlu0 %v2278, 24
  %v2678 = vpop.permute.xlu0 %2677
  %2711 = vrot.lane.b32.xlu0 %v2279, 28
  %v2712 = vpop.permute.xlu0 %2711
  %2713 = vrot.lane.b32.xlu0 %v2280, 28
  %v2714 = vpop.permute.xlu0 %2713
  %2715 = vrot.lane.b32.xlu0 %v2281, 28
  %v2716 = vpop.permute.xlu0 %2715
  %2717 = vrot.lane.b32.xlu0 %v2282, 28
  %v2718 = vpop.permute.xlu0 %2717
  %2719 = vrot.lane.b32.xlu0 %v2283, 28
  %v2720 = vpop.permute.xlu0 %2719
  %2721 = vrot.lane.b32.xlu0 %v2284, 28
  %v2722 = vpop.permute.xlu0 %2721
  %2723 = vrot.lane.b32.xlu0 %v2285, 28
  %v2724 = vpop.permute.xlu0 %2723
  %2725 = vrot.lane.b32.xlu0 %v2286, 28
  %v2726 = vpop.permute.xlu0 %2725
  %2727 = vrot.lane.b32.xlu0 %v2287, 28
  %v2728 = vpop.permute.xlu0 %2727
  %2729 = vrot.lane.b32.xlu0 %v2288, 28
  %v2730 = vpop.permute.xlu0 %2729
  %2731 = vrot.lane.b32.xlu0 %v2289, 28
  %v2732 = vpop.permute.xlu0 %2731
  %2733 = vrot.lane.b32.xlu0 %v2290, 28
  %v2734 = vpop.permute.xlu0 %2733
  %2735 = vrot.lane.b32.xlu0 %v2291, 28
  %v2736 = vpop.permute.xlu0 %2735
  %2737 = vrot.lane.b32.xlu0 %v2292, 28
  %v2738 = vpop.permute.xlu0 %2737
  %2739 = vrot.lane.b32.xlu0 %v2293, 28
  %v2740 = vpop.permute.xlu0 %2739
  %2741 = vrot.lane.b32.xlu0 %v2294, 28
  %v2742 = vpop.permute.xlu0 %2741
  %2775 = vrot.lane.b32.xlu0 %v2295, 32
  %v2776 = vpop.permute.xlu0 %2775
  %2777 = vrot.lane.b32.xlu0 %v2296, 32
  %v2778 = vpop.permute.xlu0 %2777
  %2779 = vrot.lane.b32.xlu0 %v2297, 32
  %v2780 = vpop.permute.xlu0 %2779
  %2781 = vrot.lane.b32.xlu0 %v2298, 32
  %v2782 = vpop.permute.xlu0 %2781
  %2783 = vrot.lane.b32.xlu0 %v2299, 32
  %v2784 = vpop.permute.xlu0 %2783
  %2785 = vrot.lane.b32.xlu0 %v2300, 32
  %v2786 = vpop.permute.xlu0 %2785
  %2787 = vrot.lane.b32.xlu0 %v2301, 32
  %v2788 = vpop.permute.xlu0 %2787
  %2789 = vrot.lane.b32.xlu0 %v2302, 32
  %v2790 = vpop.permute.xlu0 %2789
  %2791 = vrot.lane.b32.xlu0 %v2303, 32
  %v2792 = vpop.permute.xlu0 %2791
  %2793 = vrot.lane.b32.xlu0 %v2304, 32
  %v2794 = vpop.permute.xlu0 %2793
  %2795 = vrot.lane.b32.xlu0 %v2305, 32
  %v2796 = vpop.permute.xlu0 %2795
  %2797 = vrot.lane.b32.xlu0 %v2306, 32
  %v2798 = vpop.permute.xlu0 %2797
  %2799 = vrot.lane.b32.xlu0 %v2307, 32
  %v2800 = vpop.permute.xlu0 %2799
  %2801 = vrot.lane.b32.xlu0 %v2308, 32
  %v2802 = vpop.permute.xlu0 %2801
  %2803 = vrot.lane.b32.xlu0 %v2309, 32
  %v2804 = vpop.permute.xlu0 %2803
  %2805 = vrot.lane.b32.xlu0 %v2310, 32
  %v2806 = vpop.permute.xlu0 %2805
  %v2823 = vsel %vm1332, %v2166, %v2328
  %v2824 = vsel %vm1332, %v2167, %v2330
  %v2825 = vsel %vm1332, %v2168, %v2332
  %v2826 = vsel %vm1332, %v2169, %v2334
  %v2827 = vsel %vm1332, %v2170, %v2336
  %v2828 = vsel %vm1332, %v2171, %v2338
  %v2829 = vsel %vm1332, %v2172, %v2340
  %v2830 = vsel %vm1332, %v2173, %v2342
  %v2831 = vsel %vm1332, %v2174, %v2344
  %v2832 = vsel %vm1332, %v2175, %v2346
  %v2833 = vsel %vm1332, %v2176, %v2348
  %v2834 = vsel %vm1332, %v2177, %v2350
  %v2835 = vsel %vm1332, %v2178, %v2352
  %v2836 = vsel %vm1332, %v2179, %v2354
  %v2837 = vsel %vm1332, %v2180, %v2356
  %v2838 = vsel %vm1332, %v2181, %v2358
  %vm2839 = vcmask 64512
  %v2840 = vsel %vm2839, %v2823, %v2392
  %v2841 = vsel %vm2839, %v2824, %v2394
  %v2842 = vsel %vm2839, %v2825, %v2396
  %v2843 = vsel %vm2839, %v2826, %v2398
  %v2844 = vsel %vm2839, %v2827, %v2400
  %v2845 = vsel %vm2839, %v2828, %v2402
  %v2846 = vsel %vm2839, %v2829, %v2404
  %v2847 = vsel %vm2839, %v2830, %v2406
  %v2848 = vsel %vm2839, %v2831, %v2408
  %v2849 = vsel %vm2839, %v2832, %v2410
  %v2850 = vsel %vm2839, %v2833, %v2412
  %v2851 = vsel %vm2839, %v2834, %v2414
  %v2852 = vsel %vm2839, %v2835, %v2416
  %v2853 = vsel %vm2839, %v2836, %v2418
  %v2854 = vsel %vm2839, %v2837, %v2420
  %v2855 = vsel %vm2839, %v2838, %v2422
  %vm2856 = vcmask 97280
  %v2857 = vsel %vm2856, %v2840, %v2456
  %v2858 = vsel %vm2856, %v2841, %v2458
  %v2859 = vsel %vm2856, %v2842, %v2460
  %v2860 = vsel %vm2856, %v2843, %v2462
  %v2861 = vsel %vm2856, %v2844, %v2464
  %v2862 = vsel %vm2856, %v2845, %v2466
  %v2863 = vsel %vm2856, %v2846, %v2468
  %v2864 = vsel %vm2856, %v2847, %v2470
  %v2865 = vsel %vm2856, %v2848, %v2472
  %v2866 = vsel %vm2856, %v2849, %v2474
  %v2867 = vsel %vm2856, %v2850, %v2476
  %v2868 = vsel %vm2856, %v2851, %v2478
  %v2869 = vsel %vm2856, %v2852, %v2480
  %v2870 = vsel %vm2856, %v2853, %v2482
  %v2871 = vsel %vm2856, %v2854, %v2484
  %v2872 = vsel %vm2856, %v2855, %v2486
  %vm2873 = vcmask 130048
  %v2874 = vsel %vm2873, %v2857, %v2520
  %v2875 = vsel %vm2873, %v2858, %v2522
  %v2876 = vsel %vm2873, %v2859, %v2524
  %v2877 = vsel %vm2873, %v2860, %v2526
  %v2878 = vsel %vm2873, %v2861, %v2528
  %v2879 = vsel %vm2873, %v2862, %v2530
  %v2880 = vsel %vm2873, %v2863, %v2532
  %v2881 = vsel %vm2873, %v2864, %v2534
  %v2882 = vsel %vm2873, %v2865, %v2536
  %v2883 = vsel %vm2873, %v2866, %v2538
  %v2884 = vsel %vm2873, %v2867, %v2540
  %v2885 = vsel %vm2873, %v2868, %v2542
  %v2886 = vsel %vm2873, %v2869, %v2544
  %v2887 = vsel %vm2873, %v2870, %v2546
  %v2888 = vsel %vm2873, %v2871, %v2548
  %v2889 = vsel %vm2873, %v2872, %v2550
  %vm2890 = vcmask 162816
  %v2891 = vsel %vm2890, %v2874, %v2584
  %v2892 = vsel %vm2890, %v2875, %v2586
  %v2893 = vsel %vm2890, %v2876, %v2588
  %v2894 = vsel %vm2890, %v2877, %v2590
  %v2895 = vsel %vm2890, %v2878, %v2592
  %v2896 = vsel %vm2890, %v2879, %v2594
  %v2897 = vsel %vm2890, %v2880, %v2596
  %v2898 = vsel %vm2890, %v2881, %v2598
  %v2899 = vsel %vm2890, %v2882, %v2600
  %v2900 = vsel %vm2890, %v2883, %v2602
  %v2901 = vsel %vm2890, %v2884, %v2604
  %v2902 = vsel %vm2890, %v2885, %v2606
  %v2903 = vsel %vm2890, %v2886, %v2608
  %v2904 = vsel %vm2890, %v2887, %v2610
  %v2905 = vsel %vm2890, %v2888, %v2612
  %v2906 = vsel %vm2890, %v2889, %v2614
  %vm2907 = vcmask 195584
  %v2908 = vsel %vm2907, %v2891, %v2648
  %v2909 = vsel %vm2907, %v2892, %v2650
  %v2910 = vsel %vm2907, %v2893, %v2652
  %v2911 = vsel %vm2907, %v2894, %v2654
  %v2912 = vsel %vm2907, %v2895, %v2656
  %v2913 = vsel %vm2907, %v2896, %v2658
  %v2914 = vsel %vm2907, %v2897, %v2660
  %v2915 = vsel %vm2907, %v2898, %v2662
  %v2916 = vsel %vm2907, %v2899, %v2664
  %v2917 = vsel %vm2907, %v2900, %v2666
  %v2918 = vsel %vm2907, %v2901, %v2668
  %v2919 = vsel %vm2907, %v2902, %v2670
  %v2920 = vsel %vm2907, %v2903, %v2672
  %v2921 = vsel %vm2907, %v2904, %v2674
  %v2922 = vsel %vm2907, %v2905, %v2676
  %v2923 = vsel %vm2907, %v2906, %v2678
  %vm2924 = vcmask 228352
  %v2925 = vsel %vm2924, %v2908, %v2712
  %v2926 = vsel %vm2924, %v2909, %v2714
  %v2927 = vsel %vm2924, %v2910, %v2716
  %v2928 = vsel %vm2924, %v2911, %v2718
  %v2929 = vsel %vm2924, %v2912, %v2720
  %v2930 = vsel %vm2924, %v2913, %v2722
  %v2931 = vsel %vm2924, %v2914, %v2724
  %v2932 = vsel %vm2924, %v2915, %v2726
  %v2933 = vsel %vm2924, %v2916, %v2728
  %v2934 = vsel %vm2924, %v2917, %v2730
  %v2935 = vsel %vm2924, %v2918, %v2732
  %v2936 = vsel %vm2924, %v2919, %v2734
  %v2937 = vsel %vm2924, %v2920, %v2736
  %v2938 = vsel %vm2924, %v2921, %v2738
  %v2939 = vsel %vm2924, %v2922, %v2740
  %v2940 = vsel %vm2924, %v2923, %v2742
  %vm2941 = vcmask 261120
  %v2942 = vsel %vm2941, %v2925, %v2776
  %v2943 = vsel %vm2941, %v2926, %v2778
  %v2944 = vsel %vm2941, %v2927, %v2780
  %v2945 = vsel %vm2941, %v2928, %v2782
  %v2946 = vsel %vm2941, %v2929, %v2784
  %v2947 = vsel %vm2941, %v2930, %v2786
  %v2948 = vsel %vm2941, %v2931, %v2788
  %v2949 = vsel %vm2941, %v2932, %v2790
  %v2950 = vsel %vm2941, %v2933, %v2792
  %v2951 = vsel %vm2941, %v2934, %v2794
  %v2952 = vsel %vm2941, %v2935, %v2796
  %v2953 = vsel %vm2941, %v2936, %v2798
  %v2954 = vsel %vm2941, %v2937, %v2800
  %v2955 = vsel %vm2941, %v2938, %v2802
  %v2956 = vsel %vm2941, %v2939, %v2804
  %v2957 = vsel %vm2941, %v2940, %v2806
  %v2958 = vld [vmem:[%s1] sm:$0xff]
  %v2959 = vld [vmem:[%s1 + $0x8] sm:$0xff]
  %v2960 = vld [vmem:[%s1 + $0x10] sm:$0xff]
  %v2961 = vld [vmem:[%s1 + $0x18] sm:$0xff]
  %v2962 = vld [vmem:[%s1 + $0x20] sm:$0xf]
  %v2963 = vld [vmem:[%s2] sm:$0x1]
  %v2965 = vlaneseq
  %v2966 = vshrl.u32 %v2965, 7
  %v2967 = vsub.s32 0, %v2966
  %v2968 = vrot.slane %v2963, %v2967
  %vm2970 = vcmask 293888
  %v2972 = vsel %vm2970, %v2942, 0
  %v2975 = vsel %vm2970, %v2943, 0
  %v2978 = vsel %vm2970, %v2944, 0
  %v2981 = vsel %vm2970, %v2945, 0
  %v2984 = vsel %vm2970, %v2946, 0
  %v2987 = vsel %vm2970, %v2947, 0
  %v2990 = vsel %vm2970, %v2948, 0
  %v2993 = vsel %vm2970, %v2949, 0
  %v2996 = vsel %vm2970, %v2950, 0
  %v2999 = vsel %vm2970, %v2951, 0
  %v3002 = vsel %vm2970, %v2952, 0
  %v3005 = vsel %vm2970, %v2953, 0
  %v3008 = vsel %vm2970, %v2954, 0
  %v3011 = vsel %vm2970, %v2955, 0
  %v3014 = vsel %vm2970, %v2956, 0
  %v3017 = vsel %vm2970, %v2957, 0
  %vm3019 = vcmask 1043456
  %v3021 = vsel %vm3019, %v2962, 0
  %3023 = vmatprep.subr.mxu0 0.0
  %3024 = vmatpush1.msra.mxu0 0.0
  %3025 = vmatprep.subr.mxu0 0.0
  %3026 = vmatpush1.msra.mxu0 0.0
  %3027 = vmatprep.subr.mxu0 0.0
  %3028 = vmatpush1.msra.mxu0 0.0
  %3029 = vmatprep.subr.mxu0 0.0
  %3030 = vmatpush1.msra.mxu0 0.0
  %3031 = vmatprep.subr.mxu0 0.0
  %3032 = vmatpush1.msra.mxu0 0.0
  %3033 = vmatprep.subr.mxu0 0.0
  %3034 = vmatpush1.msra.mxu0 0.0
  %3035 = vmatprep.subr.mxu0 0.0
  %3036 = vmatpush1.msra.mxu0 0.0
  %3037 = vmatprep.subr.mxu0 0.0
  %3038 = vmatpush1.msra.mxu0 0.0
  %3039 = vmatprep.subr.mxu0 0.0
  %3040 = vmatpush1.msra.mxu0 0.0
  %3041 = vmatprep.subr.mxu0 0.0
  %3042 = vmatpush1.msra.mxu0 0.0
  %3043 = vmatprep.subr.mxu0 0.0
  %3044 = vmatpush1.msra.mxu0 0.0
  %3045 = vmatprep.subr.mxu0 0.0
  %3046 = vmatpush1.msra.mxu0 %v3021
  %3047 = vmatprep.subr.mxu0 0.0
  %3048 = vmatpush1.msra.mxu0 %v2961
  %3049 = vmatprep.subr.mxu0 0.0
  %3050 = vmatpush1.msra.mxu0 %v2960
  %3051 = vmatprep.subr.mxu0 0.0
  %3052 = vmatpush1.msra.mxu0 %v2959
  %3053 = vmatprep.subr.mxu0 0.0
  %3054 = vmatpush1.msra.mxu0 %v2958
  %3055 = vmatprep.subr.mxu0 0.0
  %3056 = vmatpush2.msra.mxu0 0.0
  %3057 = vmatprep.subr.mxu0 0.0
  %3058 = vmatpush2.msra.mxu0 0.0
  %3059 = vmatprep.subr.mxu0 0.0
  %3060 = vmatpush2.msra.mxu0 0.0
  %3061 = vmatprep.subr.mxu0 0.0
  %3062 = vmatpush2.msra.mxu0 0.0
  %3063 = vmatprep.subr.mxu0 0.0
  %3064 = vmatpush2.msra.mxu0 0.0
  %3065 = vmatprep.subr.mxu0 0.0
  %3066 = vmatpush2.msra.mxu0 0.0
  %3067 = vmatprep.subr.mxu0 0.0
  %3068 = vmatpush2.msra.mxu0 0.0
  %3069 = vmatprep.subr.mxu0 0.0
  %3070 = vmatpush2.msra.mxu0 0.0
  %3071 = vmatprep.subr.mxu0 0.0
  %3072 = vmatpush2.msra.mxu0 0.0
  %3073 = vmatprep.subr.mxu0 0.0
  %3074 = vmatpush2.msra.mxu0 0.0
  %3075 = vmatprep.subr.mxu0 0.0
  %3076 = vmatpush2.msra.mxu0 0.0
  %3077 = vmatprep.subr.mxu0 0.0
  %3078 = vmatpush2.msra.mxu0 0.0
  %3079 = vmatprep.subr.mxu0 0.0
  %3080 = vmatpush2.msra.mxu0 0.0
  %3081 = vmatprep.subr.mxu0 0.0
  %3082 = vmatpush2.msra.mxu0 0.0
  %3083 = vmatprep.subr.mxu0 0.0
  %3084 = vmatpush2.msra.mxu0 0.0
  %3085 = vmatprep.subr.mxu0 0.0
  %3086 = vmatpush2.msra.mxu0 0.0
  %3087 = vmatprep.mubr.f32.mxu0 0.0
  %3088 = vmatmul.mubr.f32.gmra.mxu0 %v2972
  %v3089 = vpop.f32.mrf.mxu0
  %v3090 = vadd.f32 %v2968, %v3089
  %v3091 = vpop.f32.mrf.mxu0
  %3092 = vmatprep.mubr.f32.mxu0 0.0
  %3093 = vmatmul.mubr.f32.gmra.mxu0 %v2975
  %v3094 = vpop.f32.mrf.mxu0
  %v3095 = vadd.f32 %v2968, %v3094
  %v3096 = vpop.f32.mrf.mxu0
  %3097 = vmatprep.mubr.f32.mxu0 0.0
  %3098 = vmatmul.mubr.f32.gmra.mxu0 %v2978
  %v3099 = vpop.f32.mrf.mxu0
  %v3100 = vadd.f32 %v2968, %v3099
  %v3101 = vpop.f32.mrf.mxu0
  %3102 = vmatprep.mubr.f32.mxu0 0.0
  %3103 = vmatmul.mubr.f32.gmra.mxu0 %v2981
  %v3104 = vpop.f32.mrf.mxu0
  %v3105 = vadd.f32 %v2968, %v3104
  %v3106 = vpop.f32.mrf.mxu0
  %3107 = vmatprep.mubr.f32.mxu0 0.0
  %3108 = vmatmul.mubr.f32.gmra.mxu0 %v2984
  %v3109 = vpop.f32.mrf.mxu0
  %v3110 = vadd.f32 %v2968, %v3109
  %v3111 = vpop.f32.mrf.mxu0
  %3112 = vmatprep.mubr.f32.mxu0 0.0
  %3113 = vmatmul.mubr.f32.gmra.mxu0 %v2987
  %v3114 = vpop.f32.mrf.mxu0
  %v3115 = vadd.f32 %v2968, %v3114
  %v3116 = vpop.f32.mrf.mxu0
  %3117 = vmatprep.mubr.f32.mxu0 0.0
  %3118 = vmatmul.mubr.f32.gmra.mxu0 %v2990
  %v3119 = vpop.f32.mrf.mxu0
  %v3120 = vadd.f32 %v2968, %v3119
  %v3121 = vpop.f32.mrf.mxu0
  %3122 = vmatprep.mubr.f32.mxu0 0.0
  %3123 = vmatmul.mubr.f32.gmra.mxu0 %v2993
  %v3124 = vpop.f32.mrf.mxu0
  %v3125 = vadd.f32 %v2968, %v3124
  %v3126 = vpop.f32.mrf.mxu0
  %3127 = vmatprep.mubr.f32.mxu0 0.0
  %3128 = vmatmul.mubr.f32.gmra.mxu0 %v2996
  %v3129 = vpop.f32.mrf.mxu0
  %v3130 = vadd.f32 %v2968, %v3129
  %v3131 = vpop.f32.mrf.mxu0
  %3132 = vmatprep.mubr.f32.mxu0 0.0
  %3133 = vmatmul.mubr.f32.gmra.mxu0 %v2999
  %v3134 = vpop.f32.mrf.mxu0
  %v3135 = vadd.f32 %v2968, %v3134
  %v3136 = vpop.f32.mrf.mxu0
  %3137 = vmatprep.mubr.f32.mxu0 0.0
  %3138 = vmatmul.mubr.f32.gmra.mxu0 %v3002
  %v3139 = vpop.f32.mrf.mxu0
  %v3140 = vadd.f32 %v2968, %v3139
  %v3141 = vpop.f32.mrf.mxu0
  %3142 = vmatprep.mubr.f32.mxu0 0.0
  %3143 = vmatmul.mubr.f32.gmra.mxu0 %v3005
  %v3144 = vpop.f32.mrf.mxu0
  %v3145 = vadd.f32 %v2968, %v3144
  %v3146 = vpop.f32.mrf.mxu0
  %3147 = vmatprep.mubr.f32.mxu0 0.0
  %3148 = vmatmul.mubr.f32.gmra.mxu0 %v3008
  %v3149 = vpop.f32.mrf.mxu0
  %v3150 = vadd.f32 %v2968, %v3149
  %v3151 = vpop.f32.mrf.mxu0
  %3152 = vmatprep.mubr.f32.mxu0 0.0
  %3153 = vmatmul.mubr.f32.gmra.mxu0 %v3011
  %v3154 = vpop.f32.mrf.mxu0
  %v3155 = vadd.f32 %v2968, %v3154
  %v3156 = vpop.f32.mrf.mxu0
  %3157 = vmatprep.mubr.f32.mxu0 0.0
  %3158 = vmatmul.mubr.f32.gmra.mxu0 %v3014
  %v3159 = vpop.f32.mrf.mxu0
  %v3160 = vadd.f32 %v2968, %v3159
  %v3161 = vpop.f32.mrf.mxu0
  %3162 = vmatprep.mubr.f32.mxu0 0.0
  %3163 = vmatmul.mubr.f32.gmra.mxu0 %v3017
  %v3164 = vpop.f32.mrf.mxu0
  %v3165 = vadd.f32 %v2968, %v3164
  %v3166 = vpop.f32.mrf.mxu0
  %3167 = vdwg.mxu0
  %v3168 = vmax.f32 %v3090, 0.0
  %v3169 = vmax.f32 %v3095, 0.0
  %v3170 = vmax.f32 %v3100, 0.0
  %v3171 = vmax.f32 %v3105, 0.0
  %v3172 = vmax.f32 %v3110, 0.0
  %v3173 = vmax.f32 %v3115, 0.0
  %v3174 = vmax.f32 %v3120, 0.0
  %v3175 = vmax.f32 %v3125, 0.0
  %v3176 = vmax.f32 %v3130, 0.0
  %v3177 = vmax.f32 %v3135, 0.0
  %v3178 = vmax.f32 %v3140, 0.0
  %v3179 = vmax.f32 %v3145, 0.0
  %v3180 = vmax.f32 %v3150, 0.0
  %v3181 = vmax.f32 %v3155, 0.0
  %v3182 = vmax.f32 %v3160, 0.0
  %v3183 = vmax.f32 %v3165, 0.0
  %3184 = vst.msk [vmem:[#allocation3] sm:$0xff] %vm2839, 0.0
  %vm3185 = vcmask 58368
  %3186 = vst.msk [vmem:[#allocation3 + $0x8] sm:$0x3] %vm3185, 0.0
  %3187 = vst.msk [vmem:[#allocation3 + $0x10] sm:$0xff] %vm2839, 0.0
  %3188 = vst.msk [vmem:[#allocation3 + $0x18] sm:$0x3] %vm3185, 0.0
  %3189 = vst.msk [vmem:[#allocation3 + $0x20] sm:$0xff] %vm2839, 0.0
  %3190 = vst.msk [vmem:[#allocation3 + $0x28] sm:$0x3] %vm3185, 0.0
  %3191 = vst.msk [vmem:[#allocation3 + $0x30] sm:$0xff] %vm2839, 0.0
  %3192 = vst.msk [vmem:[#allocation3 + $0x38] sm:$0x3] %vm3185, 0.0
  %3193 = vst.msk [vmem:[#allocation3 + $0x40] sm:$0xff] %vm2839, 0.0
  %3194 = vst.msk [vmem:[#allocation3 + $0x48] sm:$0x3] %vm3185, 0.0
  %3195 = vst.msk [vmem:[#allocation3 + $0x50] sm:$0xff] %vm2839, 0.0
  %3196 = vst.msk [vmem:[#allocation3 + $0x58] sm:$0x3] %vm3185, 0.0
  %3197 = vst.msk [vmem:[#allocation3 + $0x60] sm:$0xff] %vm2839, 0.0
  %3198 = vst.msk [vmem:[#allocation3 + $0x68] sm:$0x3] %vm3185, 0.0
  %3199 = vst.msk [vmem:[#allocation3 + $0x70] sm:$0xff] %vm2839, 0.0
  %3200 = vst.msk [vmem:[#allocation3 + $0x78] sm:$0x3] %vm3185, 0.0
  %3201 = vst.msk [vmem:[#allocation3 + $0x80] sm:$0xff] %vm2839, 0.0
  %3202 = vst.msk [vmem:[#allocation3 + $0x88] sm:$0x3] %vm3185, 0.0
  %3203 = vst.msk [vmem:[#allocation3 + $0x90] sm:$0xff] %vm2839, 0.0
  %3204 = vst.msk [vmem:[#allocation3 + $0x98] sm:$0x3] %vm3185, 0.0
  %3205 = vst.msk [vmem:[#allocation3 + $0xa0] sm:$0xff] %vm2839, 0.0
  %3206 = vst.msk [vmem:[#allocation3 + $0xa8] sm:$0x3] %vm3185, 0.0
  %3207 = vst.msk [vmem:[#allocation3 + $0xb0] sm:$0xff] %vm2839, 0.0
  %3208 = vst.msk [vmem:[#allocation3 + $0xb8] sm:$0x3] %vm3185, 0.0
  %3209 = vst.msk [vmem:[#allocation3 + $0xc0] sm:$0xff] %vm2839, 0.0
  %3210 = vst.msk [vmem:[#allocation3 + $0xc8] sm:$0x3] %vm3185, 0.0
  %3211 = vst.msk [vmem:[#allocation3 + $0xd0] sm:$0xff] %vm2839, 0.0
  %3212 = vst.msk [vmem:[#allocation3 + $0xd8] sm:$0x3] %vm3185, 0.0
  %3213 = vst.msk [vmem:[#allocation3 + $0xe0] sm:$0xff] %vm2839, 0.0
  %3214 = vst.msk [vmem:[#allocation3 + $0xe8] sm:$0x3] %vm3185, 0.0
  %3215 = vst.msk [vmem:[#allocation3 + $0xf0] sm:$0xff] %vm2839, 0.0
  %3216 = vst.msk [vmem:[#allocation3 + $0xf8] sm:$0x3] %vm3185, 0.0
  %3217 = vst.msk [vmem:[#allocation3 + $0x100] sm:$0xff] %vm2839, 0.0
  %3218 = vst.msk [vmem:[#allocation3 + $0x108] sm:$0x3] %vm3185, 0.0
  %3219 = vst.msk [vmem:[#allocation3 + $0x110] sm:$0xff] %vm2839, 0.0
  %3220 = vst.msk [vmem:[#allocation3 + $0x118] sm:$0x3] %vm3185, 0.0
  %3221 = vst.msk [vmem:[#allocation3 + $0x120] sm:$0xff] %vm2839, 0.0
  %3222 = vst.msk [vmem:[#allocation3 + $0x128] sm:$0x3] %vm3185, 0.0
  %3223 = vst.msk [vmem:[#allocation3 + $0x130] sm:$0xff] %vm2839, 0.0
  %3224 = vst.msk [vmem:[#allocation3 + $0x138] sm:$0x3] %vm3185, 0.0
  %s3225 = scalar_lea.vmem [#allocation3], 16
  %3226 = vst.msk [vmem:[%s3225 + $0x1] sm:$0xff] %vm2839, %v3168
  %3227 = vst.msk [vmem:[%s3225 + $0x11] sm:$0xff] %vm2839, %v3169
  %3228 = vst.msk [vmem:[%s3225 + $0x21] sm:$0xff] %vm2839, %v3170
  %3229 = vst.msk [vmem:[%s3225 + $0x31] sm:$0xff] %vm2839, %v3171
  %3230 = vst.msk [vmem:[%s3225 + $0x41] sm:$0xff] %vm2839, %v3172
  %3231 = vst.msk [vmem:[%s3225 + $0x51] sm:$0xff] %vm2839, %v3173
  %3232 = vst.msk [vmem:[%s3225 + $0x61] sm:$0xff] %vm2839, %v3174
  %3233 = vst.msk [vmem:[%s3225 + $0x71] sm:$0xff] %vm2839, %v3175
  %3234 = vst.msk [vmem:[%s3225 + $0xa1] sm:$0xff] %vm2839, %v3176
  %3235 = vst.msk [vmem:[%s3225 + $0xb1] sm:$0xff] %vm2839, %v3177
  %3236 = vst.msk [vmem:[%s3225 + $0xc1] sm:$0xff] %vm2839, %v3178
  %3237 = vst.msk [vmem:[%s3225 + $0xd1] sm:$0xff] %vm2839, %v3179
  %3238 = vst.msk [vmem:[%s3225 + $0xe1] sm:$0xff] %vm2839, %v3180
  %3239 = vst.msk [vmem:[%s3225 + $0xf1] sm:$0xff] %vm2839, %v3181
  %3240 = vst.msk [vmem:[%s3225 + $0x101] sm:$0xff] %vm2839, %v3182
  %3241 = vst.msk [vmem:[%s3225 + $0x111] sm:$0xff] %vm2839, %v3183
  %v3242 = vld [vmem:[#allocation3] sm:$0xff]
  %v3243 = vld [vmem:[#allocation3 + $0x10] sm:$0xff]
  %v3244 = vld [vmem:[#allocation3 + $0x20] sm:$0xff]
  %v3245 = vld [vmem:[#allocation3 + $0x30] sm:$0xff]
  %v3246 = vld [vmem:[#allocation3 + $0x40] sm:$0xff]
  %v3247 = vld [vmem:[#allocation3 + $0x50] sm:$0xff]
  %v3248 = vld [vmem:[#allocation3 + $0x60] sm:$0xff]
  %v3249 = vld [vmem:[#allocation3 + $0x70] sm:$0xff]
  %v3250 = vld [vmem:[#allocation3 + $0xa0] sm:$0xff]
  %v3251 = vld [vmem:[#allocation3 + $0xb0] sm:$0xff]
  %v3252 = vld [vmem:[#allocation3 + $0xc0] sm:$0xff]
  %v3253 = vld [vmem:[#allocation3 + $0xd0] sm:$0xff]
  %v3254 = vld [vmem:[#allocation3 + $0xe0] sm:$0xff]
  %v3255 = vld [vmem:[#allocation3 + $0xf0] sm:$0xff]
  %v3256 = vld [vmem:[#allocation3 + $0x100] sm:$0xff]
  %v3257 = vld [vmem:[#allocation3 + $0x110] sm:$0xff]
  %v3258 = vld [vmem:[#allocation3 + $0x1] sm:$0xff]
  %v3259 = vld [vmem:[#allocation3 + $0x11] sm:$0xff]
  %v3260 = vld [vmem:[#allocation3 + $0x21] sm:$0xff]
  %v3261 = vld [vmem:[#allocation3 + $0x31] sm:$0xff]
  %v3262 = vld [vmem:[#allocation3 + $0x41] sm:$0xff]
  %v3263 = vld [vmem:[#allocation3 + $0x51] sm:$0xff]
  %v3264 = vld [vmem:[#allocation3 + $0x61] sm:$0xff]
  %v3265 = vld [vmem:[#allocation3 + $0x71] sm:$0xff]
  %v3266 = vld [vmem:[#allocation3 + $0xa1] sm:$0xff]
  %v3267 = vld [vmem:[#allocation3 + $0xb1] sm:$0xff]
  %v3268 = vld [vmem:[#allocation3 + $0xc1] sm:$0xff]
  %v3269 = vld [vmem:[#allocation3 + $0xd1] sm:$0xff]
  %v3270 = vld [vmem:[#allocation3 + $0xe1] sm:$0xff]
  %v3271 = vld [vmem:[#allocation3 + $0xf1] sm:$0xff]
  %v3272 = vld [vmem:[#allocation3 + $0x101] sm:$0xff]
  %v3273 = vld [vmem:[#allocation3 + $0x111] sm:$0xff]
  %v3274 = vld [vmem:[#allocation3 + $0x2] sm:$0xff]
  %v3275 = vld [vmem:[#allocation3 + $0x12] sm:$0xff]
  %v3276 = vld [vmem:[#allocation3 + $0x22] sm:$0xff]
  %v3277 = vld [vmem:[#allocation3 + $0x32] sm:$0xff]
  %v3278 = vld [vmem:[#allocation3 + $0x42] sm:$0xff]
  %v3279 = vld [vmem:[#allocation3 + $0x52] sm:$0xff]
  %v3280 = vld [vmem:[#allocation3 + $0x62] sm:$0xff]
  %v3281 = vld [vmem:[#allocation3 + $0x72] sm:$0xff]
  %v3282 = vld [vmem:[#allocation3 + $0xa2] sm:$0xff]
  %v3283 = vld [vmem:[#allocation3 + $0xb2] sm:$0xff]
  %v3284 = vld [vmem:[#allocation3 + $0xc2] sm:$0xff]
  %v3285 = vld [vmem:[#allocation3 + $0xd2] sm:$0xff]
  %v3286 = vld [vmem:[#allocation3 + $0xe2] sm:$0xff]
  %v3287 = vld [vmem:[#allocation3 + $0xf2] sm:$0xff]
  %v3288 = vld [vmem:[#allocation3 + $0x102] sm:$0xff]
  %v3289 = vld [vmem:[#allocation3 + $0x112] sm:$0xff]
  %v3290 = vld [vmem:[%s3225] sm:$0xff]
  %v3291 = vld [vmem:[%s3225 + $0x10] sm:$0xff]
  %v3292 = vld [vmem:[%s3225 + $0x20] sm:$0xff]
  %v3293 = vld [vmem:[%s3225 + $0x30] sm:$0xff]
  %v3294 = vld [vmem:[%s3225 + $0x40] sm:$0xff]
  %v3295 = vld [vmem:[%s3225 + $0x50] sm:$0xff]
  %v3296 = vld [vmem:[%s3225 + $0x60] sm:$0xff]
  %v3297 = vld [vmem:[%s3225 + $0x70] sm:$0xff]
  %v3298 = vld [vmem:[%s3225 + $0xa0] sm:$0xff]
  %v3299 = vld [vmem:[%s3225 + $0xb0] sm:$0xff]
  %v3300 = vld [vmem:[%s3225 + $0xc0] sm:$0xff]
  %v3301 = vld [vmem:[%s3225 + $0xd0] sm:$0xff]
  %v3302 = vld [vmem:[%s3225 + $0xe0] sm:$0xff]
  %v3303 = vld [vmem:[%s3225 + $0xf0] sm:$0xff]
  %v3304 = vld [vmem:[%s3225 + $0x100] sm:$0xff]
  %v3305 = vld [vmem:[%s3225 + $0x110] sm:$0xff]
  %v3306 = vld [vmem:[%s3225 + $0x1] sm:$0xff]
  %v3307 = vld [vmem:[%s3225 + $0x11] sm:$0xff]
  %v3308 = vld [vmem:[%s3225 + $0x21] sm:$0xff]
  %v3309 = vld [vmem:[%s3225 + $0x31] sm:$0xff]
  %v3310 = vld [vmem:[%s3225 + $0x41] sm:$0xff]
  %v3311 = vld [vmem:[%s3225 + $0x51] sm:$0xff]
  %v3312 = vld [vmem:[%s3225 + $0x61] sm:$0xff]
  %v3313 = vld [vmem:[%s3225 + $0x71] sm:$0xff]
  %v3314 = vld [vmem:[%s3225 + $0xa1] sm:$0xff]
  %v3315 = vld [vmem:[%s3225 + $0xb1] sm:$0xff]
  %v3316 = vld [vmem:[%s3225 + $0xc1] sm:$0xff]
  %v3317 = vld [vmem:[%s3225 + $0xd1] sm:$0xff]
  %v3318 = vld [vmem:[%s3225 + $0xe1] sm:$0xff]
  %v3319 = vld [vmem:[%s3225 + $0xf1] sm:$0xff]
  %v3320 = vld [vmem:[%s3225 + $0x101] sm:$0xff]
  %v3321 = vld [vmem:[%s3225 + $0x111] sm:$0xff]
  %v3322 = vld [vmem:[%s3225 + $0x2] sm:$0xff]
  %v3323 = vld [vmem:[%s3225 + $0x12] sm:$0xff]
  %v3324 = vld [vmem:[%s3225 + $0x22] sm:$0xff]
  %v3325 = vld [vmem:[%s3225 + $0x32] sm:$0xff]
  %v3326 = vld [vmem:[%s3225 + $0x42] sm:$0xff]
  %v3327 = vld [vmem:[%s3225 + $0x52] sm:$0xff]
  %v3328 = vld [vmem:[%s3225 + $0x62] sm:$0xff]
  %v3329 = vld [vmem:[%s3225 + $0x72] sm:$0xff]
  %v3330 = vld [vmem:[%s3225 + $0xa2] sm:$0xff]
  %v3331 = vld [vmem:[%s3225 + $0xb2] sm:$0xff]
  %v3332 = vld [vmem:[%s3225 + $0xc2] sm:$0xff]
  %v3333 = vld [vmem:[%s3225 + $0xd2] sm:$0xff]
  %v3334 = vld [vmem:[%s3225 + $0xe2] sm:$0xff]
  %v3335 = vld [vmem:[%s3225 + $0xf2] sm:$0xff]
  %v3336 = vld [vmem:[%s3225 + $0x102] sm:$0xff]
  %v3337 = vld [vmem:[%s3225 + $0x112] sm:$0xff]
  %s3338 = scalar_lea.vmem [#allocation3], 32
  %v3339 = vld [vmem:[%s3338] sm:$0xff]
  %v3340 = vld [vmem:[%s3338 + $0x10] sm:$0xff]
  %v3341 = vld [vmem:[%s3338 + $0x20] sm:$0xff]
  %v3342 = vld [vmem:[%s3338 + $0x30] sm:$0xff]
  %v3343 = vld [vmem:[%s3338 + $0x40] sm:$0xff]
  %v3344 = vld [vmem:[%s3338 + $0x50] sm:$0xff]
  %v3345 = vld [vmem:[%s3338 + $0x60] sm:$0xff]
  %v3346 = vld [vmem:[%s3338 + $0x70] sm:$0xff]
  %v3347 = vld [vmem:[%s3338 + $0xa0] sm:$0xff]
  %v3348 = vld [vmem:[%s3338 + $0xb0] sm:$0xff]
  %v3349 = vld [vmem:[%s3338 + $0xc0] sm:$0xff]
  %v3350 = vld [vmem:[%s3338 + $0xd0] sm:$0xff]
  %v3351 = vld [vmem:[%s3338 + $0xe0] sm:$0xff]
  %v3352 = vld [vmem:[%s3338 + $0xf0] sm:$0xff]
  %v3353 = vld [vmem:[%s3338 + $0x100] sm:$0xff]
  %v3354 = vld [vmem:[%s3338 + $0x110] sm:$0xff]
  %v3355 = vld [vmem:[%s3338 + $0x1] sm:$0xff]
  %v3356 = vld [vmem:[%s3338 + $0x11] sm:$0xff]
  %v3357 = vld [vmem:[%s3338 + $0x21] sm:$0xff]
  %v3358 = vld [vmem:[%s3338 + $0x31] sm:$0xff]
  %v3359 = vld [vmem:[%s3338 + $0x41] sm:$0xff]
  %v3360 = vld [vmem:[%s3338 + $0x51] sm:$0xff]
  %v3361 = vld [vmem:[%s3338 + $0x61] sm:$0xff]
  %v3362 = vld [vmem:[%s3338 + $0x71] sm:$0xff]
  %v3363 = vld [vmem:[%s3338 + $0xa1] sm:$0xff]
  %v3364 = vld [vmem:[%s3338 + $0xb1] sm:$0xff]
  %v3365 = vld [vmem:[%s3338 + $0xc1] sm:$0xff]
  %v3366 = vld [vmem:[%s3338 + $0xd1] sm:$0xff]
  %v3367 = vld [vmem:[%s3338 + $0xe1] sm:$0xff]
  %v3368 = vld [vmem:[%s3338 + $0xf1] sm:$0xff]
  %v3369 = vld [vmem:[%s3338 + $0x101] sm:$0xff]
  %v3370 = vld [vmem:[%s3338 + $0x111] sm:$0xff]
  %v3371 = vld [vmem:[%s3338 + $0x2] sm:$0xff]
  %v3372 = vld [vmem:[%s3338 + $0x12] sm:$0xff]
  %v3373 = vld [vmem:[%s3338 + $0x22] sm:$0xff]
  %v3374 = vld [vmem:[%s3338 + $0x32] sm:$0xff]
  %v3375 = vld [vmem:[%s3338 + $0x42] sm:$0xff]
  %v3376 = vld [vmem:[%s3338 + $0x52] sm:$0xff]
  %v3377 = vld [vmem:[%s3338 + $0x62] sm:$0xff]
  %v3378 = vld [vmem:[%s3338 + $0x72] sm:$0xff]
  %v3379 = vld [vmem:[%s3338 + $0xa2] sm:$0xff]
  %v3380 = vld [vmem:[%s3338 + $0xb2] sm:$0xff]
  %v3381 = vld [vmem:[%s3338 + $0xc2] sm:$0xff]
  %v3382 = vld [vmem:[%s3338 + $0xd2] sm:$0xff]
  %v3383 = vld [vmem:[%s3338 + $0xe2] sm:$0xff]
  %v3384 = vld [vmem:[%s3338 + $0xf2] sm:$0xff]
  %v3385 = vld [vmem:[%s3338 + $0x102] sm:$0xff]
  %v3386 = vld [vmem:[%s3338 + $0x112] sm:$0xff]
  %3403 = vrot.lane.b32.xlu0 %v3258, 8
  %v3404 = vpop.permute.xlu0 %3403
  %3405 = vrot.lane.b32.xlu0 %v3259, 8
  %v3406 = vpop.permute.xlu0 %3405
  %3407 = vrot.lane.b32.xlu0 %v3260, 8
  %v3408 = vpop.permute.xlu0 %3407
  %3409 = vrot.lane.b32.xlu0 %v3261, 8
  %v3410 = vpop.permute.xlu0 %3409
  %3411 = vrot.lane.b32.xlu0 %v3262, 8
  %v3412 = vpop.permute.xlu0 %3411
  %3413 = vrot.lane.b32.xlu0 %v3263, 8
  %v3414 = vpop.permute.xlu0 %3413
  %3415 = vrot.lane.b32.xlu0 %v3264, 8
  %v3416 = vpop.permute.xlu0 %3415
  %3417 = vrot.lane.b32.xlu0 %v3265, 8
  %v3418 = vpop.permute.xlu0 %3417
  %3419 = vrot.lane.b32.xlu0 %v3266, 8
  %v3420 = vpop.permute.xlu0 %3419
  %3421 = vrot.lane.b32.xlu0 %v3267, 8
  %v3422 = vpop.permute.xlu0 %3421
  %3423 = vrot.lane.b32.xlu0 %v3268, 8
  %v3424 = vpop.permute.xlu0 %3423
  %3425 = vrot.lane.b32.xlu0 %v3269, 8
  %v3426 = vpop.permute.xlu0 %3425
  %3427 = vrot.lane.b32.xlu0 %v3270, 8
  %v3428 = vpop.permute.xlu0 %3427
  %3429 = vrot.lane.b32.xlu0 %v3271, 8
  %v3430 = vpop.permute.xlu0 %3429
  %3431 = vrot.lane.b32.xlu0 %v3272, 8
  %v3432 = vpop.permute.xlu0 %3431
  %3433 = vrot.lane.b32.xlu0 %v3273, 8
  %v3434 = vpop.permute.xlu0 %3433
  %3467 = vrot.lane.b32.xlu0 %v3274, 16
  %v3468 = vpop.permute.xlu0 %3467
  %3469 = vrot.lane.b32.xlu0 %v3275, 16
  %v3470 = vpop.permute.xlu0 %3469
  %3471 = vrot.lane.b32.xlu0 %v3276, 16
  %v3472 = vpop.permute.xlu0 %3471
  %3473 = vrot.lane.b32.xlu0 %v3277, 16
  %v3474 = vpop.permute.xlu0 %3473
  %3475 = vrot.lane.b32.xlu0 %v3278, 16
  %v3476 = vpop.permute.xlu0 %3475
  %3477 = vrot.lane.b32.xlu0 %v3279, 16
  %v3478 = vpop.permute.xlu0 %3477
  %3479 = vrot.lane.b32.xlu0 %v3280, 16
  %v3480 = vpop.permute.xlu0 %3479
  %3481 = vrot.lane.b32.xlu0 %v3281, 16
  %v3482 = vpop.permute.xlu0 %3481
  %3483 = vrot.lane.b32.xlu0 %v3282, 16
  %v3484 = vpop.permute.xlu0 %3483
  %3485 = vrot.lane.b32.xlu0 %v3283, 16
  %v3486 = vpop.permute.xlu0 %3485
  %3487 = vrot.lane.b32.xlu0 %v3284, 16
  %v3488 = vpop.permute.xlu0 %3487
  %3489 = vrot.lane.b32.xlu0 %v3285, 16
  %v3490 = vpop.permute.xlu0 %3489
  %3491 = vrot.lane.b32.xlu0 %v3286, 16
  %v3492 = vpop.permute.xlu0 %3491
  %3493 = vrot.lane.b32.xlu0 %v3287, 16
  %v3494 = vpop.permute.xlu0 %3493
  %3495 = vrot.lane.b32.xlu0 %v3288, 16
  %v3496 = vpop.permute.xlu0 %3495
  %3497 = vrot.lane.b32.xlu0 %v3289, 16
  %v3498 = vpop.permute.xlu0 %3497
  %3531 = vrot.lane.b32.xlu0 %v3290, 24
  %v3532 = vpop.permute.xlu0 %3531
  %3533 = vrot.lane.b32.xlu0 %v3291, 24
  %v3534 = vpop.permute.xlu0 %3533
  %3535 = vrot.lane.b32.xlu0 %v3292, 24
  %v3536 = vpop.permute.xlu0 %3535
  %3537 = vrot.lane.b32.xlu0 %v3293, 24
  %v3538 = vpop.permute.xlu0 %3537
  %3539 = vrot.lane.b32.xlu0 %v3294, 24
  %v3540 = vpop.permute.xlu0 %3539
  %3541 = vrot.lane.b32.xlu0 %v3295, 24
  %v3542 = vpop.permute.xlu0 %3541
  %3543 = vrot.lane.b32.xlu0 %v3296, 24
  %v3544 = vpop.permute.xlu0 %3543
  %3545 = vrot.lane.b32.xlu0 %v3297, 24
  %v3546 = vpop.permute.xlu0 %3545
  %3547 = vrot.lane.b32.xlu0 %v3298, 24
  %v3548 = vpop.permute.xlu0 %3547
  %3549 = vrot.lane.b32.xlu0 %v3299, 24
  %v3550 = vpop.permute.xlu0 %3549
  %3551 = vrot.lane.b32.xlu0 %v3300, 24
  %v3552 = vpop.permute.xlu0 %3551
  %3553 = vrot.lane.b32.xlu0 %v3301, 24
  %v3554 = vpop.permute.xlu0 %3553
  %3555 = vrot.lane.b32.xlu0 %v3302, 24
  %v3556 = vpop.permute.xlu0 %3555
  %3557 = vrot.lane.b32.xlu0 %v3303, 24
  %v3558 = vpop.permute.xlu0 %3557
  %3559 = vrot.lane.b32.xlu0 %v3304, 24
  %v3560 = vpop.permute.xlu0 %3559
  %3561 = vrot.lane.b32.xlu0 %v3305, 24
  %v3562 = vpop.permute.xlu0 %3561
  %3595 = vrot.lane.b32.xlu0 %v3306, 32
  %v3596 = vpop.permute.xlu0 %3595
  %3597 = vrot.lane.b32.xlu0 %v3307, 32
  %v3598 = vpop.permute.xlu0 %3597
  %3599 = vrot.lane.b32.xlu0 %v3308, 32
  %v3600 = vpop.permute.xlu0 %3599
  %3601 = vrot.lane.b32.xlu0 %v3309, 32
  %v3602 = vpop.permute.xlu0 %3601
  %3603 = vrot.lane.b32.xlu0 %v3310, 32
  %v3604 = vpop.permute.xlu0 %3603
  %3605 = vrot.lane.b32.xlu0 %v3311, 32
  %v3606 = vpop.permute.xlu0 %3605
  %3607 = vrot.lane.b32.xlu0 %v3312, 32
  %v3608 = vpop.permute.xlu0 %3607
  %3609 = vrot.lane.b32.xlu0 %v3313, 32
  %v3610 = vpop.permute.xlu0 %3609
  %3611 = vrot.lane.b32.xlu0 %v3314, 32
  %v3612 = vpop.permute.xlu0 %3611
  %3613 = vrot.lane.b32.xlu0 %v3315, 32
  %v3614 = vpop.permute.xlu0 %3613
  %3615 = vrot.lane.b32.xlu0 %v3316, 32
  %v3616 = vpop.permute.xlu0 %3615
  %3617 = vrot.lane.b32.xlu0 %v3317, 32
  %v3618 = vpop.permute.xlu0 %3617
  %3619 = vrot.lane.b32.xlu0 %v3318, 32
  %v3620 = vpop.permute.xlu0 %3619
  %3621 = vrot.lane.b32.xlu0 %v3319, 32
  %v3622 = vpop.permute.xlu0 %3621
  %3623 = vrot.lane.b32.xlu0 %v3320, 32
  %v3624 = vpop.permute.xlu0 %3623
  %3625 = vrot.lane.b32.xlu0 %v3321, 32
  %v3626 = vpop.permute.xlu0 %3625
  %3659 = vrot.lane.b32.xlu0 %v3322, 40
  %v3660 = vpop.permute.xlu0 %3659
  %3661 = vrot.lane.b32.xlu0 %v3323, 40
  %v3662 = vpop.permute.xlu0 %3661
  %3663 = vrot.lane.b32.xlu0 %v3324, 40
  %v3664 = vpop.permute.xlu0 %3663
  %3665 = vrot.lane.b32.xlu0 %v3325, 40
  %v3666 = vpop.permute.xlu0 %3665
  %3667 = vrot.lane.b32.xlu0 %v3326, 40
  %v3668 = vpop.permute.xlu0 %3667
  %3669 = vrot.lane.b32.xlu0 %v3327, 40
  %v3670 = vpop.permute.xlu0 %3669
  %3671 = vrot.lane.b32.xlu0 %v3328, 40
  %v3672 = vpop.permute.xlu0 %3671
  %3673 = vrot.lane.b32.xlu0 %v3329, 40
  %v3674 = vpop.permute.xlu0 %3673
  %3675 = vrot.lane.b32.xlu0 %v3330, 40
  %v3676 = vpop.permute.xlu0 %3675
  %3677 = vrot.lane.b32.xlu0 %v3331, 40
  %v3678 = vpop.permute.xlu0 %3677
  %3679 = vrot.lane.b32.xlu0 %v3332, 40
  %v3680 = vpop.permute.xlu0 %3679
  %3681 = vrot.lane.b32.xlu0 %v3333, 40
  %v3682 = vpop.permute.xlu0 %3681
  %3683 = vrot.lane.b32.xlu0 %v3334, 40
  %v3684 = vpop.permute.xlu0 %3683
  %3685 = vrot.lane.b32.xlu0 %v3335, 40
  %v3686 = vpop.permute.xlu0 %3685
  %3687 = vrot.lane.b32.xlu0 %v3336, 40
  %v3688 = vpop.permute.xlu0 %3687
  %3689 = vrot.lane.b32.xlu0 %v3337, 40
  %v3690 = vpop.permute.xlu0 %3689
  %3723 = vrot.lane.b32.xlu0 %v3339, 48
  %v3724 = vpop.permute.xlu0 %3723
  %3725 = vrot.lane.b32.xlu0 %v3340, 48
  %v3726 = vpop.permute.xlu0 %3725
  %3727 = vrot.lane.b32.xlu0 %v3341, 48
  %v3728 = vpop.permute.xlu0 %3727
  %3729 = vrot.lane.b32.xlu0 %v3342, 48
  %v3730 = vpop.permute.xlu0 %3729
  %3731 = vrot.lane.b32.xlu0 %v3343, 48
  %v3732 = vpop.permute.xlu0 %3731
  %3733 = vrot.lane.b32.xlu0 %v3344, 48
  %v3734 = vpop.permute.xlu0 %3733
  %3735 = vrot.lane.b32.xlu0 %v3345, 48
  %v3736 = vpop.permute.xlu0 %3735
  %3737 = vrot.lane.b32.xlu0 %v3346, 48
  %v3738 = vpop.permute.xlu0 %3737
  %3739 = vrot.lane.b32.xlu0 %v3347, 48
  %v3740 = vpop.permute.xlu0 %3739
  %3741 = vrot.lane.b32.xlu0 %v3348, 48
  %v3742 = vpop.permute.xlu0 %3741
  %3743 = vrot.lane.b32.xlu0 %v3349, 48
  %v3744 = vpop.permute.xlu0 %3743
  %3745 = vrot.lane.b32.xlu0 %v3350, 48
  %v3746 = vpop.permute.xlu0 %3745
  %3747 = vrot.lane.b32.xlu0 %v3351, 48
  %v3748 = vpop.permute.xlu0 %3747
  %3749 = vrot.lane.b32.xlu0 %v3352, 48
  %v3750 = vpop.permute.xlu0 %3749
  %3751 = vrot.lane.b32.xlu0 %v3353, 48
  %v3752 = vpop.permute.xlu0 %3751
  %3753 = vrot.lane.b32.xlu0 %v3354, 48
  %v3754 = vpop.permute.xlu0 %3753
  %3787 = vrot.lane.b32.xlu0 %v3355, 56
  %v3788 = vpop.permute.xlu0 %3787
  %3789 = vrot.lane.b32.xlu0 %v3356, 56
  %v3790 = vpop.permute.xlu0 %3789
  %3791 = vrot.lane.b32.xlu0 %v3357, 56
  %v3792 = vpop.permute.xlu0 %3791
  %3793 = vrot.lane.b32.xlu0 %v3358, 56
  %v3794 = vpop.permute.xlu0 %3793
  %3795 = vrot.lane.b32.xlu0 %v3359, 56
  %v3796 = vpop.permute.xlu0 %3795
  %3797 = vrot.lane.b32.xlu0 %v3360, 56
  %v3798 = vpop.permute.xlu0 %3797
  %3799 = vrot.lane.b32.xlu0 %v3361, 56
  %v3800 = vpop.permute.xlu0 %3799
  %3801 = vrot.lane.b32.xlu0 %v3362, 56
  %v3802 = vpop.permute.xlu0 %3801
  %3803 = vrot.lane.b32.xlu0 %v3363, 56
  %v3804 = vpop.permute.xlu0 %3803
  %3805 = vrot.lane.b32.xlu0 %v3364, 56
  %v3806 = vpop.permute.xlu0 %3805
  %3807 = vrot.lane.b32.xlu0 %v3365, 56
  %v3808 = vpop.permute.xlu0 %3807
  %3809 = vrot.lane.b32.xlu0 %v3366, 56
  %v3810 = vpop.permute.xlu0 %3809
  %3811 = vrot.lane.b32.xlu0 %v3367, 56
  %v3812 = vpop.permute.xlu0 %3811
  %3813 = vrot.lane.b32.xlu0 %v3368, 56
  %v3814 = vpop.permute.xlu0 %3813
  %3815 = vrot.lane.b32.xlu0 %v3369, 56
  %v3816 = vpop.permute.xlu0 %3815
  %3817 = vrot.lane.b32.xlu0 %v3370, 56
  %v3818 = vpop.permute.xlu0 %3817
  %3851 = vrot.lane.b32.xlu0 %v3371, 64
  %v3852 = vpop.permute.xlu0 %3851
  %3853 = vrot.lane.b32.xlu0 %v3372, 64
  %v3854 = vpop.permute.xlu0 %3853
  %3855 = vrot.lane.b32.xlu0 %v3373, 64
  %v3856 = vpop.permute.xlu0 %3855
  %3857 = vrot.lane.b32.xlu0 %v3374, 64
  %v3858 = vpop.permute.xlu0 %3857
  %3859 = vrot.lane.b32.xlu0 %v3375, 64
  %v3860 = vpop.permute.xlu0 %3859
  %3861 = vrot.lane.b32.xlu0 %v3376, 64
  %v3862 = vpop.permute.xlu0 %3861
  %3863 = vrot.lane.b32.xlu0 %v3377, 64
  %v3864 = vpop.permute.xlu0 %3863
  %3865 = vrot.lane.b32.xlu0 %v3378, 64
  %v3866 = vpop.permute.xlu0 %3865
  %3867 = vrot.lane.b32.xlu0 %v3379, 64
  %v3868 = vpop.permute.xlu0 %3867
  %3869 = vrot.lane.b32.xlu0 %v3380, 64
  %v3870 = vpop.permute.xlu0 %3869
  %3871 = vrot.lane.b32.xlu0 %v3381, 64
  %v3872 = vpop.permute.xlu0 %3871
  %3873 = vrot.lane.b32.xlu0 %v3382, 64
  %v3874 = vpop.permute.xlu0 %3873
  %3875 = vrot.lane.b32.xlu0 %v3383, 64
  %v3876 = vpop.permute.xlu0 %3875
  %3877 = vrot.lane.b32.xlu0 %v3384, 64
  %v3878 = vpop.permute.xlu0 %3877
  %3879 = vrot.lane.b32.xlu0 %v3385, 64
  %v3880 = vpop.permute.xlu0 %3879
  %3881 = vrot.lane.b32.xlu0 %v3386, 64
  %v3882 = vpop.permute.xlu0 %3881
  %v3899 = vsel %vm2839, %v3242, %v3404
  %v3900 = vsel %vm2839, %v3243, %v3406
  %v3901 = vsel %vm2839, %v3244, %v3408
  %v3902 = vsel %vm2839, %v3245, %v3410
  %v3903 = vsel %vm2839, %v3246, %v3412
  %v3904 = vsel %vm2839, %v3247, %v3414
  %v3905 = vsel %vm2839, %v3248, %v3416
  %v3906 = vsel %vm2839, %v3249, %v3418
  %v3907 = vsel %vm2839, %v3250, %v3420
  %v3908 = vsel %vm2839, %v3251, %v3422
  %v3909 = vsel %vm2839, %v3252, %v3424
  %v3910 = vsel %vm2839, %v3253, %v3426
  %v3911 = vsel %vm2839, %v3254, %v3428
  %v3912 = vsel %vm2839, %v3255, %v3430
  %v3913 = vsel %vm2839, %v3256, %v3432
  %v3914 = vsel %vm2839, %v3257, %v3434
  %v3915 = vsel %vm2873, %v3899, %v3468
  %v3916 = vsel %vm2873, %v3900, %v3470
  %v3917 = vsel %vm2873, %v3901, %v3472
  %v3918 = vsel %vm2873, %v3902, %v3474
  %v3919 = vsel %vm2873, %v3903, %v3476
  %v3920 = vsel %vm2873, %v3904, %v3478
  %v3921 = vsel %vm2873, %v3905, %v3480
  %v3922 = vsel %vm2873, %v3906, %v3482
  %v3923 = vsel %vm2873, %v3907, %v3484
  %v3924 = vsel %vm2873, %v3908, %v3486
  %v3925 = vsel %vm2873, %v3909, %v3488
  %v3926 = vsel %vm2873, %v3910, %v3490
  %v3927 = vsel %vm2873, %v3911, %v3492
  %v3928 = vsel %vm2873, %v3912, %v3494
  %v3929 = vsel %vm2873, %v3913, %v3496
  %v3930 = vsel %vm2873, %v3914, %v3498
  %v3931 = vsel %vm2907, %v3915, %v3532
  %v3932 = vsel %vm2907, %v3916, %v3534
  %v3933 = vsel %vm2907, %v3917, %v3536
  %v3934 = vsel %vm2907, %v3918, %v3538
  %v3935 = vsel %vm2907, %v3919, %v3540
  %v3936 = vsel %vm2907, %v3920, %v3542
  %v3937 = vsel %vm2907, %v3921, %v3544
  %v3938 = vsel %vm2907, %v3922, %v3546
  %v3939 = vsel %vm2907, %v3923, %v3548
  %v3940 = vsel %vm2907, %v3924, %v3550
  %v3941 = vsel %vm2907, %v3925, %v3552
  %v3942 = vsel %vm2907, %v3926, %v3554
  %v3943 = vsel %vm2907, %v3927, %v3556
  %v3944 = vsel %vm2907, %v3928, %v3558
  %v3945 = vsel %vm2907, %v3929, %v3560
  %v3946 = vsel %vm2907, %v3930, %v3562
  %v3947 = vsel %vm2941, %v3931, %v3596
  %v3948 = vsel %vm2941, %v3932, %v3598
  %v3949 = vsel %vm2941, %v3933, %v3600
  %v3950 = vsel %vm2941, %v3934, %v3602
  %v3951 = vsel %vm2941, %v3935, %v3604
  %v3952 = vsel %vm2941, %v3936, %v3606
  %v3953 = vsel %vm2941, %v3937, %v3608
  %v3954 = vsel %vm2941, %v3938, %v3610
  %v3955 = vsel %vm2941, %v3939, %v3612
  %v3956 = vsel %vm2941, %v3940, %v3614
  %v3957 = vsel %vm2941, %v3941, %v3616
  %v3958 = vsel %vm2941, %v3942, %v3618
  %v3959 = vsel %vm2941, %v3943, %v3620
  %v3960 = vsel %vm2941, %v3944, %v3622
  %v3961 = vsel %vm2941, %v3945, %v3624
  %v3962 = vsel %vm2941, %v3946, %v3626
  %vm3963 = vcmask 326656
  %v3964 = vsel %vm3963, %v3947, %v3660
  %v3965 = vsel %vm3963, %v3948, %v3662
  %v3966 = vsel %vm3963, %v3949, %v3664
  %v3967 = vsel %vm3963, %v3950, %v3666
  %v3968 = vsel %vm3963, %v3951, %v3668
  %v3969 = vsel %vm3963, %v3952, %v3670
  %v3970 = vsel %vm3963, %v3953, %v3672
  %v3971 = vsel %vm3963, %v3954, %v3674
  %v3972 = vsel %vm3963, %v3955, %v3676
  %v3973 = vsel %vm3963, %v3956, %v3678
  %v3974 = vsel %vm3963, %v3957, %v3680
  %v3975 = vsel %vm3963, %v3958, %v3682
  %v3976 = vsel %vm3963, %v3959, %v3684
  %v3977 = vsel %vm3963, %v3960, %v3686
  %v3978 = vsel %vm3963, %v3961, %v3688
  %v3979 = vsel %vm3963, %v3962, %v3690
  %vm3980 = vcmask 392192
  %v3981 = vsel %vm3980, %v3964, %v3724
  %v3982 = vsel %vm3980, %v3965, %v3726
  %v3983 = vsel %vm3980, %v3966, %v3728
  %v3984 = vsel %vm3980, %v3967, %v3730
  %v3985 = vsel %vm3980, %v3968, %v3732
  %v3986 = vsel %vm3980, %v3969, %v3734
  %v3987 = vsel %vm3980, %v3970, %v3736
  %v3988 = vsel %vm3980, %v3971, %v3738
  %v3989 = vsel %vm3980, %v3972, %v3740
  %v3990 = vsel %vm3980, %v3973, %v3742
  %v3991 = vsel %vm3980, %v3974, %v3744
  %v3992 = vsel %vm3980, %v3975, %v3746
  %v3993 = vsel %vm3980, %v3976, %v3748
  %v3994 = vsel %vm3980, %v3977, %v3750
  %v3995 = vsel %vm3980, %v3978, %v3752
  %v3996 = vsel %vm3980, %v3979, %v3754
  %vm3997 = vcmask 457728
  %v3998 = vsel %vm3997, %v3981, %v3788
  %v3999 = vsel %vm3997, %v3982, %v3790
  %v4000 = vsel %vm3997, %v3983, %v3792
  %v4001 = vsel %vm3997, %v3984, %v3794
  %v4002 = vsel %vm3997, %v3985, %v3796
  %v4003 = vsel %vm3997, %v3986, %v3798
  %v4004 = vsel %vm3997, %v3987, %v3800
  %v4005 = vsel %vm3997, %v3988, %v3802
  %v4006 = vsel %vm3997, %v3989, %v3804
  %v4007 = vsel %vm3997, %v3990, %v3806
  %v4008 = vsel %vm3997, %v3991, %v3808
  %v4009 = vsel %vm3997, %v3992, %v3810
  %v4010 = vsel %vm3997, %v3993, %v3812
  %v4011 = vsel %vm3997, %v3994, %v3814
  %v4012 = vsel %vm3997, %v3995, %v3816
  %v4013 = vsel %vm3997, %v3996, %v3818
  %vm4014 = vcmask 523264
  %v4015 = vsel %vm4014, %v3998, %v3852
  %v4016 = vsel %vm4014, %v3999, %v3854
  %v4017 = vsel %vm4014, %v4000, %v3856
  %v4018 = vsel %vm4014, %v4001, %v3858
  %v4019 = vsel %vm4014, %v4002, %v3860
  %v4020 = vsel %vm4014, %v4003, %v3862
  %v4021 = vsel %vm4014, %v4004, %v3864
  %v4022 = vsel %vm4014, %v4005, %v3866
  %v4023 = vsel %vm4014, %v4006, %v3868
  %v4024 = vsel %vm4014, %v4007, %v3870
  %v4025 = vsel %vm4014, %v4008, %v3872
  %v4026 = vsel %vm4014, %v4009, %v3874
  %v4027 = vsel %vm4014, %v4010, %v3876
  %v4028 = vsel %vm4014, %v4011, %v3878
  %v4029 = vsel %vm4014, %v4012, %v3880
  %v4030 = vsel %vm4014, %v4013, %v3882
  %v4031 = vld [vmem:[%s3] sm:$0xff]
  %v4032 = vld [vmem:[%s3 + $0x8] sm:$0xff]
  %v4033 = vld [vmem:[%s3 + $0x10] sm:$0xff]
  %v4034 = vld [vmem:[%s3 + $0x18] sm:$0xff]
  %v4035 = vld [vmem:[%s3 + $0x20] sm:$0xff]
  %v4036 = vld [vmem:[%s3 + $0x28] sm:$0xff]
  %v4037 = vld [vmem:[%s3 + $0x30] sm:$0xff]
  %v4038 = vld [vmem:[%s3 + $0x38] sm:$0xff]
  %v4039 = vld [vmem:[%s3 + $0x40] sm:$0xff]
  %v4040 = vld [vmem:[%s4] sm:$0x1]
  %v4042 = vlaneseq
  %v4043 = vshrl.u32 %v4042, 7
  %v4044 = vsub.s32 0, %v4043
  %v4045 = vrot.slane %v4040, %v4044
  %vm4047 = vcmask 588800
  %v4049 = vsel %vm4047, %v4015, 0
  %v4052 = vsel %vm4047, %v4016, 0
  %v4055 = vsel %vm4047, %v4017, 0
  %v4058 = vsel %vm4047, %v4018, 0
  %v4061 = vsel %vm4047, %v4019, 0
  %v4064 = vsel %vm4047, %v4020, 0
  %v4067 = vsel %vm4047, %v4021, 0
  %v4070 = vsel %vm4047, %v4022, 0
  %v4073 = vsel %vm4047, %v4023, 0
  %v4076 = vsel %vm4047, %v4024, 0
  %v4079 = vsel %vm4047, %v4025, 0
  %v4082 = vsel %vm4047, %v4026, 0
  %v4085 = vsel %vm4047, %v4027, 0
  %v4088 = vsel %vm4047, %v4028, 0
  %v4091 = vsel %vm4047, %v4029, 0
  %v4094 = vsel %vm4047, %v4030, 0
  %4096 = vmatprep.subr.mxu0 0.0
  %4097 = vmatpush1.msra.mxu0 0.0
  %4098 = vmatprep.subr.mxu0 0.0
  %4099 = vmatpush1.msra.mxu0 0.0
  %4100 = vmatprep.subr.mxu0 0.0
  %4101 = vmatpush1.msra.mxu0 0.0
  %4102 = vmatprep.subr.mxu0 0.0
  %4103 = vmatpush1.msra.mxu0 0.0
  %4104 = vmatprep.subr.mxu0 0.0
  %4105 = vmatpush1.msra.mxu0 0.0
  %4106 = vmatprep.subr.mxu0 0.0
  %4107 = vmatpush1.msra.mxu0 0.0
  %4108 = vmatprep.subr.mxu0 0.0
  %4109 = vmatpush1.msra.mxu0 0.0
  %4110 = vmatprep.subr.mxu0 0.0
  %4111 = vmatpush1.msra.mxu0 %v4039
  %4112 = vmatprep.subr.mxu0 0.0
  %4113 = vmatpush1.msra.mxu0 %v4038
  %4114 = vmatprep.subr.mxu0 0.0
  %4115 = vmatpush1.msra.mxu0 %v4037
  %4116 = vmatprep.subr.mxu0 0.0
  %4117 = vmatpush1.msra.mxu0 %v4036
  %4118 = vmatprep.subr.mxu0 0.0
  %4119 = vmatpush1.msra.mxu0 %v4035
  %4120 = vmatprep.subr.mxu0 0.0
  %4121 = vmatpush1.msra.mxu0 %v4034
  %4122 = vmatprep.subr.mxu0 0.0
  %4123 = vmatpush1.msra.mxu0 %v4033
  %4124 = vmatprep.subr.mxu0 0.0
  %4125 = vmatpush1.msra.mxu0 %v4032
  %4126 = vmatprep.subr.mxu0 0.0
  %4127 = vmatpush1.msra.mxu0 %v4031
  %4128 = vmatprep.subr.mxu0 0.0
  %4129 = vmatpush2.msra.mxu0 0.0
  %4130 = vmatprep.subr.mxu0 0.0
  %4131 = vmatpush2.msra.mxu0 0.0
  %4132 = vmatprep.subr.mxu0 0.0
  %4133 = vmatpush2.msra.mxu0 0.0
  %4134 = vmatprep.subr.mxu0 0.0
  %4135 = vmatpush2.msra.mxu0 0.0
  %4136 = vmatprep.subr.mxu0 0.0
  %4137 = vmatpush2.msra.mxu0 0.0
  %4138 = vmatprep.subr.mxu0 0.0
  %4139 = vmatpush2.msra.mxu0 0.0
  %4140 = vmatprep.subr.mxu0 0.0
  %4141 = vmatpush2.msra.mxu0 0.0
  %4142 = vmatprep.subr.mxu0 0.0
  %4143 = vmatpush2.msra.mxu0 0.0
  %4144 = vmatprep.subr.mxu0 0.0
  %4145 = vmatpush2.msra.mxu0 0.0
  %4146 = vmatprep.subr.mxu0 0.0
  %4147 = vmatpush2.msra.mxu0 0.0
  %4148 = vmatprep.subr.mxu0 0.0
  %4149 = vmatpush2.msra.mxu0 0.0
  %4150 = vmatprep.subr.mxu0 0.0
  %4151 = vmatpush2.msra.mxu0 0.0
  %4152 = vmatprep.subr.mxu0 0.0
  %4153 = vmatpush2.msra.mxu0 0.0
  %4154 = vmatprep.subr.mxu0 0.0
  %4155 = vmatpush2.msra.mxu0 0.0
  %4156 = vmatprep.subr.mxu0 0.0
  %4157 = vmatpush2.msra.mxu0 0.0
  %4158 = vmatprep.subr.mxu0 0.0
  %4159 = vmatpush2.msra.mxu0 0.0
  %4160 = vmatprep.mubr.f32.mxu0 0.0
  %4161 = vmatmul.mubr.f32.gmra.mxu0 %v4049
  %v4162 = vpop.f32.mrf.mxu0
  %v4163 = vadd.f32 %v4045, %v4162
  %v4164 = vpop.f32.mrf.mxu0
  %4165 = vmatprep.mubr.f32.mxu0 0.0
  %4166 = vmatmul.mubr.f32.gmra.mxu0 %v4052
  %v4167 = vpop.f32.mrf.mxu0
  %v4168 = vadd.f32 %v4045, %v4167
  %v4169 = vpop.f32.mrf.mxu0
  %4170 = vmatprep.mubr.f32.mxu0 0.0
  %4171 = vmatmul.mubr.f32.gmra.mxu0 %v4055
  %v4172 = vpop.f32.mrf.mxu0
  %v4173 = vadd.f32 %v4045, %v4172
  %v4174 = vpop.f32.mrf.mxu0
  %4175 = vmatprep.mubr.f32.mxu0 0.0
  %4176 = vmatmul.mubr.f32.gmra.mxu0 %v4058
  %v4177 = vpop.f32.mrf.mxu0
  %v4178 = vadd.f32 %v4045, %v4177
  %v4179 = vpop.f32.mrf.mxu0
  %4180 = vmatprep.mubr.f32.mxu0 0.0
  %4181 = vmatmul.mubr.f32.gmra.mxu0 %v4061
  %v4182 = vpop.f32.mrf.mxu0
  %v4183 = vadd.f32 %v4045, %v4182
  %v4184 = vpop.f32.mrf.mxu0
  %4185 = vmatprep.mubr.f32.mxu0 0.0
  %4186 = vmatmul.mubr.f32.gmra.mxu0 %v4064
  %v4187 = vpop.f32.mrf.mxu0
  %v4188 = vadd.f32 %v4045, %v4187
  %v4189 = vpop.f32.mrf.mxu0
  %4190 = vmatprep.mubr.f32.mxu0 0.0
  %4191 = vmatmul.mubr.f32.gmra.mxu0 %v4067
  %v4192 = vpop.f32.mrf.mxu0
  %v4193 = vadd.f32 %v4045, %v4192
  %v4194 = vpop.f32.mrf.mxu0
  %4195 = vmatprep.mubr.f32.mxu0 0.0
  %4196 = vmatmul.mubr.f32.gmra.mxu0 %v4070
  %v4197 = vpop.f32.mrf.mxu0
  %v4198 = vadd.f32 %v4045, %v4197
  %v4199 = vpop.f32.mrf.mxu0
  %4200 = vmatprep.mubr.f32.mxu0 0.0
  %4201 = vmatmul.mubr.f32.gmra.mxu0 %v4073
  %v4202 = vpop.f32.mrf.mxu0
  %v4203 = vadd.f32 %v4045, %v4202
  %v4204 = vpop.f32.mrf.mxu0
  %4205 = vmatprep.mubr.f32.mxu0 0.0
  %4206 = vmatmul.mubr.f32.gmra.mxu0 %v4076
  %v4207 = vpop.f32.mrf.mxu0
  %v4208 = vadd.f32 %v4045, %v4207
  %v4209 = vpop.f32.mrf.mxu0
  %4210 = vmatprep.mubr.f32.mxu0 0.0
  %4211 = vmatmul.mubr.f32.gmra.mxu0 %v4079
  %v4212 = vpop.f32.mrf.mxu0
  %v4213 = vadd.f32 %v4045, %v4212
  %v4214 = vpop.f32.mrf.mxu0
  %4215 = vmatprep.mubr.f32.mxu0 0.0
  %4216 = vmatmul.mubr.f32.gmra.mxu0 %v4082
  %v4217 = vpop.f32.mrf.mxu0
  %v4218 = vadd.f32 %v4045, %v4217
  %v4219 = vpop.f32.mrf.mxu0
  %4220 = vmatprep.mubr.f32.mxu0 0.0
  %4221 = vmatmul.mubr.f32.gmra.mxu0 %v4085
  %v4222 = vpop.f32.mrf.mxu0
  %v4223 = vadd.f32 %v4045, %v4222
  %v4224 = vpop.f32.mrf.mxu0
  %4225 = vmatprep.mubr.f32.mxu0 0.0
  %4226 = vmatmul.mubr.f32.gmra.mxu0 %v4088
  %v4227 = vpop.f32.mrf.mxu0
  %v4228 = vadd.f32 %v4045, %v4227
  %v4229 = vpop.f32.mrf.mxu0
  %4230 = vmatprep.mubr.f32.mxu0 0.0
  %4231 = vmatmul.mubr.f32.gmra.mxu0 %v4091
  %v4232 = vpop.f32.mrf.mxu0
  %v4233 = vadd.f32 %v4045, %v4232
  %v4234 = vpop.f32.mrf.mxu0
  %4235 = vmatprep.mubr.f32.mxu0 0.0
  %4236 = vmatmul.mubr.f32.gmra.mxu0 %v4094
  %v4237 = vpop.f32.mrf.mxu0
  %v4238 = vadd.f32 %v4045, %v4237
  %v4239 = vpop.f32.mrf.mxu0
  %4240 = vdwg.mxu0
  %v4241 = vmax.f32 %v4163, 0.0
  %v4242 = vmax.f32 %v4168, 0.0
  %v4243 = vmax.f32 %v4173, 0.0
  %v4244 = vmax.f32 %v4178, 0.0
  %v4245 = vmax.f32 %v4183, 0.0
  %v4246 = vmax.f32 %v4188, 0.0
  %v4247 = vmax.f32 %v4193, 0.0
  %v4248 = vmax.f32 %v4198, 0.0
  %v4249 = vmax.f32 %v4203, 0.0
  %v4250 = vmax.f32 %v4208, 0.0
  %v4251 = vmax.f32 %v4213, 0.0
  %v4252 = vmax.f32 %v4218, 0.0
  %v4253 = vmax.f32 %v4223, 0.0
  %v4254 = vmax.f32 %v4228, 0.0
  %v4255 = vmax.f32 %v4233, 0.0
  %v4256 = vmax.f32 %v4238, 0.0
  %4257 = vst.msk [vmem:[%s5] sm:$0xff] %vm2839, %v4241
  %4258 = vst.msk [vmem:[%s5 + $0x8] sm:$0xff] %vm2839, %v4242
  %4259 = vst.msk [vmem:[%s5 + $0x10] sm:$0xff] %vm2839, %v4243
  %4260 = vst.msk [vmem:[%s5 + $0x18] sm:$0xff] %vm2839, %v4244
  %4261 = vst.msk [vmem:[%s5 + $0x20] sm:$0xff] %vm2839, %v4245
  %4262 = vst.msk [vmem:[%s5 + $0x28] sm:$0xff] %vm2839, %v4246
  %4263 = vst.msk [vmem:[%s5 + $0x30] sm:$0xff] %vm2839, %v4247
  %4264 = vst.msk [vmem:[%s5 + $0x38] sm:$0xff] %vm2839, %v4248
  %4265 = vst.msk [vmem:[%s5 + $0x40] sm:$0xff] %vm2839, %v4249
  %4266 = vst.msk [vmem:[%s5 + $0x48] sm:$0xff] %vm2839, %v4250
  %4267 = vst.msk [vmem:[%s5 + $0x50] sm:$0xff] %vm2839, %v4251
  %4268 = vst.msk [vmem:[%s5 + $0x58] sm:$0xff] %vm2839, %v4252
  %4269 = vst.msk [vmem:[%s5 + $0x60] sm:$0xff] %vm2839, %v4253
  %4270 = vst.msk [vmem:[%s5 + $0x68] sm:$0xff] %vm2839, %v4254
  %4271 = vst.msk [vmem:[%s5 + $0x70] sm:$0xff] %vm2839, %v4255
  %4272 = vst.msk [vmem:[%s5 + $0x78] sm:$0xff] %vm2839, %v4256
  // Predicated region
  $region22: #{down_conv_forward.1} parent=0 // pred_check
    _
  $region23: #{down_conv_forward.1} parent=0 // pred_check_branch
    %4274 = sbr.rel (0) target = $region25
  $region24: #{down_conv_forward.1} parent=0 // pred_region
    _
  $region25: #{down_conv_forward.1} parent=0 // pred_fallthru
    _
  // Predicated region
  $region26: #{down_conv_forward.1} parent=0 // pred_check
    _
  $region27: #{down_conv_forward.1} parent=0 // pred_check_branch
    %4276 = sbr.rel (0) target = $region29
  $region28: #{down_conv_forward.1} parent=0 // pred_region
    _
  $region29: #{down_conv_forward.1} parent=0 // pred_fallthru
    _

</llo_original>
